<compile_context>
chip_gen: v7x
topology: tpu7x:2x2x1
jax: 0.10.0
libtpu: 0.0.40
codegen_flags: <defaults>
</compile_context>

<pallas_src>
import numpy as np

import jax
import jax.numpy as jnp
from jax.experimental import pallas as pl
from jax.experimental.pallas import tpu as pltpu

LANES = 128
K1_PAD = 128   # conv1 contraction dim 25  -> 128
K2_PAD = 256   # conv2 contraction dim 150 -> 256

_VMEM = pl.BlockSpec(memory_space=pltpu.MemorySpace.VMEM)


# ----------------------------------------------------------------------------
# Pallas kernels
# ----------------------------------------------------------------------------

def conv_relu_pool_kernel(x_ref, w_ref, b_ref, p_ref, o_ref):
    """o = P @ relu(x @ w + b), stored bf16.  Fused conv+bias+ReLU+avgpool.

    x: (M, K)   bf16 im2col patches (K zero-padded to a lane multiple)
    w: (K, 128) bf16 conv weight, out channels zero-padded to 128 lanes
    b: (1, 128) f32 bias (zero-padded)
    P: (Mo, M)  bf16 constant 2x2 average-pool matrix (block-diag over batch)
    o: (Mo, 128) bf16 pooled activations (channels in lanes, lane-dense store)
    """
    y = jnp.dot(x_ref[...], w_ref[...], preferred_element_type=jnp.float32)
    y = jnp.maximum(y + b_ref[...], 0.0).astype(jnp.bfloat16)
    o_ref[...] = jnp.dot(p_ref[...], y,
                         preferred_element_type=jnp.float32).astype(jnp.bfloat16)


def fc_stack_kernel(x_ref, w1_ref, b1_ref, w2_ref, b2_ref, w3_ref, b3_ref,
                    o_ref):
    """Fused fc1(ReLU) -> fc2(ReLU) -> fc3; every operand 128-lane padded and
    VMEM resident, single grid step, f32 accumulation."""
    h = jnp.dot(x_ref[...], w1_ref[...], preferred_element_type=jnp.float32)
    h = jnp.maximum(h + b1_ref[...], 0.0).astype(jnp.bfloat16)
    h = jnp.dot(h, w2_ref[...], preferred_element_type=jnp.float32)
    h = jnp.maximum(h + b2_ref[...], 0.0).astype(jnp.bfloat16)
    y = jnp.dot(h, w3_ref[...], preferred_element_type=jnp.float32)
    o_ref[...] = y + b3_ref[...]


# ----------------------------------------------------------------------------
# Pallas wrappers (single step, everything VMEM resident)
# ----------------------------------------------------------------------------

def conv_relu_pool(patches, w, b, pool_mat):
    m_out = pool_mat.shape[0]
    return pl.pallas_call(
        conv_relu_pool_kernel,
        out_shape=jax.ShapeDtypeStruct((m_out, LANES), jnp.bfloat16),
        in_specs=[_VMEM] * 4,
        out_specs=_VMEM,
    )(patches, w, b, pool_mat)


def fc_stack(flat, kp):
    B = flat.shape[0]
    return pl.pallas_call(
        fc_stack_kernel,
        out_shape=jax.ShapeDtypeStruct((B, LANES), jnp.float32),
        in_specs=[_VMEM] * 7,
        out_specs=_VMEM,
    )(flat, kp["fw1"], kp["fb1"], kp["fw2"], kp["fb2"], kp["fw3"], kp["fb3"])


# ----------------------------------------------------------------------------
# XLA-side glue: patch extraction (single HLO) and constant pool matrices
# ----------------------------------------------------------------------------

def _patches(x_nhwc, k, padding):
    """im2col via one conv_general_dilated_patches HLO.

    Returns (B*Ho*Wo, C*k*k) with feature order channel-major then (kH, kW),
    matching the weight layout produced in prepare_params.
    """
    B = x_nhwc.shape[0]
    C = x_nhwc.shape[3]
    p = jax.lax.conv_general_dilated_patches(
        x_nhwc, (k, k), (1, 1), padding,
        dimension_numbers=("NHWC", "HWIO", "NHWC"))
    Ho, Wo = p.shape[1], p.shape[2]
    return p.reshape(B * Ho * Wo, C * k * k), Ho, Wo


def _pool_matrix(batch, h, w):
    """Constant (B*Ho*Wo, B*H*W) 2x2 average-pool matrix, block-diag over the
    batch, row order (b, i, j) / column order (b, h, w).  Built with numpy at
    trace time (shapes are static) -> embedded as a bf16 constant."""
    ho, wo = h // 2, w // 2
    P = np.zeros((batch * ho * wo, batch * h * w), np.float32)
    for b in range(batch):
        for i in range(ho):
            for j in range(wo):
                n = b * ho * wo + i * wo + j
                for di in (0, 1):
                    for dj in (0, 1):
                        m = b * h * w + (2 * i + di) * w + (2 * j + dj)
                        P[n, m] = 0.25
    return jnp.asarray(P, dtype=jnp.bfloat16)


# ----------------------------------------------------------------------------
# One-time parameter preparation (no per-call transposes/casts in the forward)
# ----------------------------------------------------------------------------

def prepare_params(p):
    """Convert PyTorch-layout params into kernel-ready form once:
    matmul layout, zero-padded K / 128-lane outputs, bf16 weights, f32 (1,128)
    bias rows."""
    def pad_to(a, rows, cols):
        return jnp.pad(a, ((0, rows - a.shape[0]), (0, cols - a.shape[1])))

    def bias_row(b):
        return jnp.pad(b, (0, LANES - b.shape[0])).reshape(1, LANES).astype(
            jnp.float32)

    # Conv weights: OIHW -> (Cin*kH*kW, O), matching conv_general_dilated_patches
    # feature order (channel-major, then kH, kW); then pad K and output lanes.
    cw1 = jnp.transpose(p["cw1"], (1, 2, 3, 0)).reshape(1 * 5 * 5, 6)
    cw2 = jnp.transpose(p["cw2"], (1, 2, 3, 0)).reshape(6 * 5 * 5, 16)

    # fc1: permute its input dim from torch's NCHW-flatten order (c, i, j) to
    # the kernel's (i, j, c) order (so the activation needs no transpose),
    # transpose to (in, out) and pad outputs to 128 lanes.
    fw1 = jnp.transpose(p["fw1"].reshape(120, 16, 5, 5), (0, 2, 3, 1))
    fw1 = fw1.reshape(120, 400).T                      # (400, 120)
    fw2 = p["fw2"].T                                   # (120, 84)
    fw3 = p["fw3"].T                                   # (84, 10)

    return {
        "cw1": pad_to(cw1, K1_PAD, LANES).astype(jnp.bfloat16),
        "cb1": bias_row(p["cb1"]),
        "cw2": pad_to(cw2, K2_PAD, LANES).astype(jnp.bfloat16),
        "cb2": bias_row(p["cb2"]),
        "fw1": pad_to(fw1, 400, LANES).astype(jnp.bfloat16),
        "fb1": bias_row(p["fb1"]),
        "fw2": pad_to(fw2, LANES, LANES).astype(jnp.bfloat16),
        "fb2": bias_row(p["fb2"]),
        "fw3": pad_to(fw3, LANES, LANES).astype(jnp.bfloat16),
        "fb3": bias_row(p["fb3"]),
    }


# ----------------------------------------------------------------------------
# Forward pass
# ----------------------------------------------------------------------------

def lenet_forward(x_nchw, kp):
    """LeNet-5 forward.  Returns (logits, logits) like the PyTorch module."""
    B = x_nchw.shape[0]
    x = jnp.transpose(x_nchw, (0, 2, 3, 1)).astype(jnp.float32)   # NHWC

    # conv1 (5x5, pad=2) + ReLU + 2x2 avg-pool, fused in one Pallas kernel.
    p1, H1, W1 = _patches(x, 5, ((2, 2), (2, 2)))                 # (B*784, 25)
    p1 = jnp.pad(p1, ((0, 0), (0, K1_PAD - p1.shape[1]))).astype(jnp.bfloat16)
    h1 = conv_relu_pool(p1, kp["cw1"], kp["cb1"],
                        _pool_matrix(B, H1, W1))                  # (B*196,128) bf16

    # conv2 (5x5, valid) + ReLU + 2x2 avg-pool, fused.
    img1 = h1[:, :6].reshape(B, H1 // 2, W1 // 2, 6)              # (B,14,14,6)
    p2, H2, W2 = _patches(img1, 5, "VALID")                       # (B*100, 150)
    p2 = jnp.pad(p2, ((0, 0), (0, K2_PAD - p2.shape[1])))         # bf16 already
    h2 = conv_relu_pool(p2, kp["cw2"], kp["cb2"],
                        _pool_matrix(B, H2, W2))                  # (B*25, 128) bf16

    # Flatten: rows of h2 are (b, i, j) with channels in lanes, so taking the
    # first 16 lanes row-by-row yields (i, j, c) order; fc1's weight input dim
    # was permuted to match in prepare_params (no activation transpose).
    flat = h2[:, :16].reshape(B, 16 * 5 * 5)                      # (B, 400) bf16

    out = fc_stack(flat, kp)[:, :10]                              # (B, 10) f32
    return out, out


# ----------------------------------------------------------------------------
# Deterministic parameter init (synthetic, mirrors module shapes)
# ----------------------------------------------------------------------------

def init_params(key):
    def tnormal(k, shape, scale=0.1):
        return scale * jax.random.truncated_normal(k, -2.0, 2.0, shape,
                                                   jnp.float32)

    ks = jax.random.split(key, 10)
    return {
        "cw1": tnormal(ks[0], (6, 1, 5, 5)),
        "cb1": 0.01 * jax.random.normal(ks[1], (6,), jnp.float32),
        "cw2": tnormal(ks[2], (16, 6, 5, 5)),
        "cb2": 0.01 * jax.random.normal(ks[3], (16,), jnp.float32),
        "fw1": tnormal(ks[4], (120, 400)),
        "fb1": 0.01 * jax.random.normal(ks[5], (120,), jnp.float32),
        "fw2": tnormal(ks[6], (84, 120)),
        "fb2": 0.01 * jax.random.normal(ks[7], (84,), jnp.float32),
        "fw3": tnormal(ks[8], (10, 84)),
        "fb3": 0.01 * jax.random.normal(ks[9], (10,), jnp.float32),
    }


# ----------------------------------------------------------------------------
# Pure-JAX f32 reference (semantics check against the Pallas path)
# ----------------------------------------------------------------------------

def ref_forward(x, p):
    def conv(x, w, b, pad):
        y = jax.lax.conv_general_dilated(
            x, w, (1, 1), [(pad, pad), (pad, pad)],
            dimension_numbers=("NCHW", "OIHW", "NCHW"))
        return y + b[None, :, None, None]

    def pool(x):
        B, C, H, W = x.shape
        return x.reshape(B, C, H // 2, 2, W // 2, 2).mean(axis=(3, 5))

    h = pool(jnp.maximum(conv(x, p["cw1"], p["cb1"], 2), 0.0))
    h = pool(jnp.maximum(conv(h, p["cw2"], p["cb2"], 0), 0.0))
    h = h.reshape(x.shape[0], -1)
    h = jnp.maximum(h @ p["fw1"].T + p["fb1"], 0.0)
    h = jnp.maximum(h @ p["fw2"].T + p["fb2"], 0.0)
    return h @ p["fw3"].T + p["fb3"]


if __name__ == "__main__":
    key = jax.random.PRNGKey(0)
    kx, kparam = jax.random.split(key)
    x = jax.random.normal(kx, (2, 1, 28, 28), jnp.float32)   # NCHW like PyTorch
    params = init_params(kparam)
    kernel_params = prepare_params(params)                   # one-time prep

    fwd = jax.jit(lenet_forward)
    out, out_dup = fwd(x, kernel_params)
    out = jax.block_until_ready(out)

    ref = ref_forward(x, params)
    assert out.shape == (2, 10) and out_dup.shape == (2, 10)
    max_err = float(jnp.max(jnp.abs(out - ref)))
    # bf16 matmul operands + bf16 pooled activations (f32 accumulation) ->
    # slightly looser tolerance than a pure-f32 path.
    assert jnp.allclose(out, ref, rtol=2e-2, atol=2e-2), max_err
    print("KERNEL_OK")
</pallas_src>

<mosaic_0001>
module attributes {stable_mosaic.version = 11 : i64} {
  func.func @conv_relu_pool_kernel(%arg0: memref<1568x128xbf16, #tpu.memory_space<vmem>>, %arg1: memref<128x128xbf16, #tpu.memory_space<vmem>>, %arg2: memref<1x128xf32, #tpu.memory_space<vmem>>, %arg3: memref<392x1568xbf16, #tpu.memory_space<vmem>>, %arg4: memref<392x128xbf16, #tpu.memory_space<vmem>>) attributes {dimension_semantics = [], scalar_prefetch = 0 : i64, scratch_operands = 0 : i64, tpu.core_type = #tpu.core_type<tc>} {
    %c0 = arith.constant 0 : index
    %c0_0 = arith.constant 0 : index
    %0 = vector.load %arg0[%c0, %c0_0] : memref<1568x128xbf16, #tpu.memory_space<vmem>>, vector<1568x128xbf16>
    %c0_1 = arith.constant 0 : index
    %c0_2 = arith.constant 0 : index
    %1 = vector.load %arg1[%c0_1, %c0_2] : memref<128x128xbf16, #tpu.memory_space<vmem>>, vector<128x128xbf16>
    %cst = arith.constant dense<0.000000e+00> : vector<1568x128xf32>
    %2 = tpu.matmul %0, %1, %cst {dimension_numbers = #tpu.dot_dimension_numbers<[1], [0], [0], [1], [0, 0, 1, 1], [], []>} : vector<1568x128xbf16>, vector<128x128xbf16>, vector<1568x128xf32> -> vector<1568x128xf32>
    %c0_3 = arith.constant 0 : index
    %c0_4 = arith.constant 0 : index
    %3 = vector.load %arg2[%c0_3, %c0_4] : memref<1x128xf32, #tpu.memory_space<vmem>>, vector<1x128xf32>
    %4 = vector.broadcast %3 : vector<1x128xf32> to vector<1568x128xf32>
    %5 = arith.addf %2, %4 : vector<1568x128xf32>
    %cst_5 = arith.constant 0.000000e+00 : f32
    %6 = vector.broadcast %cst_5 : f32 to vector<1568x128xf32>
    %7 = arith.maximumf %5, %6 : vector<1568x128xf32>
    %8 = arith.truncf %7 : vector<1568x128xf32> to vector<1568x128xbf16>
    %c0_6 = arith.constant 0 : index
    %c0_7 = arith.constant 0 : index
    %9 = vector.load %arg3[%c0_6, %c0_7] : memref<392x1568xbf16, #tpu.memory_space<vmem>>, vector<392x1568xbf16>
    %cst_8 = arith.constant dense<0.000000e+00> : vector<392x128xf32>
    %10 = tpu.matmul %9, %8, %cst_8 {dimension_numbers = #tpu.dot_dimension_numbers<[1], [0], [0], [1], [0, 0, 1, 1], [], []>} : vector<392x1568xbf16>, vector<1568x128xbf16>, vector<392x128xf32> -> vector<392x128xf32>
    %11 = arith.truncf %10 : vector<392x128xf32> to vector<392x128xbf16>
    %c0_9 = arith.constant 0 : index
    %c0_10 = arith.constant 0 : index
    %12 = vector.load %arg4[%c0_9, %c0_10] : memref<392x128xbf16, #tpu.memory_space<vmem>>, vector<392x128xbf16>
    tpu.vector_store %arg4[%c0_9, %c0_10], %11 {strides = array<i32>} : memref<392x128xbf16, #tpu.memory_space<vmem>>, vector<392x128xbf16>,
    return
  }
}

module attributes {stable_mosaic.version = 11 : i64} {
  func.func @conv_relu_pool_kernel(%arg0: memref<200x256xbf16, #tpu.memory_space<vmem>>, %arg1: memref<256x128xbf16, #tpu.memory_space<vmem>>, %arg2: memref<1x128xf32, #tpu.memory_space<vmem>>, %arg3: memref<50x200xbf16, #tpu.memory_space<vmem>>, %arg4: memref<50x128xbf16, #tpu.memory_space<vmem>>) attributes {dimension_semantics = [], scalar_prefetch = 0 : i64, scratch_operands = 0 : i64, tpu.core_type = #tpu.core_type<tc>} {
    %c0 = arith.constant 0 : index
    %c0_0 = arith.constant 0 : index
    %0 = vector.load %arg0[%c0, %c0_0] : memref<200x256xbf16, #tpu.memory_space<vmem>>, vector<200x256xbf16>
    %c0_1 = arith.constant 0 : index
    %c0_2 = arith.constant 0 : index
    %1 = vector.load %arg1[%c0_1, %c0_2] : memref<256x128xbf16, #tpu.memory_space<vmem>>, vector<256x128xbf16>
    %cst = arith.constant dense<0.000000e+00> : vector<200x128xf32>
    %2 = tpu.matmul %0, %1, %cst {dimension_numbers = #tpu.dot_dimension_numbers<[1], [0], [0], [1], [0, 0, 1, 1], [], []>} : vector<200x256xbf16>, vector<256x128xbf16>, vector<200x128xf32> -> vector<200x128xf32>
    %c0_3 = arith.constant 0 : index
    %c0_4 = arith.constant 0 : index
    %3 = vector.load %arg2[%c0_3, %c0_4] : memref<1x128xf32, #tpu.memory_space<vmem>>, vector<1x128xf32>
    %4 = vector.broadcast %3 : vector<1x128xf32> to vector<200x128xf32>
    %5 = arith.addf %2, %4 : vector<200x128xf32>
    %cst_5 = arith.constant 0.000000e+00 : f32
    %6 = vector.broadcast %cst_5 : f32 to vector<200x128xf32>
    %7 = arith.maximumf %5, %6 : vector<200x128xf32>
    %8 = arith.truncf %7 : vector<200x128xf32> to vector<200x128xbf16>
    %c0_6 = arith.constant 0 : index
    %c0_7 = arith.constant 0 : index
    %9 = vector.load %arg3[%c0_6, %c0_7] : memref<50x200xbf16, #tpu.memory_space<vmem>>, vector<50x200xbf16>
    %cst_8 = arith.constant dense<0.000000e+00> : vector<50x128xf32>
    %10 = tpu.matmul %9, %8, %cst_8 {dimension_numbers = #tpu.dot_dimension_numbers<[1], [0], [0], [1], [0, 0, 1, 1], [], []>} : vector<50x200xbf16>, vector<200x128xbf16>, vector<50x128xf32> -> vector<50x128xf32>
    %11 = arith.truncf %10 : vector<50x128xf32> to vector<50x128xbf16>
    %c0_9 = arith.constant 0 : index
    %c0_10 = arith.constant 0 : index
    %12 = vector.load %arg4[%c0_9, %c0_10] : memref<50x128xbf16, #tpu.memory_space<vmem>>, vector<50x128xbf16>
    tpu.vector_store %arg4[%c0_9, %c0_10], %11 {strides = array<i32>} : memref<50x128xbf16, #tpu.memory_space<vmem>>, vector<50x128xbf16>,
    return
  }
}

module attributes {stable_mosaic.version = 11 : i64} {
  func.func @fc_stack_kernel(%arg0: memref<2x400xbf16, #tpu.memory_space<vmem>>, %arg1: memref<400x128xbf16, #tpu.memory_space<vmem>>, %arg2: memref<1x128xf32, #tpu.memory_space<vmem>>, %arg3: memref<128x128xbf16, #tpu.memory_space<vmem>>, %arg4: memref<1x128xf32, #tpu.memory_space<vmem>>, %arg5: memref<128x128xbf16, #tpu.memory_space<vmem>>, %arg6: memref<1x128xf32, #tpu.memory_space<vmem>>, %arg7: memref<2x128xf32, #tpu.memory_space<vmem>>) attributes {dimension_semantics = [], scalar_prefetch = 0 : i64, scratch_operands = 0 : i64, tpu.core_type = #tpu.core_type<tc>} {
    %c0 = arith.constant 0 : index
    %c0_0 = arith.constant 0 : index
    %0 = vector.load %arg0[%c0, %c0_0] : memref<2x400xbf16, #tpu.memory_space<vmem>>, vector<2x400xbf16>
    %c0_1 = arith.constant 0 : index
    %c0_2 = arith.constant 0 : index
    %1 = vector.load %arg1[%c0_1, %c0_2] : memref<400x128xbf16, #tpu.memory_space<vmem>>, vector<400x128xbf16>
    %cst = arith.constant dense<0.000000e+00> : vector<2x128xf32>
    %2 = tpu.matmul %0, %1, %cst {dimension_numbers = #tpu.dot_dimension_numbers<[1], [0], [0], [1], [0, 0, 1, 1], [], []>} : vector<2x400xbf16>, vector<400x128xbf16>, vector<2x128xf32> -> vector<2x128xf32>
    %c0_3 = arith.constant 0 : index
    %c0_4 = arith.constant 0 : index
    %3 = vector.load %arg2[%c0_3, %c0_4] : memref<1x128xf32, #tpu.memory_space<vmem>>, vector<1x128xf32>
    %4 = vector.broadcast %3 : vector<1x128xf32> to vector<2x128xf32>
    %5 = arith.addf %2, %4 : vector<2x128xf32>
    %cst_5 = arith.constant 0.000000e+00 : f32
    %6 = vector.broadcast %cst_5 : f32 to vector<2x128xf32>
    %7 = arith.maximumf %5, %6 : vector<2x128xf32>
    %8 = arith.truncf %7 : vector<2x128xf32> to vector<2x128xbf16>
    %c0_6 = arith.constant 0 : index
    %c0_7 = arith.constant 0 : index
    %9 = vector.load %arg3[%c0_6, %c0_7] : memref<128x128xbf16, #tpu.memory_space<vmem>>, vector<128x128xbf16>
    %cst_8 = arith.constant dense<0.000000e+00> : vector<2x128xf32>
    %10 = tpu.matmul %8, %9, %cst_8 {dimension_numbers = #tpu.dot_dimension_numbers<[1], [0], [0], [1], [0, 0, 1, 1], [], []>} : vector<2x128xbf16>, vector<128x128xbf16>, vector<2x128xf32> -> vector<2x128xf32>
    %c0_9 = arith.constant 0 : index
    %c0_10 = arith.constant 0 : index
    %11 = vector.load %arg4[%c0_9, %c0_10] : memref<1x128xf32, #tpu.memory_space<vmem>>, vector<1x128xf32>
    %12 = vector.broadcast %11 : vector<1x128xf32> to vector<2x128xf32>
    %13 = arith.addf %10, %12 : vector<2x128xf32>
    %cst_11 = arith.constant 0.000000e+00 : f32
    %14 = vector.broadcast %cst_11 : f32 to vector<2x128xf32>
    %15 = arith.maximumf %13, %14 : vector<2x128xf32>
    %16 = arith.truncf %15 : vector<2x128xf32> to vector<2x128xbf16>
    %c0_12 = arith.constant 0 : index
    %c0_13 = arith.constant 0 : index
    %17 = vector.load %arg5[%c0_12, %c0_13] : memref<128x128xbf16, #tpu.memory_space<vmem>>, vector<128x128xbf16>
    %cst_14 = arith.constant dense<0.000000e+00> : vector<2x128xf32>
    %18 = tpu.matmul %16, %17, %cst_14 {dimension_numbers = #tpu.dot_dimension_numbers<[1], [0], [0], [1], [0, 0, 1, 1], [], []>} : vector<2x128xbf16>, vector<128x128xbf16>, vector<2x128xf32> -> vector<2x128xf32>
    %c0_15 = arith.constant 0 : index
    %c0_16 = arith.constant 0 : index
    %19 = vector.load %arg6[%c0_15, %c0_16] : memref<1x128xf32, #tpu.memory_space<vmem>>, vector<1x128xf32>
    %20 = vector.broadcast %19 : vector<1x128xf32> to vector<2x128xf32>
    %21 = arith.addf %18, %20 : vector<2x128xf32>
    %c0_17 = arith.constant 0 : index
    %c0_18 = arith.constant 0 : index
    %22 = vector.load %arg7[%c0_17, %c0_18] : memref<2x128xf32, #tpu.memory_space<vmem>>, vector<2x128xf32>
    tpu.vector_store %arg7[%c0_17, %c0_18], %21 {strides = array<i32>} : memref<2x128xf32, #tpu.memory_space<vmem>>, vector<2x128xf32>,
    return
  }
}

</mosaic_0001>

<llo_original>
// kernel: lenet_forward.4
$region0: #{lenet_forward.4}
  #allocation0 [shape = 'u32[]', space=smem, size = 0x4, offset = 0x4, fixed_abs, tag = 'smem constant byte address 0x4 - core index']
  #allocation1 [shape = 'u32[144,128]{1,0:T(1,128)}', space=vmem, size = 0x12000, scoped, tag = 'internal scratch']
  %s0 = inlined_call_operand.vmem [shape: bf16[200,256], index: 0, kind: input, shape index: {}]
  %s1 = inlined_call_operand.vmem [shape: bf16[256,128], index: 1, kind: input, shape index: {}]
  %s2 = inlined_call_operand.vmem [shape: f32[1,128], index: 2, kind: input, shape index: {}]
  %s3 = inlined_call_operand.vmem [shape: bf16[50,200], index: 3, kind: input, shape index: {}]
  %s4 = inlined_call_operand.vmem [shape: bf16[50,128], index: 4, kind: output, shape index: {}]
  %s5 = sld [smem:[#allocation0]]
  $region26: #{lenet_forward.4} parent=0
    _
  %s7 = ssub.s32 1, %s5
  %s8 = scalar_select 0, %s7, %s5
  // Predicated region
  $region2: #{lenet_forward.4} parent=0 // pred_check
    _
  $region3: #{lenet_forward.4} parent=0 // pred_check_branch
    %10 = sbr.rel (0) target = $region5
  $region4: #{lenet_forward.4} parent=0 // pred_region
    _
  $region5: #{lenet_forward.4} parent=0 // pred_fallthru
    _
  // Predicated region
  $region6: #{lenet_forward.4} parent=0 // pred_check
    _
  $region7: #{lenet_forward.4} parent=0 // pred_check_branch
    %12 = sbr.rel (0) target = $region9
  $region8: #{lenet_forward.4} parent=0 // pred_region
    _
  $region9: #{lenet_forward.4} parent=0 // pred_fallthru
    _
  // Predicated region
  $region10: #{lenet_forward.4} parent=0 // pred_check
    _
  $region11: #{lenet_forward.4} parent=0 // pred_check_branch
    %14 = sbr.rel (0) target = $region13
  $region12: #{lenet_forward.4} parent=0 // pred_region
    _
  $region13: #{lenet_forward.4} parent=0 // pred_fallthru
    _
  // Predicated region
  $region14: #{lenet_forward.4} parent=0 // pred_check
    _
  $region15: #{lenet_forward.4} parent=0 // pred_check_branch
    %16 = sbr.rel (0) target = $region17
  $region16: #{lenet_forward.4} parent=0 // pred_region
    _
  $region17: #{lenet_forward.4} parent=0 // pred_fallthru
    _
  %v18 = vld [vmem:[%s0] sm:$0xff]
  %v19 = vld [vmem:[%s0 + $0x8] sm:$0xff]
  %v20 = vld [vmem:[%s0 + $0x10] sm:$0xff]
  %v21 = vld [vmem:[%s0 + $0x18] sm:$0xff]
  %v22 = vld [vmem:[%s0 + $0x20] sm:$0xff]
  %v23 = vld [vmem:[%s0 + $0x28] sm:$0xff]
  %v24 = vld [vmem:[%s0 + $0x30] sm:$0xff]
  %v25 = vld [vmem:[%s0 + $0x38] sm:$0xff]
  %v26 = vld [vmem:[%s0 + $0x40] sm:$0xff]
  %v27 = vld [vmem:[%s0 + $0x48] sm:$0xff]
  %v28 = vld [vmem:[%s0 + $0x50] sm:$0xff]
  %v29 = vld [vmem:[%s0 + $0x58] sm:$0xff]
  %v30 = vld [vmem:[%s0 + $0x60] sm:$0xff]
  %v31 = vld [vmem:[%s0 + $0x68] sm:$0xff]
  %v32 = vld [vmem:[%s0 + $0x70] sm:$0xff]
  %v33 = vld [vmem:[%s0 + $0x78] sm:$0xff]
  %v34 = vld [vmem:[%s0 + $0x80] sm:$0xff]
  %v35 = vld [vmem:[%s0 + $0x88] sm:$0xff]
  %v36 = vld [vmem:[%s0 + $0x90] sm:$0xff]
  %v37 = vld [vmem:[%s0 + $0x98] sm:$0xff]
  %v38 = vld [vmem:[%s0 + $0xa0] sm:$0xff]
  %v39 = vld [vmem:[%s0 + $0xa8] sm:$0xff]
  %v40 = vld [vmem:[%s0 + $0xb0] sm:$0xff]
  %v41 = vld [vmem:[%s0 + $0xb8] sm:$0xff]
  %v42 = vld [vmem:[%s0 + $0xc0] sm:$0xff]
  %v43 = vld [vmem:[%s1] sm:$0xf]
  %v44 = vld [vmem:[%s1 + $0x4] sm:$0xf]
  %v45 = vld [vmem:[%s1 + $0x8] sm:$0xf]
  %v46 = vld [vmem:[%s1 + $0xc] sm:$0xf]
  %v47 = vld [vmem:[%s1 + $0x10] sm:$0xf]
  %v48 = vld [vmem:[%s1 + $0x14] sm:$0xf]
  %v49 = vld [vmem:[%s1 + $0x18] sm:$0xf]
  %v50 = vld [vmem:[%s1 + $0x1c] sm:$0xf]
  %v51 = vld [vmem:[%s1 + $0x20] sm:$0xf]
  %v52 = vld [vmem:[%s1 + $0x24] sm:$0xf]
  %v53 = vld [vmem:[%s1 + $0x28] sm:$0xf]
  %v54 = vld [vmem:[%s1 + $0x2c] sm:$0xf]
  %v55 = vld [vmem:[%s1 + $0x30] sm:$0xf]
  %v56 = vld [vmem:[%s1 + $0x34] sm:$0xf]
  %v57 = vld [vmem:[%s1 + $0x38] sm:$0xf]
  %v58 = vld [vmem:[%s1 + $0x3c] sm:$0xf]
  %v59 = vld [vmem:[%s1 + $0x40] sm:$0xf]
  %v60 = vld [vmem:[%s1 + $0x44] sm:$0xf]
  %v61 = vld [vmem:[%s1 + $0x48] sm:$0xf]
  %v62 = vld [vmem:[%s1 + $0x4c] sm:$0xf]
  %v63 = vld [vmem:[%s1 + $0x50] sm:$0xf]
  %v64 = vld [vmem:[%s1 + $0x54] sm:$0xf]
  %v65 = vld [vmem:[%s1 + $0x58] sm:$0xf]
  %v66 = vld [vmem:[%s1 + $0x5c] sm:$0xf]
  %v67 = vld [vmem:[%s1 + $0x60] sm:$0xf]
  %v68 = vld [vmem:[%s1 + $0x64] sm:$0xf]
  %v69 = vld [vmem:[%s1 + $0x68] sm:$0xf]
  %v70 = vld [vmem:[%s1 + $0x6c] sm:$0xf]
  %v71 = vld [vmem:[%s1 + $0x70] sm:$0xf]
  %v72 = vld [vmem:[%s1 + $0x74] sm:$0xf]
  %v73 = vld [vmem:[%s1 + $0x78] sm:$0xf]
  %v74 = vld [vmem:[%s1 + $0x7c] sm:$0xf]
  %v75 = vld [vmem:[%s2] sm:$0x1]
  %v77 = vlaneseq
  %v78 = vshrl.u32 %v77, 7
  %v79 = vsub.s32 0, %v78
  %v80 = vrot.slane %v75, %v79
  %v107 = vunpack.c.l.b16 %v18
  %v108 = vunpack.c.h.b16 %v18
  %v109 = vunpack.c.l.b16 %v19
  %v110 = vunpack.c.h.b16 %v19
  %v111 = vunpack.c.l.b16 %v20
  %v112 = vunpack.c.h.b16 %v20
  %v113 = vunpack.c.l.b16 %v21
  %v114 = vunpack.c.h.b16 %v21
  %v115 = vunpack.c.l.b16 %v22
  %v116 = vunpack.c.h.b16 %v22
  %v117 = vunpack.c.l.b16 %v23
  %v118 = vunpack.c.h.b16 %v23
  %v119 = vunpack.c.l.b16 %v24
  %v120 = vunpack.c.h.b16 %v24
  %v121 = vunpack.c.l.b16 %v25
  %v122 = vunpack.c.h.b16 %v25
  %v123 = vunpack.c.l.b16 %v26
  %v124 = vunpack.c.h.b16 %v26
  %v125 = vunpack.c.l.b16 %v27
  %v126 = vunpack.c.h.b16 %v27
  %v127 = vunpack.c.l.b16 %v28
  %v128 = vunpack.c.h.b16 %v28
  %v129 = vunpack.c.l.b16 %v29
  %v130 = vunpack.c.h.b16 %v29
  %v131 = vunpack.c.l.b16 %v30
  %v132 = vunpack.c.h.b16 %v30
  %v133 = vunpack.c.l.b16 %v31
  %v134 = vunpack.c.h.b16 %v31
  %v135 = vunpack.c.l.b16 %v32
  %v136 = vunpack.c.h.b16 %v32
  %v137 = vunpack.c.l.b16 %v33
  %v138 = vunpack.c.h.b16 %v33
  %v139 = vunpack.c.l.b16 %v34
  %v140 = vunpack.c.h.b16 %v34
  %v141 = vunpack.c.l.b16 %v35
  %v142 = vunpack.c.h.b16 %v35
  %v143 = vunpack.c.l.b16 %v36
  %v144 = vunpack.c.h.b16 %v36
  %v145 = vunpack.c.l.b16 %v37
  %v146 = vunpack.c.h.b16 %v37
  %v147 = vunpack.c.l.b16 %v38
  %v148 = vunpack.c.h.b16 %v38
  %v149 = vunpack.c.l.b16 %v39
  %v150 = vunpack.c.h.b16 %v39
  %v151 = vunpack.c.l.b16 %v40
  %v152 = vunpack.c.h.b16 %v40
  %v153 = vunpack.c.l.b16 %v41
  %v154 = vunpack.c.h.b16 %v41
  %v155 = vunpack.c.l.b16 %v42
  %v156 = vunpack.c.h.b16 %v42
  %v157 = vpack.c.b16 %v109, %v107
  %v158 = vpack.c.b16 %v110, %v108
  %v159 = vpack.c.b16 %v113, %v111
  %v160 = vpack.c.b16 %v114, %v112
  %v161 = vpack.c.b16 %v117, %v115
  %v162 = vpack.c.b16 %v118, %v116
  %v163 = vpack.c.b16 %v121, %v119
  %v164 = vpack.c.b16 %v122, %v120
  %v165 = vpack.c.b16 %v125, %v123
  %v166 = vpack.c.b16 %v126, %v124
  %v167 = vpack.c.b16 %v129, %v127
  %v168 = vpack.c.b16 %v130, %v128
  %v169 = vpack.c.b16 %v133, %v131
  %v170 = vpack.c.b16 %v134, %v132
  %v171 = vpack.c.b16 %v137, %v135
  %v172 = vpack.c.b16 %v138, %v136
  %v173 = vpack.c.b16 %v141, %v139
  %v174 = vpack.c.b16 %v142, %v140
  %v175 = vpack.c.b16 %v145, %v143
  %v176 = vpack.c.b16 %v146, %v144
  %v177 = vpack.c.b16 %v149, %v147
  %v178 = vpack.c.b16 %v150, %v148
  %v179 = vpack.c.b16 %v153, %v151
  %v180 = vpack.c.b16 %v154, %v152
  %v181 = vpack.c.b16 %v155, %v155
  %v182 = vpack.c.b16 %v156, %v156
  %v241 = vunpack.c.l.b16 %v43
  %v242 = vunpack.c.l.b16 %v44
  %v243 = vunpack.c.l.b16 %v45
  %v244 = vunpack.c.l.b16 %v46
  %v245 = vunpack.c.l.b16 %v47
  %v246 = vunpack.c.l.b16 %v48
  %v247 = vunpack.c.l.b16 %v49
  %v248 = vunpack.c.l.b16 %v50
  %v249 = vunpack.c.l.b16 %v51
  %v250 = vunpack.c.l.b16 %v52
  %v251 = vunpack.c.l.b16 %v53
  %v252 = vunpack.c.l.b16 %v54
  %v253 = vunpack.c.l.b16 %v55
  %v254 = vunpack.c.l.b16 %v56
  %v255 = vunpack.c.l.b16 %v57
  %v256 = vunpack.c.l.b16 %v58
  %v257 = vunpack.c.l.b16 %v59
  %v258 = vunpack.c.l.b16 %v60
  %v259 = vunpack.c.l.b16 %v61
  %v260 = vunpack.c.l.b16 %v62
  %v261 = vunpack.c.l.b16 %v63
  %v262 = vunpack.c.l.b16 %v64
  %v263 = vunpack.c.l.b16 %v65
  %v264 = vunpack.c.l.b16 %v66
  %v265 = vunpack.c.l.b16 %v67
  %v266 = vunpack.c.l.b16 %v68
  %v267 = vunpack.c.l.b16 %v69
  %v268 = vunpack.c.l.b16 %v70
  %v269 = vunpack.c.l.b16 %v71
  %v270 = vunpack.c.l.b16 %v72
  %v271 = vunpack.c.l.b16 %v73
  %v272 = vunpack.c.l.b16 %v74
  %v273 = vpack.c.b16 %v242, %v241
  %v274 = vpack.c.b16 %v244, %v243
  %v275 = vpack.c.b16 %v246, %v245
  %v276 = vpack.c.b16 %v248, %v247
  %v277 = vpack.c.b16 %v250, %v249
  %v278 = vpack.c.b16 %v252, %v251
  %v279 = vpack.c.b16 %v254, %v253
  %v280 = vpack.c.b16 %v256, %v255
  %v281 = vpack.c.b16 %v258, %v257
  %v282 = vpack.c.b16 %v260, %v259
  %v283 = vpack.c.b16 %v262, %v261
  %v284 = vpack.c.b16 %v264, %v263
  %v285 = vpack.c.b16 %v266, %v265
  %v286 = vpack.c.b16 %v268, %v267
  %v287 = vpack.c.b16 %v270, %v269
  %v288 = vpack.c.b16 %v272, %v271
  %305 = vmatprep.subr.bf16.mxu0 0
  %306 = vmatpush1.bf16.msra.mxu0 %v273
  %307 = vmatprep.subr.bf16.mxu0 0
  %308 = vmatpush1.bf16.msra.mxu0 %v274
  %309 = vmatprep.subr.bf16.mxu0 0
  %310 = vmatpush1.bf16.msra.mxu0 %v275
  %311 = vmatprep.subr.bf16.mxu0 0
  %312 = vmatpush1.bf16.msra.mxu0 %v276
  %313 = vmatprep.subr.bf16.mxu0 0
  %314 = vmatpush1.bf16.msra.mxu0 %v277
  %315 = vmatprep.subr.bf16.mxu0 0
  %316 = vmatpush1.bf16.msra.mxu0 %v278
  %317 = vmatprep.subr.bf16.mxu0 0
  %318 = vmatpush1.bf16.msra.mxu0 %v279
  %319 = vmatprep.subr.bf16.mxu0 0
  %320 = vmatpush1.bf16.msra.mxu0 %v280
  %321 = vmatprep.subr.bf16.mxu0 0
  %322 = vmatpush1.bf16.msra.mxu0 %v281
  %323 = vmatprep.subr.bf16.mxu0 0
  %324 = vmatpush1.bf16.msra.mxu0 %v282
  %325 = vmatprep.subr.bf16.mxu0 0
  %326 = vmatpush1.bf16.msra.mxu0 %v283
  %327 = vmatprep.subr.bf16.mxu0 0
  %328 = vmatpush1.bf16.msra.mxu0 %v284
  %329 = vmatprep.subr.bf16.mxu0 0
  %330 = vmatpush1.bf16.msra.mxu0 %v285
  %331 = vmatprep.subr.bf16.mxu0 0
  %332 = vmatpush1.bf16.msra.mxu0 %v286
  %333 = vmatprep.subr.bf16.mxu0 0
  %334 = vmatpush1.bf16.msra.mxu0 %v287
  %335 = vmatprep.subr.bf16.mxu0 0
  %336 = vmatpush1.bf16.msra.mxu0 %v288
  %337 = vmatprep.mubr.bf16.mxu0 %v158
  %338 = vmatmul.mubr.bf16.gmra.mrb[0].mxu0 %v157
  %v339 = vpop.f32.mrb[0].mxu0
  %v340 = vadd.f32 %v80, %v339
  %v341 = vpop.f32.mrb[0].mxu0
  %v342 = vpop.f32.mrb[0].mxu0
  %v343 = vadd.f32 %v80, %v342
  %v344 = vpop.f32.mrb[0].mxu0
  %345 = vmatprep.mubr.bf16.mxu0 %v160
  %346 = vmatmul.mubr.bf16.gmra.mrb[0].mxu0 %v159
  %v347 = vpop.f32.mrb[0].mxu0
  %v348 = vadd.f32 %v80, %v347
  %v349 = vpop.f32.mrb[0].mxu0
  %v350 = vpop.f32.mrb[0].mxu0
  %v351 = vadd.f32 %v80, %v350
  %v352 = vpop.f32.mrb[0].mxu0
  %353 = vmatprep.mubr.bf16.mxu0 %v162
  %354 = vmatmul.mubr.bf16.gmra.mrb[0].mxu0 %v161
  %v355 = vpop.f32.mrb[0].mxu0
  %v356 = vadd.f32 %v80, %v355
  %v357 = vpop.f32.mrb[0].mxu0
  %v358 = vpop.f32.mrb[0].mxu0
  %v359 = vadd.f32 %v80, %v358
  %v360 = vpop.f32.mrb[0].mxu0
  %361 = vmatprep.mubr.bf16.mxu0 %v164
  %362 = vmatmul.mubr.bf16.gmra.mrb[0].mxu0 %v163
  %v363 = vpop.f32.mrb[0].mxu0
  %v364 = vadd.f32 %v80, %v363
  %v365 = vpop.f32.mrb[0].mxu0
  %v366 = vpop.f32.mrb[0].mxu0
  %v367 = vadd.f32 %v80, %v366
  %v368 = vpop.f32.mrb[0].mxu0
  %369 = vmatprep.mubr.bf16.mxu0 %v166
  %370 = vmatmul.mubr.bf16.gmra.mrb[0].mxu0 %v165
  %v371 = vpop.f32.mrb[0].mxu0
  %v372 = vadd.f32 %v80, %v371
  %v373 = vpop.f32.mrb[0].mxu0
  %v374 = vpop.f32.mrb[0].mxu0
  %v375 = vadd.f32 %v80, %v374
  %v376 = vpop.f32.mrb[0].mxu0
  %377 = vmatprep.mubr.bf16.mxu0 %v168
  %378 = vmatmul.mubr.bf16.gmra.mrb[0].mxu0 %v167
  %v379 = vpop.f32.mrb[0].mxu0
  %v380 = vadd.f32 %v80, %v379
  %v381 = vpop.f32.mrb[0].mxu0
  %v382 = vpop.f32.mrb[0].mxu0
  %v383 = vadd.f32 %v80, %v382
  %v384 = vpop.f32.mrb[0].mxu0
  %385 = vmatprep.mubr.bf16.mxu0 %v170
  %386 = vmatmul.mubr.bf16.gmra.mrb[0].mxu0 %v169
  %v387 = vpop.f32.mrb[0].mxu0
  %v388 = vadd.f32 %v80, %v387
  %v389 = vpop.f32.mrb[0].mxu0
  %v390 = vpop.f32.mrb[0].mxu0
  %v391 = vadd.f32 %v80, %v390
  %v392 = vpop.f32.mrb[0].mxu0
  %393 = vmatprep.mubr.bf16.mxu0 %v172
  %394 = vmatmul.mubr.bf16.gmra.mrb[0].mxu0 %v171
  %v395 = vpop.f32.mrb[0].mxu0
  %v396 = vadd.f32 %v80, %v395
  %v397 = vpop.f32.mrb[0].mxu0
  %v398 = vpop.f32.mrb[0].mxu0
  %v399 = vadd.f32 %v80, %v398
  %v400 = vpop.f32.mrb[0].mxu0
  %401 = vmatprep.mubr.bf16.mxu0 %v174
  %402 = vmatmul.mubr.bf16.gmra.mrb[0].mxu0 %v173
  %v403 = vpop.f32.mrb[0].mxu0
  %v404 = vadd.f32 %v80, %v403
  %v405 = vpop.f32.mrb[0].mxu0
  %v406 = vpop.f32.mrb[0].mxu0
  %v407 = vadd.f32 %v80, %v406
  %v408 = vpop.f32.mrb[0].mxu0
  %409 = vmatprep.mubr.bf16.mxu0 %v176
  %410 = vmatmul.mubr.bf16.gmra.mrb[0].mxu0 %v175
  %v411 = vpop.f32.mrb[0].mxu0
  %v412 = vadd.f32 %v80, %v411
  %v413 = vpop.f32.mrb[0].mxu0
  %v414 = vpop.f32.mrb[0].mxu0
  %v415 = vadd.f32 %v80, %v414
  %v416 = vpop.f32.mrb[0].mxu0
  %417 = vmatprep.mubr.bf16.mxu0 %v178
  %418 = vmatmul.mubr.bf16.gmra.mrb[0].mxu0 %v177
  %v419 = vpop.f32.mrb[0].mxu0
  %v420 = vadd.f32 %v80, %v419
  %v421 = vpop.f32.mrb[0].mxu0
  %v422 = vpop.f32.mrb[0].mxu0
  %v423 = vadd.f32 %v80, %v422
  %v424 = vpop.f32.mrb[0].mxu0
  %425 = vmatprep.mubr.bf16.mxu0 %v180
  %426 = vmatmul.mubr.bf16.gmra.mrb[0].mxu0 %v179
  %v427 = vpop.f32.mrb[0].mxu0
  %v428 = vadd.f32 %v80, %v427
  %v429 = vpop.f32.mrb[0].mxu0
  %v430 = vpop.f32.mrb[0].mxu0
  %v431 = vadd.f32 %v80, %v430
  %v432 = vpop.f32.mrb[0].mxu0
  %433 = vmatprep.mubr.bf16.mxu0 %v182
  %434 = vmatmul.mubr.bf16.gmra.mrb[0].mxu0 %v181
  %v435 = vpop.f32.mrb[0].mxu0
  %v436 = vadd.f32 %v80, %v435
  %v437 = vpop.f32.mrb[0].mxu0
  %v438 = vpop.f32.mrb[0].mxu0
  %v439 = vpop.f32.mrb[0].mxu0
  %440 = vdwg.mxu0
  %v441 = vmax.f32 %v340, 0.0
  %v442 = vmax.f32 %v343, 0.0
  %v443 = vmax.f32 %v348, 0.0
  %v444 = vmax.f32 %v351, 0.0
  %v445 = vmax.f32 %v356, 0.0
  %v446 = vmax.f32 %v359, 0.0
  %v447 = vmax.f32 %v364, 0.0
  %v448 = vmax.f32 %v367, 0.0
  %v449 = vmax.f32 %v372, 0.0
  %v450 = vmax.f32 %v375, 0.0
  %v451 = vmax.f32 %v380, 0.0
  %v452 = vmax.f32 %v383, 0.0
  %v453 = vmax.f32 %v388, 0.0
  %v454 = vmax.f32 %v391, 0.0
  %v455 = vmax.f32 %v396, 0.0
  %v456 = vmax.f32 %v399, 0.0
  %v457 = vmax.f32 %v404, 0.0
  %v458 = vmax.f32 %v407, 0.0
  %v459 = vmax.f32 %v412, 0.0
  %v460 = vmax.f32 %v415, 0.0
  %v461 = vmax.f32 %v420, 0.0
  %v462 = vmax.f32 %v423, 0.0
  %v463 = vmax.f32 %v428, 0.0
  %v464 = vmax.f32 %v431, 0.0
  %v465 = vmax.f32 %v436, 0.0
  %v466 = vpack.c.bf16 %v442, %v441
  %v467 = vpack.c.bf16 %v444, %v443
  %v468 = vpack.c.bf16 %v446, %v445
  %v469 = vpack.c.bf16 %v448, %v447
  %v470 = vpack.c.bf16 %v450, %v449
  %v471 = vpack.c.bf16 %v452, %v451
  %v472 = vpack.c.bf16 %v454, %v453
  %v473 = vpack.c.bf16 %v456, %v455
  %v474 = vpack.c.bf16 %v458, %v457
  %v475 = vpack.c.bf16 %v460, %v459
  %v476 = vpack.c.bf16 %v462, %v461
  %v477 = vpack.c.bf16 %v464, %v463
  %v478 = vpack.c.bf16 %v465, %v465
  %v479 = vld [vmem:[%s3] sm:$0xff]
  %v480 = vld [vmem:[%s3 + $0x8] sm:$0xff]
  %v481 = vld [vmem:[%s3 + $0x10] sm:$0xff]
  %v482 = vld [vmem:[%s3 + $0x18] sm:$0xff]
  %v483 = vld [vmem:[%s3 + $0x20] sm:$0xff]
  %v484 = vld [vmem:[%s3 + $0x28] sm:$0xff]
  %v485 = vld [vmem:[%s3 + $0x30] sm:$0x11]
  %v493 = vunpack.c.l.b16 %v479
  %v494 = vunpack.c.h.b16 %v479
  %v495 = vunpack.c.l.b16 %v480
  %v496 = vunpack.c.h.b16 %v480
  %v497 = vunpack.c.l.b16 %v481
  %v498 = vunpack.c.h.b16 %v481
  %v499 = vunpack.c.l.b16 %v482
  %v500 = vunpack.c.h.b16 %v482
  %v501 = vunpack.c.l.b16 %v483
  %v502 = vunpack.c.h.b16 %v483
  %v503 = vunpack.c.l.b16 %v484
  %v504 = vunpack.c.h.b16 %v484
  %v505 = vunpack.c.l.b16 %v485
  %v506 = vunpack.c.h.b16 %v485
  %v507 = vpack.c.b16 %v495, %v493
  %v508 = vpack.c.b16 %v496, %v494
  %v509 = vpack.c.b16 %v499, %v497
  %v510 = vpack.c.b16 %v500, %v498
  %v511 = vpack.c.b16 %v503, %v501
  %v512 = vpack.c.b16 %v504, %v502
  %v513 = vpack.c.b16 %v505, %v505
  %v514 = vpack.c.b16 %v506, %v506
  %vm519 = vcmask 588800
  %v521 = vsel %vm519, %v508, 0
  %v524 = vsel %vm519, %v510, 0
  %v527 = vsel %vm519, %v512, 0
  %v530 = vsel %vm519, %v514, 0
  %vm532 = vcmask 1043456
  %v534 = vsel %vm532, %v478, 0
  %536 = vmatprep.subr.bf16.mxu0 0
  %537 = vmatpush1.bf16.msra.mxu0 %v466
  %538 = vmatprep.subr.bf16.mxu0 0
  %539 = vmatpush1.bf16.msra.mxu0 %v467
  %540 = vmatprep.subr.bf16.mxu0 0
  %541 = vmatpush1.bf16.msra.mxu0 %v468
  %542 = vmatprep.subr.bf16.mxu0 0
  %543 = vmatpush1.bf16.msra.mxu0 %v469
  %544 = vmatprep.subr.bf16.mxu0 0
  %545 = vmatpush1.bf16.msra.mxu0 %v470
  %546 = vmatprep.subr.bf16.mxu0 0
  %547 = vmatpush1.bf16.msra.mxu0 %v471
  %548 = vmatprep.subr.bf16.mxu0 0
  %549 = vmatpush1.bf16.msra.mxu0 %v472
  %550 = vmatprep.subr.bf16.mxu0 0
  %551 = vmatpush1.bf16.msra.mxu0 %v473
  %552 = vmatprep.subr.bf16.mxu0 0
  %553 = vmatpush1.bf16.msra.mxu0 %v474
  %554 = vmatprep.subr.bf16.mxu0 0
  %555 = vmatpush1.bf16.msra.mxu0 %v475
  %556 = vmatprep.subr.bf16.mxu0 0
  %557 = vmatpush1.bf16.msra.mxu0 %v476
  %558 = vmatprep.subr.bf16.mxu0 0
  %559 = vmatpush1.bf16.msra.mxu0 %v477
  %560 = vmatprep.subr.bf16.mxu0 0
  %561 = vmatpush1.bf16.msra.mxu0 %v534
  %562 = vmatprep.subr.bf16.mxu0 0
  %563 = vmatpush1.bf16.msra.mxu0 0
  %564 = vmatprep.subr.bf16.mxu0 0
  %565 = vmatpush1.bf16.msra.mxu0 0
  %566 = vmatprep.subr.bf16.mxu0 0
  %567 = vmatpush1.bf16.msra.mxu0 0
  %568 = vmatprep.mubr.bf16.mxu0 %v521
  %569 = vmatmul.mubr.bf16.gmra.mrb[0].mxu0 %v507
  %v570 = vpop.f32.mrb[0].mxu0
  %v571 = vadd.f32 0.0, %v570
  %v572 = vpop.f32.mrb[0].mxu0
  %v573 = vpop.f32.mrb[0].mxu0
  %v574 = vadd.f32 0.0, %v573
  %v575 = vpop.f32.mrb[0].mxu0
  %576 = vmatprep.mubr.bf16.mxu0 %v524
  %577 = vmatmul.mubr.bf16.gmra.mrb[0].mxu0 %v509
  %v578 = vpop.f32.mrb[0].mxu0
  %v579 = vadd.f32 0.0, %v578
  %v580 = vpop.f32.mrb[0].mxu0
  %v581 = vpop.f32.mrb[0].mxu0
  %v582 = vadd.f32 0.0, %v581
  %v583 = vpop.f32.mrb[0].mxu0
  %584 = vmatprep.mubr.bf16.mxu0 %v527
  %585 = vmatmul.mubr.bf16.gmra.mrb[0].mxu0 %v511
  %v586 = vpop.f32.mrb[0].mxu0
  %v587 = vadd.f32 0.0, %v586
  %v588 = vpop.f32.mrb[0].mxu0
  %v589 = vpop.f32.mrb[0].mxu0
  %v590 = vadd.f32 0.0, %v589
  %v591 = vpop.f32.mrb[0].mxu0
  %592 = vmatprep.mubr.bf16.mxu0 %v530
  %593 = vmatmul.mubr.bf16.gmra.mrb[0].mxu0 %v513
  %v594 = vpop.f32.mrb[0].mxu0
  %v595 = vadd.f32 0.0, %v594
  %v596 = vpop.f32.mrb[0].mxu0
  %v597 = vpop.f32.mrb[0].mxu0
  %v598 = vpop.f32.mrb[0].mxu0
  %599 = vdwg.mxu0
  %v600 = vpack.c.bf16 %v574, %v571
  %v601 = vpack.c.bf16 %v582, %v579
  %v602 = vpack.c.bf16 %v590, %v587
  %v603 = vpack.c.bf16 %v595, %v595
  %v608 = vunpack.c.l.b16 %v600
  %v609 = vunpack.c.h.b16 %v600
  %v610 = vunpack.c.l.b16 %v601
  %v611 = vunpack.c.h.b16 %v601
  %v612 = vunpack.c.l.b16 %v602
  %v613 = vunpack.c.h.b16 %v602
  %v614 = vunpack.c.l.b16 %v603
  %v615 = vpack.c.b16 %v608, %v608
  %v616 = vpack.c.b16 %v609, %v609
  %v617 = vpack.c.b16 %v610, %v610
  %v618 = vpack.c.b16 %v611, %v611
  %v619 = vpack.c.b16 %v612, %v612
  %v620 = vpack.c.b16 %v613, %v613
  %v621 = vpack.c.b16 %v614, %v614
  %629 = vst [vmem:[%s4] sm:$0xf] %v615
  %630 = vst [vmem:[%s4 + $0x4] sm:$0xf] %v616
  %631 = vst [vmem:[%s4 + $0x8] sm:$0xf] %v617
  %632 = vst [vmem:[%s4 + $0xc] sm:$0xf] %v618
  %633 = vst [vmem:[%s4 + $0x10] sm:$0xf] %v619
  %634 = vst [vmem:[%s4 + $0x14] sm:$0xf] %v620
  %635 = vst [vmem:[%s4 + $0x18] sm:$0x1] %v621
  // Predicated region
  $region18: #{lenet_forward.4} parent=0 // pred_check
    _
  $region19: #{lenet_forward.4} parent=0 // pred_check_branch
    %637 = sbr.rel (0) target = $region21
  $region20: #{lenet_forward.4} parent=0 // pred_region
    _
  $region21: #{lenet_forward.4} parent=0 // pred_fallthru
    _
  // Predicated region
  $region22: #{lenet_forward.4} parent=0 // pred_check
    _
  $region23: #{lenet_forward.4} parent=0 // pred_check_branch
    %639 = sbr.rel (0) target = $region25
  $region24: #{lenet_forward.4} parent=0 // pred_region
    _
  $region25: #{lenet_forward.4} parent=0 // pred_fallthru
    _

// kernel: lenet_forward.3
$region0: #{lenet_forward.3}
  #allocation0 [shape = 'u32[]', space=smem, size = 0x4, offset = 0x4, fixed_abs, tag = 'smem constant byte address 0x4 - core index']
  #allocation1 [shape = 'u32[144,128]{1,0:T(1,128)}', space=vmem, size = 0x12000, scoped, tag = 'internal scratch']
  %s0 = inlined_call_operand.vmem [shape: bf16[1568,128], index: 0, kind: input, shape index: {}]
  %s1 = inlined_call_operand.vmem [shape: bf16[128,128], index: 1, kind: input, shape index: {}]
  %s2 = inlined_call_operand.vmem [shape: f32[1,128], index: 2, kind: input, shape index: {}]
  %s3 = inlined_call_operand.vmem [shape: bf16[392,1568], index: 3, kind: input, shape index: {}]
  %s4 = inlined_call_operand.vmem [shape: bf16[392,128], index: 4, kind: output, shape index: {}]
  %s5 = sld [smem:[#allocation0]]
  $region26: #{lenet_forward.3} parent=0
    _
  %s7 = ssub.s32 1, %s5
  %s8 = scalar_select 0, %s7, %s5
  // Predicated region
  $region2: #{lenet_forward.3} parent=0 // pred_check
    _
  $region3: #{lenet_forward.3} parent=0 // pred_check_branch
    %10 = sbr.rel (0) target = $region5
  $region4: #{lenet_forward.3} parent=0 // pred_region
    _
  $region5: #{lenet_forward.3} parent=0 // pred_fallthru
    _
  // Predicated region
  $region6: #{lenet_forward.3} parent=0 // pred_check
    _
  $region7: #{lenet_forward.3} parent=0 // pred_check_branch
    %12 = sbr.rel (0) target = $region9
  $region8: #{lenet_forward.3} parent=0 // pred_region
    _
  $region9: #{lenet_forward.3} parent=0 // pred_fallthru
    _
  // Predicated region
  $region10: #{lenet_forward.3} parent=0 // pred_check
    _
  $region11: #{lenet_forward.3} parent=0 // pred_check_branch
    %14 = sbr.rel (0) target = $region13
  $region12: #{lenet_forward.3} parent=0 // pred_region
    _
  $region13: #{lenet_forward.3} parent=0 // pred_fallthru
    _
  // Predicated region
  $region14: #{lenet_forward.3} parent=0 // pred_check
    _
  $region15: #{lenet_forward.3} parent=0 // pred_check_branch
    %16 = sbr.rel (0) target = $region17
  $region16: #{lenet_forward.3} parent=0 // pred_region
    _
  $region17: #{lenet_forward.3} parent=0 // pred_fallthru
    _
  %v18 = vld [vmem:[%s0] sm:$0xf]
  %v19 = vld [vmem:[%s0 + $0x4] sm:$0xf]
  %v20 = vld [vmem:[%s0 + $0x8] sm:$0xf]
  %v21 = vld [vmem:[%s0 + $0xc] sm:$0xf]
  %v22 = vld [vmem:[%s0 + $0x10] sm:$0xf]
  %v23 = vld [vmem:[%s0 + $0x14] sm:$0xf]
  %v24 = vld [vmem:[%s0 + $0x18] sm:$0xf]
  %v25 = vld [vmem:[%s0 + $0x1c] sm:$0xf]
  %v26 = vld [vmem:[%s0 + $0x20] sm:$0xf]
  %v27 = vld [vmem:[%s0 + $0x24] sm:$0xf]
  %v28 = vld [vmem:[%s0 + $0x28] sm:$0xf]
  %v29 = vld [vmem:[%s0 + $0x2c] sm:$0xf]
  %v30 = vld [vmem:[%s0 + $0x30] sm:$0xf]
  %v31 = vld [vmem:[%s0 + $0x34] sm:$0xf]
  %v32 = vld [vmem:[%s0 + $0x38] sm:$0xf]
  %v33 = vld [vmem:[%s0 + $0x3c] sm:$0xf]
  %v34 = vld [vmem:[%s0 + $0x40] sm:$0xf]
  %v35 = vld [vmem:[%s0 + $0x44] sm:$0xf]
  %v36 = vld [vmem:[%s0 + $0x48] sm:$0xf]
  %v37 = vld [vmem:[%s0 + $0x4c] sm:$0xf]
  %v38 = vld [vmem:[%s0 + $0x50] sm:$0xf]
  %v39 = vld [vmem:[%s0 + $0x54] sm:$0xf]
  %v40 = vld [vmem:[%s0 + $0x58] sm:$0xf]
  %v41 = vld [vmem:[%s0 + $0x5c] sm:$0xf]
  %v42 = vld [vmem:[%s0 + $0x60] sm:$0xf]
  %v43 = vld [vmem:[%s0 + $0x64] sm:$0xf]
  %v44 = vld [vmem:[%s0 + $0x68] sm:$0xf]
  %v45 = vld [vmem:[%s0 + $0x6c] sm:$0xf]
  %v46 = vld [vmem:[%s0 + $0x70] sm:$0xf]
  %v47 = vld [vmem:[%s0 + $0x74] sm:$0xf]
  %v48 = vld [vmem:[%s0 + $0x78] sm:$0xf]
  %v49 = vld [vmem:[%s0 + $0x7c] sm:$0xf]
  %v50 = vld [vmem:[%s0 + $0x80] sm:$0xf]
  %v51 = vld [vmem:[%s0 + $0x84] sm:$0xf]
  %v52 = vld [vmem:[%s0 + $0x88] sm:$0xf]
  %v53 = vld [vmem:[%s0 + $0x8c] sm:$0xf]
  %v54 = vld [vmem:[%s0 + $0x90] sm:$0xf]
  %v55 = vld [vmem:[%s0 + $0x94] sm:$0xf]
  %v56 = vld [vmem:[%s0 + $0x98] sm:$0xf]
  %v57 = vld [vmem:[%s0 + $0x9c] sm:$0xf]
  %v58 = vld [vmem:[%s0 + $0xa0] sm:$0xf]
  %v59 = vld [vmem:[%s0 + $0xa4] sm:$0xf]
  %v60 = vld [vmem:[%s0 + $0xa8] sm:$0xf]
  %v61 = vld [vmem:[%s0 + $0xac] sm:$0xf]
  %v62 = vld [vmem:[%s0 + $0xb0] sm:$0xf]
  %v63 = vld [vmem:[%s0 + $0xb4] sm:$0xf]
  %v64 = vld [vmem:[%s0 + $0xb8] sm:$0xf]
  %v65 = vld [vmem:[%s0 + $0xbc] sm:$0xf]
  %v66 = vld [vmem:[%s0 + $0xc0] sm:$0xf]
  %v67 = vld [vmem:[%s0 + $0xc4] sm:$0xf]
  %v68 = vld [vmem:[%s0 + $0xc8] sm:$0xf]
  %v69 = vld [vmem:[%s0 + $0xcc] sm:$0xf]
  %v70 = vld [vmem:[%s0 + $0xd0] sm:$0xf]
  %v71 = vld [vmem:[%s0 + $0xd4] sm:$0xf]
  %v72 = vld [vmem:[%s0 + $0xd8] sm:$0xf]
  %v73 = vld [vmem:[%s0 + $0xdc] sm:$0xf]
  %v74 = vld [vmem:[%s0 + $0xe0] sm:$0xf]
  %v75 = vld [vmem:[%s0 + $0xe4] sm:$0xf]
  %v76 = vld [vmem:[%s0 + $0xe8] sm:$0xf]
  %v77 = vld [vmem:[%s0 + $0xec] sm:$0xf]
  %v78 = vld [vmem:[%s0 + $0xf0] sm:$0xf]
  %v79 = vld [vmem:[%s0 + $0xf4] sm:$0xf]
  %v80 = vld [vmem:[%s0 + $0xf8] sm:$0xf]
  %v81 = vld [vmem:[%s0 + $0xfc] sm:$0xf]
  %v82 = vld [vmem:[%s0 + $0x100] sm:$0xf]
  %v83 = vld [vmem:[%s0 + $0x104] sm:$0xf]
  %v84 = vld [vmem:[%s0 + $0x108] sm:$0xf]
  %v85 = vld [vmem:[%s0 + $0x10c] sm:$0xf]
  %v86 = vld [vmem:[%s0 + $0x110] sm:$0xf]
  %v87 = vld [vmem:[%s0 + $0x114] sm:$0xf]
  %v88 = vld [vmem:[%s0 + $0x118] sm:$0xf]
  %v89 = vld [vmem:[%s0 + $0x11c] sm:$0xf]
  %v90 = vld [vmem:[%s0 + $0x120] sm:$0xf]
  %v91 = vld [vmem:[%s0 + $0x124] sm:$0xf]
  %v92 = vld [vmem:[%s0 + $0x128] sm:$0xf]
  %v93 = vld [vmem:[%s0 + $0x12c] sm:$0xf]
  %v94 = vld [vmem:[%s0 + $0x130] sm:$0xf]
  %v95 = vld [vmem:[%s0 + $0x134] sm:$0xf]
  %v96 = vld [vmem:[%s0 + $0x138] sm:$0xf]
  %v97 = vld [vmem:[%s0 + $0x13c] sm:$0xf]
  %v98 = vld [vmem:[%s0 + $0x140] sm:$0xf]
  %v99 = vld [vmem:[%s0 + $0x144] sm:$0xf]
  %v100 = vld [vmem:[%s0 + $0x148] sm:$0xf]
  %v101 = vld [vmem:[%s0 + $0x14c] sm:$0xf]
  %v102 = vld [vmem:[%s0 + $0x150] sm:$0xf]
  %v103 = vld [vmem:[%s0 + $0x154] sm:$0xf]
  %v104 = vld [vmem:[%s0 + $0x158] sm:$0xf]
  %v105 = vld [vmem:[%s0 + $0x15c] sm:$0xf]
  %v106 = vld [vmem:[%s0 + $0x160] sm:$0xf]
  %v107 = vld [vmem:[%s0 + $0x164] sm:$0xf]
  %v108 = vld [vmem:[%s0 + $0x168] sm:$0xf]
  %v109 = vld [vmem:[%s0 + $0x16c] sm:$0xf]
  %v110 = vld [vmem:[%s0 + $0x170] sm:$0xf]
  %v111 = vld [vmem:[%s0 + $0x174] sm:$0xf]
  %v112 = vld [vmem:[%s0 + $0x178] sm:$0xf]
  %v113 = vld [vmem:[%s0 + $0x17c] sm:$0xf]
  %v114 = vld [vmem:[%s0 + $0x180] sm:$0xf]
  %v115 = vld [vmem:[%s0 + $0x184] sm:$0xf]
  %v116 = vld [vmem:[%s0 + $0x188] sm:$0xf]
  %v117 = vld [vmem:[%s0 + $0x18c] sm:$0xf]
  %v118 = vld [vmem:[%s0 + $0x190] sm:$0xf]
  %v119 = vld [vmem:[%s0 + $0x194] sm:$0xf]
  %v120 = vld [vmem:[%s0 + $0x198] sm:$0xf]
  %v121 = vld [vmem:[%s0 + $0x19c] sm:$0xf]
  %v122 = vld [vmem:[%s0 + $0x1a0] sm:$0xf]
  %v123 = vld [vmem:[%s0 + $0x1a4] sm:$0xf]
  %v124 = vld [vmem:[%s0 + $0x1a8] sm:$0xf]
  %v125 = vld [vmem:[%s0 + $0x1ac] sm:$0xf]
  %v126 = vld [vmem:[%s0 + $0x1b0] sm:$0xf]
  %v127 = vld [vmem:[%s0 + $0x1b4] sm:$0xf]
  %v128 = vld [vmem:[%s0 + $0x1b8] sm:$0xf]
  %v129 = vld [vmem:[%s0 + $0x1bc] sm:$0xf]
  %v130 = vld [vmem:[%s0 + $0x1c0] sm:$0xf]
  %v131 = vld [vmem:[%s0 + $0x1c4] sm:$0xf]
  %v132 = vld [vmem:[%s0 + $0x1c8] sm:$0xf]
  %v133 = vld [vmem:[%s0 + $0x1cc] sm:$0xf]
  %v134 = vld [vmem:[%s0 + $0x1d0] sm:$0xf]
  %v135 = vld [vmem:[%s0 + $0x1d4] sm:$0xf]
  %v136 = vld [vmem:[%s0 + $0x1d8] sm:$0xf]
  %v137 = vld [vmem:[%s0 + $0x1dc] sm:$0xf]
  %v138 = vld [vmem:[%s0 + $0x1e0] sm:$0xf]
  %v139 = vld [vmem:[%s0 + $0x1e4] sm:$0xf]
  %v140 = vld [vmem:[%s0 + $0x1e8] sm:$0xf]
  %v141 = vld [vmem:[%s0 + $0x1ec] sm:$0xf]
  %v142 = vld [vmem:[%s0 + $0x1f0] sm:$0xf]
  %v143 = vld [vmem:[%s0 + $0x1f4] sm:$0xf]
  %v144 = vld [vmem:[%s0 + $0x1f8] sm:$0xf]
  %v145 = vld [vmem:[%s0 + $0x1fc] sm:$0xf]
  %v146 = vld [vmem:[%s0 + $0x200] sm:$0xf]
  %v147 = vld [vmem:[%s0 + $0x204] sm:$0xf]
  %v148 = vld [vmem:[%s0 + $0x208] sm:$0xf]
  %v149 = vld [vmem:[%s0 + $0x20c] sm:$0xf]
  %v150 = vld [vmem:[%s0 + $0x210] sm:$0xf]
  %v151 = vld [vmem:[%s0 + $0x214] sm:$0xf]
  %v152 = vld [vmem:[%s0 + $0x218] sm:$0xf]
  %v153 = vld [vmem:[%s0 + $0x21c] sm:$0xf]
  %v154 = vld [vmem:[%s0 + $0x220] sm:$0xf]
  %v155 = vld [vmem:[%s0 + $0x224] sm:$0xf]
  %v156 = vld [vmem:[%s0 + $0x228] sm:$0xf]
  %v157 = vld [vmem:[%s0 + $0x22c] sm:$0xf]
  %v158 = vld [vmem:[%s0 + $0x230] sm:$0xf]
  %v159 = vld [vmem:[%s0 + $0x234] sm:$0xf]
  %v160 = vld [vmem:[%s0 + $0x238] sm:$0xf]
  %v161 = vld [vmem:[%s0 + $0x23c] sm:$0xf]
  %v162 = vld [vmem:[%s0 + $0x240] sm:$0xf]
  %v163 = vld [vmem:[%s0 + $0x244] sm:$0xf]
  %v164 = vld [vmem:[%s0 + $0x248] sm:$0xf]
  %v165 = vld [vmem:[%s0 + $0x24c] sm:$0xf]
  %v166 = vld [vmem:[%s0 + $0x250] sm:$0xf]
  %v167 = vld [vmem:[%s0 + $0x254] sm:$0xf]
  %v168 = vld [vmem:[%s0 + $0x258] sm:$0xf]
  %v169 = vld [vmem:[%s0 + $0x25c] sm:$0xf]
  %v170 = vld [vmem:[%s0 + $0x260] sm:$0xf]
  %v171 = vld [vmem:[%s0 + $0x264] sm:$0xf]
  %v172 = vld [vmem:[%s0 + $0x268] sm:$0xf]
  %v173 = vld [vmem:[%s0 + $0x26c] sm:$0xf]
  %v174 = vld [vmem:[%s0 + $0x270] sm:$0xf]
  %v175 = vld [vmem:[%s0 + $0x274] sm:$0xf]
  %v176 = vld [vmem:[%s0 + $0x278] sm:$0xf]
  %v177 = vld [vmem:[%s0 + $0x27c] sm:$0xf]
  %v178 = vld [vmem:[%s0 + $0x280] sm:$0xf]
  %v179 = vld [vmem:[%s0 + $0x284] sm:$0xf]
  %v180 = vld [vmem:[%s0 + $0x288] sm:$0xf]
  %v181 = vld [vmem:[%s0 + $0x28c] sm:$0xf]
  %v182 = vld [vmem:[%s0 + $0x290] sm:$0xf]
  %v183 = vld [vmem:[%s0 + $0x294] sm:$0xf]
  %v184 = vld [vmem:[%s0 + $0x298] sm:$0xf]
  %v185 = vld [vmem:[%s0 + $0x29c] sm:$0xf]
  %v186 = vld [vmem:[%s0 + $0x2a0] sm:$0xf]
  %v187 = vld [vmem:[%s0 + $0x2a4] sm:$0xf]
  %v188 = vld [vmem:[%s0 + $0x2a8] sm:$0xf]
  %v189 = vld [vmem:[%s0 + $0x2ac] sm:$0xf]
  %v190 = vld [vmem:[%s0 + $0x2b0] sm:$0xf]
  %v191 = vld [vmem:[%s0 + $0x2b4] sm:$0xf]
  %v192 = vld [vmem:[%s0 + $0x2b8] sm:$0xf]
  %v193 = vld [vmem:[%s0 + $0x2bc] sm:$0xf]
  %v194 = vld [vmem:[%s0 + $0x2c0] sm:$0xf]
  %v195 = vld [vmem:[%s0 + $0x2c4] sm:$0xf]
  %v196 = vld [vmem:[%s0 + $0x2c8] sm:$0xf]
  %v197 = vld [vmem:[%s0 + $0x2cc] sm:$0xf]
  %v198 = vld [vmem:[%s0 + $0x2d0] sm:$0xf]
  %v199 = vld [vmem:[%s0 + $0x2d4] sm:$0xf]
  %v200 = vld [vmem:[%s0 + $0x2d8] sm:$0xf]
  %v201 = vld [vmem:[%s0 + $0x2dc] sm:$0xf]
  %v202 = vld [vmem:[%s0 + $0x2e0] sm:$0xf]
  %v203 = vld [vmem:[%s0 + $0x2e4] sm:$0xf]
  %v204 = vld [vmem:[%s0 + $0x2e8] sm:$0xf]
  %v205 = vld [vmem:[%s0 + $0x2ec] sm:$0xf]
  %v206 = vld [vmem:[%s0 + $0x2f0] sm:$0xf]
  %v207 = vld [vmem:[%s0 + $0x2f4] sm:$0xf]
  %v208 = vld [vmem:[%s0 + $0x2f8] sm:$0xf]
  %v209 = vld [vmem:[%s0 + $0x2fc] sm:$0xf]
  %v210 = vld [vmem:[%s0 + $0x300] sm:$0xf]
  %v211 = vld [vmem:[%s0 + $0x304] sm:$0xf]
  %v212 = vld [vmem:[%s0 + $0x308] sm:$0xf]
  %v213 = vld [vmem:[%s0 + $0x30c] sm:$0xf]
  %v214 = vld [vmem:[%s1] sm:$0xf]
  %v215 = vld [vmem:[%s1 + $0x4] sm:$0xf]
  %v216 = vld [vmem:[%s1 + $0x8] sm:$0xf]
  %v217 = vld [vmem:[%s1 + $0xc] sm:$0xf]
  %v218 = vld [vmem:[%s1 + $0x10] sm:$0xf]
  %v219 = vld [vmem:[%s1 + $0x14] sm:$0xf]
  %v220 = vld [vmem:[%s1 + $0x18] sm:$0xf]
  %v221 = vld [vmem:[%s1 + $0x1c] sm:$0xf]
  %v222 = vld [vmem:[%s1 + $0x20] sm:$0xf]
  %v223 = vld [vmem:[%s1 + $0x24] sm:$0xf]
  %v224 = vld [vmem:[%s1 + $0x28] sm:$0xf]
  %v225 = vld [vmem:[%s1 + $0x2c] sm:$0xf]
  %v226 = vld [vmem:[%s1 + $0x30] sm:$0xf]
  %v227 = vld [vmem:[%s1 + $0x34] sm:$0xf]
  %v228 = vld [vmem:[%s1 + $0x38] sm:$0xf]
  %v229 = vld [vmem:[%s1 + $0x3c] sm:$0xf]
  %v230 = vld [vmem:[%s2] sm:$0x1]
  %v232 = vlaneseq
  %v233 = vshrl.u32 %v232, 7
  %v234 = vsub.s32 0, %v233
  %v235 = vrot.slane %v230, %v234
  %v433 = vunpack.c.l.b16 %v18
  %v434 = vunpack.c.l.b16 %v19
  %v435 = vunpack.c.l.b16 %v20
  %v436 = vunpack.c.l.b16 %v21
  %v437 = vunpack.c.l.b16 %v22
  %v438 = vunpack.c.l.b16 %v23
  %v439 = vunpack.c.l.b16 %v24
  %v440 = vunpack.c.l.b16 %v25
  %v441 = vunpack.c.l.b16 %v26
  %v442 = vunpack.c.l.b16 %v27
  %v443 = vunpack.c.l.b16 %v28
  %v444 = vunpack.c.l.b16 %v29
  %v445 = vunpack.c.l.b16 %v30
  %v446 = vunpack.c.l.b16 %v31
  %v447 = vunpack.c.l.b16 %v32
  %v448 = vunpack.c.l.b16 %v33
  %v449 = vunpack.c.l.b16 %v34
  %v450 = vunpack.c.l.b16 %v35
  %v451 = vunpack.c.l.b16 %v36
  %v452 = vunpack.c.l.b16 %v37
  %v453 = vunpack.c.l.b16 %v38
  %v454 = vunpack.c.l.b16 %v39
  %v455 = vunpack.c.l.b16 %v40
  %v456 = vunpack.c.l.b16 %v41
  %v457 = vunpack.c.l.b16 %v42
  %v458 = vunpack.c.l.b16 %v43
  %v459 = vunpack.c.l.b16 %v44
  %v460 = vunpack.c.l.b16 %v45
  %v461 = vunpack.c.l.b16 %v46
  %v462 = vunpack.c.l.b16 %v47
  %v463 = vunpack.c.l.b16 %v48
  %v464 = vunpack.c.l.b16 %v49
  %v465 = vunpack.c.l.b16 %v50
  %v466 = vunpack.c.l.b16 %v51
  %v467 = vunpack.c.l.b16 %v52
  %v468 = vunpack.c.l.b16 %v53
  %v469 = vunpack.c.l.b16 %v54
  %v470 = vunpack.c.l.b16 %v55
  %v471 = vunpack.c.l.b16 %v56
  %v472 = vunpack.c.l.b16 %v57
  %v473 = vunpack.c.l.b16 %v58
  %v474 = vunpack.c.l.b16 %v59
  %v475 = vunpack.c.l.b16 %v60
  %v476 = vunpack.c.l.b16 %v61
  %v477 = vunpack.c.l.b16 %v62
  %v478 = vunpack.c.l.b16 %v63
  %v479 = vunpack.c.l.b16 %v64
  %v480 = vunpack.c.l.b16 %v65
  %v481 = vunpack.c.l.b16 %v66
  %v482 = vunpack.c.l.b16 %v67
  %v483 = vunpack.c.l.b16 %v68
  %v484 = vunpack.c.l.b16 %v69
  %v485 = vunpack.c.l.b16 %v70
  %v486 = vunpack.c.l.b16 %v71
  %v487 = vunpack.c.l.b16 %v72
  %v488 = vunpack.c.l.b16 %v73
  %v489 = vunpack.c.l.b16 %v74
  %v490 = vunpack.c.l.b16 %v75
  %v491 = vunpack.c.l.b16 %v76
  %v492 = vunpack.c.l.b16 %v77
  %v493 = vunpack.c.l.b16 %v78
  %v494 = vunpack.c.l.b16 %v79
  %v495 = vunpack.c.l.b16 %v80
  %v496 = vunpack.c.l.b16 %v81
  %v497 = vunpack.c.l.b16 %v82
  %v498 = vunpack.c.l.b16 %v83
  %v499 = vunpack.c.l.b16 %v84
  %v500 = vunpack.c.l.b16 %v85
  %v501 = vunpack.c.l.b16 %v86
  %v502 = vunpack.c.l.b16 %v87
  %v503 = vunpack.c.l.b16 %v88
  %v504 = vunpack.c.l.b16 %v89
  %v505 = vunpack.c.l.b16 %v90
  %v506 = vunpack.c.l.b16 %v91
  %v507 = vunpack.c.l.b16 %v92
  %v508 = vunpack.c.l.b16 %v93
  %v509 = vunpack.c.l.b16 %v94
  %v510 = vunpack.c.l.b16 %v95
  %v511 = vunpack.c.l.b16 %v96
  %v512 = vunpack.c.l.b16 %v97
  %v513 = vunpack.c.l.b16 %v98
  %v514 = vunpack.c.l.b16 %v99
  %v515 = vunpack.c.l.b16 %v100
  %v516 = vunpack.c.l.b16 %v101
  %v517 = vunpack.c.l.b16 %v102
  %v518 = vunpack.c.l.b16 %v103
  %v519 = vunpack.c.l.b16 %v104
  %v520 = vunpack.c.l.b16 %v105
  %v521 = vunpack.c.l.b16 %v106
  %v522 = vunpack.c.l.b16 %v107
  %v523 = vunpack.c.l.b16 %v108
  %v524 = vunpack.c.l.b16 %v109
  %v525 = vunpack.c.l.b16 %v110
  %v526 = vunpack.c.l.b16 %v111
  %v527 = vunpack.c.l.b16 %v112
  %v528 = vunpack.c.l.b16 %v113
  %v529 = vunpack.c.l.b16 %v114
  %v530 = vunpack.c.l.b16 %v115
  %v531 = vunpack.c.l.b16 %v116
  %v532 = vunpack.c.l.b16 %v117
  %v533 = vunpack.c.l.b16 %v118
  %v534 = vunpack.c.l.b16 %v119
  %v535 = vunpack.c.l.b16 %v120
  %v536 = vunpack.c.l.b16 %v121
  %v537 = vunpack.c.l.b16 %v122
  %v538 = vunpack.c.l.b16 %v123
  %v539 = vunpack.c.l.b16 %v124
  %v540 = vunpack.c.l.b16 %v125
  %v541 = vunpack.c.l.b16 %v126
  %v542 = vunpack.c.l.b16 %v127
  %v543 = vunpack.c.l.b16 %v128
  %v544 = vunpack.c.l.b16 %v129
  %v545 = vunpack.c.l.b16 %v130
  %v546 = vunpack.c.l.b16 %v131
  %v547 = vunpack.c.l.b16 %v132
  %v548 = vunpack.c.l.b16 %v133
  %v549 = vunpack.c.l.b16 %v134
  %v550 = vunpack.c.l.b16 %v135
  %v551 = vunpack.c.l.b16 %v136
  %v552 = vunpack.c.l.b16 %v137
  %v553 = vunpack.c.l.b16 %v138
  %v554 = vunpack.c.l.b16 %v139
  %v555 = vunpack.c.l.b16 %v140
  %v556 = vunpack.c.l.b16 %v141
  %v557 = vunpack.c.l.b16 %v142
  %v558 = vunpack.c.l.b16 %v143
  %v559 = vunpack.c.l.b16 %v144
  %v560 = vunpack.c.l.b16 %v145
  %v561 = vunpack.c.l.b16 %v146
  %v562 = vunpack.c.l.b16 %v147
  %v563 = vunpack.c.l.b16 %v148
  %v564 = vunpack.c.l.b16 %v149
  %v565 = vunpack.c.l.b16 %v150
  %v566 = vunpack.c.l.b16 %v151
  %v567 = vunpack.c.l.b16 %v152
  %v568 = vunpack.c.l.b16 %v153
  %v569 = vunpack.c.l.b16 %v154
  %v570 = vunpack.c.l.b16 %v155
  %v571 = vunpack.c.l.b16 %v156
  %v572 = vunpack.c.l.b16 %v157
  %v573 = vunpack.c.l.b16 %v158
  %v574 = vunpack.c.l.b16 %v159
  %v575 = vunpack.c.l.b16 %v160
  %v576 = vunpack.c.l.b16 %v161
  %v577 = vunpack.c.l.b16 %v162
  %v578 = vunpack.c.l.b16 %v163
  %v579 = vunpack.c.l.b16 %v164
  %v580 = vunpack.c.l.b16 %v165
  %v581 = vunpack.c.l.b16 %v166
  %v582 = vunpack.c.l.b16 %v167
  %v583 = vunpack.c.l.b16 %v168
  %v584 = vunpack.c.l.b16 %v169
  %v585 = vunpack.c.l.b16 %v170
  %v586 = vunpack.c.l.b16 %v171
  %v587 = vunpack.c.l.b16 %v172
  %v588 = vunpack.c.l.b16 %v173
  %v589 = vunpack.c.l.b16 %v174
  %v590 = vunpack.c.l.b16 %v175
  %v591 = vunpack.c.l.b16 %v176
  %v592 = vunpack.c.l.b16 %v177
  %v593 = vunpack.c.l.b16 %v178
  %v594 = vunpack.c.l.b16 %v179
  %v595 = vunpack.c.l.b16 %v180
  %v596 = vunpack.c.l.b16 %v181
  %v597 = vunpack.c.l.b16 %v182
  %v598 = vunpack.c.l.b16 %v183
  %v599 = vunpack.c.l.b16 %v184
  %v600 = vunpack.c.l.b16 %v185
  %v601 = vunpack.c.l.b16 %v186
  %v602 = vunpack.c.l.b16 %v187
  %v603 = vunpack.c.l.b16 %v188
  %v604 = vunpack.c.l.b16 %v189
  %v605 = vunpack.c.l.b16 %v190
  %v606 = vunpack.c.l.b16 %v191
  %v607 = vunpack.c.l.b16 %v192
  %v608 = vunpack.c.l.b16 %v193
  %v609 = vunpack.c.l.b16 %v194
  %v610 = vunpack.c.l.b16 %v195
  %v611 = vunpack.c.l.b16 %v196
  %v612 = vunpack.c.l.b16 %v197
  %v613 = vunpack.c.l.b16 %v198
  %v614 = vunpack.c.l.b16 %v199
  %v615 = vunpack.c.l.b16 %v200
  %v616 = vunpack.c.l.b16 %v201
  %v617 = vunpack.c.l.b16 %v202
  %v618 = vunpack.c.l.b16 %v203
  %v619 = vunpack.c.l.b16 %v204
  %v620 = vunpack.c.l.b16 %v205
  %v621 = vunpack.c.l.b16 %v206
  %v622 = vunpack.c.l.b16 %v207
  %v623 = vunpack.c.l.b16 %v208
  %v624 = vunpack.c.l.b16 %v209
  %v625 = vunpack.c.l.b16 %v210
  %v626 = vunpack.c.l.b16 %v211
  %v627 = vunpack.c.l.b16 %v212
  %v628 = vunpack.c.l.b16 %v213
  %v629 = vpack.c.b16 %v434, %v433
  %v630 = vpack.c.b16 %v436, %v435
  %v631 = vpack.c.b16 %v438, %v437
  %v632 = vpack.c.b16 %v440, %v439
  %v633 = vpack.c.b16 %v442, %v441
  %v634 = vpack.c.b16 %v444, %v443
  %v635 = vpack.c.b16 %v446, %v445
  %v636 = vpack.c.b16 %v448, %v447
  %v637 = vpack.c.b16 %v450, %v449
  %v638 = vpack.c.b16 %v452, %v451
  %v639 = vpack.c.b16 %v454, %v453
  %v640 = vpack.c.b16 %v456, %v455
  %v641 = vpack.c.b16 %v458, %v457
  %v642 = vpack.c.b16 %v460, %v459
  %v643 = vpack.c.b16 %v462, %v461
  %v644 = vpack.c.b16 %v464, %v463
  %v645 = vpack.c.b16 %v466, %v465
  %v646 = vpack.c.b16 %v468, %v467
  %v647 = vpack.c.b16 %v470, %v469
  %v648 = vpack.c.b16 %v472, %v471
  %v649 = vpack.c.b16 %v474, %v473
  %v650 = vpack.c.b16 %v476, %v475
  %v651 = vpack.c.b16 %v478, %v477
  %v652 = vpack.c.b16 %v480, %v479
  %v653 = vpack.c.b16 %v482, %v481
  %v654 = vpack.c.b16 %v484, %v483
  %v655 = vpack.c.b16 %v486, %v485
  %v656 = vpack.c.b16 %v488, %v487
  %v657 = vpack.c.b16 %v490, %v489
  %v658 = vpack.c.b16 %v492, %v491
  %v659 = vpack.c.b16 %v494, %v493
  %v660 = vpack.c.b16 %v496, %v495
  %v661 = vpack.c.b16 %v498, %v497
  %v662 = vpack.c.b16 %v500, %v499
  %v663 = vpack.c.b16 %v502, %v501
  %v664 = vpack.c.b16 %v504, %v503
  %v665 = vpack.c.b16 %v506, %v505
  %v666 = vpack.c.b16 %v508, %v507
  %v667 = vpack.c.b16 %v510, %v509
  %v668 = vpack.c.b16 %v512, %v511
  %v669 = vpack.c.b16 %v514, %v513
  %v670 = vpack.c.b16 %v516, %v515
  %v671 = vpack.c.b16 %v518, %v517
  %v672 = vpack.c.b16 %v520, %v519
  %v673 = vpack.c.b16 %v522, %v521
  %v674 = vpack.c.b16 %v524, %v523
  %v675 = vpack.c.b16 %v526, %v525
  %v676 = vpack.c.b16 %v528, %v527
  %v677 = vpack.c.b16 %v530, %v529
  %v678 = vpack.c.b16 %v532, %v531
  %v679 = vpack.c.b16 %v534, %v533
  %v680 = vpack.c.b16 %v536, %v535
  %v681 = vpack.c.b16 %v538, %v537
  %v682 = vpack.c.b16 %v540, %v539
  %v683 = vpack.c.b16 %v542, %v541
  %v684 = vpack.c.b16 %v544, %v543
  %v685 = vpack.c.b16 %v546, %v545
  %v686 = vpack.c.b16 %v548, %v547
  %v687 = vpack.c.b16 %v550, %v549
  %v688 = vpack.c.b16 %v552, %v551
  %v689 = vpack.c.b16 %v554, %v553
  %v690 = vpack.c.b16 %v556, %v555
  %v691 = vpack.c.b16 %v558, %v557
  %v692 = vpack.c.b16 %v560, %v559
  %v693 = vpack.c.b16 %v562, %v561
  %v694 = vpack.c.b16 %v564, %v563
  %v695 = vpack.c.b16 %v566, %v565
  %v696 = vpack.c.b16 %v568, %v567
  %v697 = vpack.c.b16 %v570, %v569
  %v698 = vpack.c.b16 %v572, %v571
  %v699 = vpack.c.b16 %v574, %v573
  %v700 = vpack.c.b16 %v576, %v575
  %v701 = vpack.c.b16 %v578, %v577
  %v702 = vpack.c.b16 %v580, %v579
  %v703 = vpack.c.b16 %v582, %v581
  %v704 = vpack.c.b16 %v584, %v583
  %v705 = vpack.c.b16 %v586, %v585
  %v706 = vpack.c.b16 %v588, %v587
  %v707 = vpack.c.b16 %v590, %v589
  %v708 = vpack.c.b16 %v592, %v591
  %v709 = vpack.c.b16 %v594, %v593
  %v710 = vpack.c.b16 %v596, %v595
  %v711 = vpack.c.b16 %v598, %v597
  %v712 = vpack.c.b16 %v600, %v599
  %v713 = vpack.c.b16 %v602, %v601
  %v714 = vpack.c.b16 %v604, %v603
  %v715 = vpack.c.b16 %v606, %v605
  %v716 = vpack.c.b16 %v608, %v607
  %v717 = vpack.c.b16 %v610, %v609
  %v718 = vpack.c.b16 %v612, %v611
  %v719 = vpack.c.b16 %v614, %v613
  %v720 = vpack.c.b16 %v616, %v615
  %v721 = vpack.c.b16 %v618, %v617
  %v722 = vpack.c.b16 %v620, %v619
  %v723 = vpack.c.b16 %v622, %v621
  %v724 = vpack.c.b16 %v624, %v623
  %v725 = vpack.c.b16 %v626, %v625
  %v726 = vpack.c.b16 %v628, %v627
  %v841 = vunpack.c.l.b16 %v214
  %v842 = vunpack.c.l.b16 %v215
  %v843 = vunpack.c.l.b16 %v216
  %v844 = vunpack.c.l.b16 %v217
  %v845 = vunpack.c.l.b16 %v218
  %v846 = vunpack.c.l.b16 %v219
  %v847 = vunpack.c.l.b16 %v220
  %v848 = vunpack.c.l.b16 %v221
  %v849 = vunpack.c.l.b16 %v222
  %v850 = vunpack.c.l.b16 %v223
  %v851 = vunpack.c.l.b16 %v224
  %v852 = vunpack.c.l.b16 %v225
  %v853 = vunpack.c.l.b16 %v226
  %v854 = vunpack.c.l.b16 %v227
  %v855 = vunpack.c.l.b16 %v228
  %v856 = vunpack.c.l.b16 %v229
  %v857 = vpack.c.b16 %v842, %v841
  %v858 = vpack.c.b16 %v844, %v843
  %v859 = vpack.c.b16 %v846, %v845
  %v860 = vpack.c.b16 %v848, %v847
  %v861 = vpack.c.b16 %v850, %v849
  %v862 = vpack.c.b16 %v852, %v851
  %v863 = vpack.c.b16 %v854, %v853
  %v864 = vpack.c.b16 %v856, %v855
  %873 = vmatprep.subr.bf16.mxu0 0
  %874 = vmatpush1.bf16.msra.mxu0 %v857
  %875 = vmatprep.subr.bf16.mxu0 0
  %876 = vmatpush1.bf16.msra.mxu0 %v858
  %877 = vmatprep.subr.bf16.mxu0 0
  %878 = vmatpush1.bf16.msra.mxu0 %v859
  %879 = vmatprep.subr.bf16.mxu0 0
  %880 = vmatpush1.bf16.msra.mxu0 %v860
  %881 = vmatprep.subr.bf16.mxu0 0
  %882 = vmatpush1.bf16.msra.mxu0 %v861
  %883 = vmatprep.subr.bf16.mxu0 0
  %884 = vmatpush1.bf16.msra.mxu0 %v862
  %885 = vmatprep.subr.bf16.mxu0 0
  %886 = vmatpush1.bf16.msra.mxu0 %v863
  %887 = vmatprep.subr.bf16.mxu0 0
  %888 = vmatpush1.bf16.msra.mxu0 %v864
  %889 = vmatprep.subr.bf16.mxu0 0
  %890 = vmatpush1.bf16.msra.mxu0 0
  %891 = vmatprep.subr.bf16.mxu0 0
  %892 = vmatpush1.bf16.msra.mxu0 0
  %893 = vmatprep.subr.bf16.mxu0 0
  %894 = vmatpush1.bf16.msra.mxu0 0
  %895 = vmatprep.subr.bf16.mxu0 0
  %896 = vmatpush1.bf16.msra.mxu0 0
  %897 = vmatprep.subr.bf16.mxu0 0
  %898 = vmatpush1.bf16.msra.mxu0 0
  %899 = vmatprep.subr.bf16.mxu0 0
  %900 = vmatpush1.bf16.msra.mxu0 0
  %901 = vmatprep.subr.bf16.mxu0 0
  %902 = vmatpush1.bf16.msra.mxu0 0
  %903 = vmatprep.subr.bf16.mxu0 0
  %904 = vmatpush1.bf16.msra.mxu0 0
  %905 = vmatprep.mubr.bf16.mxu0 0
  %906 = vmatmul.mubr.bf16.gmra.mrb[0].mxu0 %v629
  %v907 = vpop.f32.mrb[0].mxu0
  %v908 = vadd.f32 %v235, %v907
  %v909 = vpop.f32.mrb[0].mxu0
  %v910 = vpop.f32.mrb[0].mxu0
  %v911 = vadd.f32 %v235, %v910
  %v912 = vpop.f32.mrb[0].mxu0
  %913 = vmatprep.mubr.bf16.mxu0 0
  %914 = vmatmul.mubr.bf16.gmra.mrb[0].mxu0 %v630
  %v915 = vpop.f32.mrb[0].mxu0
  %v916 = vadd.f32 %v235, %v915
  %v917 = vpop.f32.mrb[0].mxu0
  %v918 = vpop.f32.mrb[0].mxu0
  %v919 = vadd.f32 %v235, %v918
  %v920 = vpop.f32.mrb[0].mxu0
  %921 = vmatprep.mubr.bf16.mxu0 0
  %922 = vmatmul.mubr.bf16.gmra.mrb[0].mxu0 %v631
  %v923 = vpop.f32.mrb[0].mxu0
  %v924 = vadd.f32 %v235, %v923
  %v925 = vpop.f32.mrb[0].mxu0
  %v926 = vpop.f32.mrb[0].mxu0
  %v927 = vadd.f32 %v235, %v926
  %v928 = vpop.f32.mrb[0].mxu0
  %929 = vmatprep.mubr.bf16.mxu0 0
  %930 = vmatmul.mubr.bf16.gmra.mrb[0].mxu0 %v632
  %v931 = vpop.f32.mrb[0].mxu0
  %v932 = vadd.f32 %v235, %v931
  %v933 = vpop.f32.mrb[0].mxu0
  %v934 = vpop.f32.mrb[0].mxu0
  %v935 = vadd.f32 %v235, %v934
  %v936 = vpop.f32.mrb[0].mxu0
  %937 = vmatprep.mubr.bf16.mxu0 0
  %938 = vmatmul.mubr.bf16.gmra.mrb[0].mxu0 %v633
  %v939 = vpop.f32.mrb[0].mxu0
  %v940 = vadd.f32 %v235, %v939
  %v941 = vpop.f32.mrb[0].mxu0
  %v942 = vpop.f32.mrb[0].mxu0
  %v943 = vadd.f32 %v235, %v942
  %v944 = vpop.f32.mrb[0].mxu0
  %945 = vmatprep.mubr.bf16.mxu0 0
  %946 = vmatmul.mubr.bf16.gmra.mrb[0].mxu0 %v634
  %v947 = vpop.f32.mrb[0].mxu0
  %v948 = vadd.f32 %v235, %v947
  %v949 = vpop.f32.mrb[0].mxu0
  %v950 = vpop.f32.mrb[0].mxu0
  %v951 = vadd.f32 %v235, %v950
  %v952 = vpop.f32.mrb[0].mxu0
  %953 = vmatprep.mubr.bf16.mxu0 0
  %954 = vmatmul.mubr.bf16.gmra.mrb[0].mxu0 %v635
  %v955 = vpop.f32.mrb[0].mxu0
  %v956 = vadd.f32 %v235, %v955
  %v957 = vpop.f32.mrb[0].mxu0
  %v958 = vpop.f32.mrb[0].mxu0
  %v959 = vadd.f32 %v235, %v958
  %v960 = vpop.f32.mrb[0].mxu0
  %961 = vmatprep.mubr.bf16.mxu0 0
  %962 = vmatmul.mubr.bf16.gmra.mrb[0].mxu0 %v636
  %v963 = vpop.f32.mrb[0].mxu0
  %v964 = vadd.f32 %v235, %v963
  %v965 = vpop.f32.mrb[0].mxu0
  %v966 = vpop.f32.mrb[0].mxu0
  %v967 = vadd.f32 %v235, %v966
  %v968 = vpop.f32.mrb[0].mxu0
  %969 = vmatprep.mubr.bf16.mxu0 0
  %970 = vmatmul.mubr.bf16.gmra.mrb[0].mxu0 %v637
  %v971 = vpop.f32.mrb[0].mxu0
  %v972 = vadd.f32 %v235, %v971
  %v973 = vpop.f32.mrb[0].mxu0
  %v974 = vpop.f32.mrb[0].mxu0
  %v975 = vadd.f32 %v235, %v974
  %v976 = vpop.f32.mrb[0].mxu0
  %977 = vmatprep.mubr.bf16.mxu0 0
  %978 = vmatmul.mubr.bf16.gmra.mrb[0].mxu0 %v638
  %v979 = vpop.f32.mrb[0].mxu0
  %v980 = vadd.f32 %v235, %v979
  %v981 = vpop.f32.mrb[0].mxu0
  %v982 = vpop.f32.mrb[0].mxu0
  %v983 = vadd.f32 %v235, %v982
  %v984 = vpop.f32.mrb[0].mxu0
  %985 = vmatprep.mubr.bf16.mxu0 0
  %986 = vmatmul.mubr.bf16.gmra.mrb[0].mxu0 %v639
  %v987 = vpop.f32.mrb[0].mxu0
  %v988 = vadd.f32 %v235, %v987
  %v989 = vpop.f32.mrb[0].mxu0
  %v990 = vpop.f32.mrb[0].mxu0
  %v991 = vadd.f32 %v235, %v990
  %v992 = vpop.f32.mrb[0].mxu0
  %993 = vmatprep.mubr.bf16.mxu0 0
  %994 = vmatmul.mubr.bf16.gmra.mrb[0].mxu0 %v640
  %v995 = vpop.f32.mrb[0].mxu0
  %v996 = vadd.f32 %v235, %v995
  %v997 = vpop.f32.mrb[0].mxu0
  %v998 = vpop.f32.mrb[0].mxu0
  %v999 = vadd.f32 %v235, %v998
  %v1000 = vpop.f32.mrb[0].mxu0
  %1001 = vmatprep.mubr.bf16.mxu0 0
  %1002 = vmatmul.mubr.bf16.gmra.mrb[0].mxu0 %v641
  %v1003 = vpop.f32.mrb[0].mxu0
  %v1004 = vadd.f32 %v235, %v1003
  %v1005 = vpop.f32.mrb[0].mxu0
  %v1006 = vpop.f32.mrb[0].mxu0
  %v1007 = vadd.f32 %v235, %v1006
  %v1008 = vpop.f32.mrb[0].mxu0
  %1009 = vmatprep.mubr.bf16.mxu0 0
  %1010 = vmatmul.mubr.bf16.gmra.mrb[0].mxu0 %v642
  %v1011 = vpop.f32.mrb[0].mxu0
  %v1012 = vadd.f32 %v235, %v1011
  %v1013 = vpop.f32.mrb[0].mxu0
  %v1014 = vpop.f32.mrb[0].mxu0
  %v1015 = vadd.f32 %v235, %v1014
  %v1016 = vpop.f32.mrb[0].mxu0
  %1017 = vmatprep.mubr.bf16.mxu0 0
  %1018 = vmatmul.mubr.bf16.gmra.mrb[0].mxu0 %v643
  %v1019 = vpop.f32.mrb[0].mxu0
  %v1020 = vadd.f32 %v235, %v1019
  %v1021 = vpop.f32.mrb[0].mxu0
  %v1022 = vpop.f32.mrb[0].mxu0
  %v1023 = vadd.f32 %v235, %v1022
  %v1024 = vpop.f32.mrb[0].mxu0
  %1025 = vmatprep.mubr.bf16.mxu0 0
  %1026 = vmatmul.mubr.bf16.gmra.mrb[0].mxu0 %v644
  %v1027 = vpop.f32.mrb[0].mxu0
  %v1028 = vadd.f32 %v235, %v1027
  %v1029 = vpop.f32.mrb[0].mxu0
  %v1030 = vpop.f32.mrb[0].mxu0
  %v1031 = vadd.f32 %v235, %v1030
  %v1032 = vpop.f32.mrb[0].mxu0
  %1033 = vmatprep.mubr.bf16.mxu0 0
  %1034 = vmatmul.mubr.bf16.gmra.mrb[0].mxu0 %v645
  %v1035 = vpop.f32.mrb[0].mxu0
  %v1036 = vadd.f32 %v235, %v1035
  %v1037 = vpop.f32.mrb[0].mxu0
  %v1038 = vpop.f32.mrb[0].mxu0
  %v1039 = vadd.f32 %v235, %v1038
  %v1040 = vpop.f32.mrb[0].mxu0
  %1041 = vmatprep.mubr.bf16.mxu0 0
  %1042 = vmatmul.mubr.bf16.gmra.mrb[0].mxu0 %v646
  %v1043 = vpop.f32.mrb[0].mxu0
  %v1044 = vadd.f32 %v235, %v1043
  %v1045 = vpop.f32.mrb[0].mxu0
  %v1046 = vpop.f32.mrb[0].mxu0
  %v1047 = vadd.f32 %v235, %v1046
  %v1048 = vpop.f32.mrb[0].mxu0
  %1049 = vmatprep.mubr.bf16.mxu0 0
  %1050 = vmatmul.mubr.bf16.gmra.mrb[0].mxu0 %v647
  %v1051 = vpop.f32.mrb[0].mxu0
  %v1052 = vadd.f32 %v235, %v1051
  %v1053 = vpop.f32.mrb[0].mxu0
  %v1054 = vpop.f32.mrb[0].mxu0
  %v1055 = vadd.f32 %v235, %v1054
  %v1056 = vpop.f32.mrb[0].mxu0
  %1057 = vmatprep.mubr.bf16.mxu0 0
  %1058 = vmatmul.mubr.bf16.gmra.mrb[0].mxu0 %v648
  %v1059 = vpop.f32.mrb[0].mxu0
  %v1060 = vadd.f32 %v235, %v1059
  %v1061 = vpop.f32.mrb[0].mxu0
  %v1062 = vpop.f32.mrb[0].mxu0
  %v1063 = vadd.f32 %v235, %v1062
  %v1064 = vpop.f32.mrb[0].mxu0
  %1065 = vmatprep.mubr.bf16.mxu0 0
  %1066 = vmatmul.mubr.bf16.gmra.mrb[0].mxu0 %v649
  %v1067 = vpop.f32.mrb[0].mxu0
  %v1068 = vadd.f32 %v235, %v1067
  %v1069 = vpop.f32.mrb[0].mxu0
  %v1070 = vpop.f32.mrb[0].mxu0
  %v1071 = vadd.f32 %v235, %v1070
  %v1072 = vpop.f32.mrb[0].mxu0
  %1073 = vmatprep.mubr.bf16.mxu0 0
  %1074 = vmatmul.mubr.bf16.gmra.mrb[0].mxu0 %v650
  %v1075 = vpop.f32.mrb[0].mxu0
  %v1076 = vadd.f32 %v235, %v1075
  %v1077 = vpop.f32.mrb[0].mxu0
  %v1078 = vpop.f32.mrb[0].mxu0
  %v1079 = vadd.f32 %v235, %v1078
  %v1080 = vpop.f32.mrb[0].mxu0
  %1081 = vmatprep.mubr.bf16.mxu0 0
  %1082 = vmatmul.mubr.bf16.gmra.mrb[0].mxu0 %v651
  %v1083 = vpop.f32.mrb[0].mxu0
  %v1084 = vadd.f32 %v235, %v1083
  %v1085 = vpop.f32.mrb[0].mxu0
  %v1086 = vpop.f32.mrb[0].mxu0
  %v1087 = vadd.f32 %v235, %v1086
  %v1088 = vpop.f32.mrb[0].mxu0
  %1089 = vmatprep.mubr.bf16.mxu0 0
  %1090 = vmatmul.mubr.bf16.gmra.mrb[0].mxu0 %v652
  %v1091 = vpop.f32.mrb[0].mxu0
  %v1092 = vadd.f32 %v235, %v1091
  %v1093 = vpop.f32.mrb[0].mxu0
  %v1094 = vpop.f32.mrb[0].mxu0
  %v1095 = vadd.f32 %v235, %v1094
  %v1096 = vpop.f32.mrb[0].mxu0
  %1097 = vmatprep.mubr.bf16.mxu0 0
  %1098 = vmatmul.mubr.bf16.gmra.mrb[0].mxu0 %v653
  %v1099 = vpop.f32.mrb[0].mxu0
  %v1100 = vadd.f32 %v235, %v1099
  %v1101 = vpop.f32.mrb[0].mxu0
  %v1102 = vpop.f32.mrb[0].mxu0
  %v1103 = vadd.f32 %v235, %v1102
  %v1104 = vpop.f32.mrb[0].mxu0
  %1105 = vmatprep.mubr.bf16.mxu0 0
  %1106 = vmatmul.mubr.bf16.gmra.mrb[0].mxu0 %v654
  %v1107 = vpop.f32.mrb[0].mxu0
  %v1108 = vadd.f32 %v235, %v1107
  %v1109 = vpop.f32.mrb[0].mxu0
  %v1110 = vpop.f32.mrb[0].mxu0
  %v1111 = vadd.f32 %v235, %v1110
  %v1112 = vpop.f32.mrb[0].mxu0
  %1113 = vmatprep.mubr.bf16.mxu0 0
  %1114 = vmatmul.mubr.bf16.gmra.mrb[0].mxu0 %v655
  %v1115 = vpop.f32.mrb[0].mxu0
  %v1116 = vadd.f32 %v235, %v1115
  %v1117 = vpop.f32.mrb[0].mxu0
  %v1118 = vpop.f32.mrb[0].mxu0
  %v1119 = vadd.f32 %v235, %v1118
  %v1120 = vpop.f32.mrb[0].mxu0
  %1121 = vmatprep.mubr.bf16.mxu0 0
  %1122 = vmatmul.mubr.bf16.gmra.mrb[0].mxu0 %v656
  %v1123 = vpop.f32.mrb[0].mxu0
  %v1124 = vadd.f32 %v235, %v1123
  %v1125 = vpop.f32.mrb[0].mxu0
  %v1126 = vpop.f32.mrb[0].mxu0
  %v1127 = vadd.f32 %v235, %v1126
  %v1128 = vpop.f32.mrb[0].mxu0
  %1129 = vmatprep.mubr.bf16.mxu0 0
  %1130 = vmatmul.mubr.bf16.gmra.mrb[0].mxu0 %v657
  %v1131 = vpop.f32.mrb[0].mxu0
  %v1132 = vadd.f32 %v235, %v1131
  %v1133 = vpop.f32.mrb[0].mxu0
  %v1134 = vpop.f32.mrb[0].mxu0
  %v1135 = vadd.f32 %v235, %v1134
  %v1136 = vpop.f32.mrb[0].mxu0
  %1137 = vmatprep.mubr.bf16.mxu0 0
  %1138 = vmatmul.mubr.bf16.gmra.mrb[0].mxu0 %v658
  %v1139 = vpop.f32.mrb[0].mxu0
  %v1140 = vadd.f32 %v235, %v1139
  %v1141 = vpop.f32.mrb[0].mxu0
  %v1142 = vpop.f32.mrb[0].mxu0
  %v1143 = vadd.f32 %v235, %v1142
  %v1144 = vpop.f32.mrb[0].mxu0
  %1145 = vmatprep.mubr.bf16.mxu0 0
  %1146 = vmatmul.mubr.bf16.gmra.mrb[0].mxu0 %v659
  %v1147 = vpop.f32.mrb[0].mxu0
  %v1148 = vadd.f32 %v235, %v1147
  %v1149 = vpop.f32.mrb[0].mxu0
  %v1150 = vpop.f32.mrb[0].mxu0
  %v1151 = vadd.f32 %v235, %v1150
  %v1152 = vpop.f32.mrb[0].mxu0
  %1153 = vmatprep.mubr.bf16.mxu0 0
  %1154 = vmatmul.mubr.bf16.gmra.mrb[0].mxu0 %v660
  %v1155 = vpop.f32.mrb[0].mxu0
  %v1156 = vadd.f32 %v235, %v1155
  %v1157 = vpop.f32.mrb[0].mxu0
  %v1158 = vpop.f32.mrb[0].mxu0
  %v1159 = vadd.f32 %v235, %v1158
  %v1160 = vpop.f32.mrb[0].mxu0
  %1161 = vmatprep.mubr.bf16.mxu0 0
  %1162 = vmatmul.mubr.bf16.gmra.mrb[0].mxu0 %v661
  %v1163 = vpop.f32.mrb[0].mxu0
  %v1164 = vadd.f32 %v235, %v1163
  %v1165 = vpop.f32.mrb[0].mxu0
  %v1166 = vpop.f32.mrb[0].mxu0
  %v1167 = vadd.f32 %v235, %v1166
  %v1168 = vpop.f32.mrb[0].mxu0
  %1169 = vmatprep.mubr.bf16.mxu0 0
  %1170 = vmatmul.mubr.bf16.gmra.mrb[0].mxu0 %v662
  %v1171 = vpop.f32.mrb[0].mxu0
  %v1172 = vadd.f32 %v235, %v1171
  %v1173 = vpop.f32.mrb[0].mxu0
  %v1174 = vpop.f32.mrb[0].mxu0
  %v1175 = vadd.f32 %v235, %v1174
  %v1176 = vpop.f32.mrb[0].mxu0
  %1177 = vmatprep.mubr.bf16.mxu0 0
  %1178 = vmatmul.mubr.bf16.gmra.mrb[0].mxu0 %v663
  %v1179 = vpop.f32.mrb[0].mxu0
  %v1180 = vadd.f32 %v235, %v1179
  %v1181 = vpop.f32.mrb[0].mxu0
  %v1182 = vpop.f32.mrb[0].mxu0
  %v1183 = vadd.f32 %v235, %v1182
  %v1184 = vpop.f32.mrb[0].mxu0
  %1185 = vmatprep.mubr.bf16.mxu0 0
  %1186 = vmatmul.mubr.bf16.gmra.mrb[0].mxu0 %v664
  %v1187 = vpop.f32.mrb[0].mxu0
  %v1188 = vadd.f32 %v235, %v1187
  %v1189 = vpop.f32.mrb[0].mxu0
  %v1190 = vpop.f32.mrb[0].mxu0
  %v1191 = vadd.f32 %v235, %v1190
  %v1192 = vpop.f32.mrb[0].mxu0
  %1193 = vmatprep.mubr.bf16.mxu0 0
  %1194 = vmatmul.mubr.bf16.gmra.mrb[0].mxu0 %v665
  %v1195 = vpop.f32.mrb[0].mxu0
  %v1196 = vadd.f32 %v235, %v1195
  %v1197 = vpop.f32.mrb[0].mxu0
  %v1198 = vpop.f32.mrb[0].mxu0
  %v1199 = vadd.f32 %v235, %v1198
  %v1200 = vpop.f32.mrb[0].mxu0
  %1201 = vmatprep.mubr.bf16.mxu0 0
  %1202 = vmatmul.mubr.bf16.gmra.mrb[0].mxu0 %v666
  %v1203 = vpop.f32.mrb[0].mxu0
  %v1204 = vadd.f32 %v235, %v1203
  %v1205 = vpop.f32.mrb[0].mxu0
  %v1206 = vpop.f32.mrb[0].mxu0
  %v1207 = vadd.f32 %v235, %v1206
  %v1208 = vpop.f32.mrb[0].mxu0
  %1209 = vmatprep.mubr.bf16.mxu0 0
  %1210 = vmatmul.mubr.bf16.gmra.mrb[0].mxu0 %v667
  %v1211 = vpop.f32.mrb[0].mxu0
  %v1212 = vadd.f32 %v235, %v1211
  %v1213 = vpop.f32.mrb[0].mxu0
  %v1214 = vpop.f32.mrb[0].mxu0
  %v1215 = vadd.f32 %v235, %v1214
  %v1216 = vpop.f32.mrb[0].mxu0
  %1217 = vmatprep.mubr.bf16.mxu0 0
  %1218 = vmatmul.mubr.bf16.gmra.mrb[0].mxu0 %v668
  %v1219 = vpop.f32.mrb[0].mxu0
  %v1220 = vadd.f32 %v235, %v1219
  %v1221 = vpop.f32.mrb[0].mxu0
  %v1222 = vpop.f32.mrb[0].mxu0
  %v1223 = vadd.f32 %v235, %v1222
  %v1224 = vpop.f32.mrb[0].mxu0
  %1225 = vmatprep.mubr.bf16.mxu0 0
  %1226 = vmatmul.mubr.bf16.gmra.mrb[0].mxu0 %v669
  %v1227 = vpop.f32.mrb[0].mxu0
  %v1228 = vadd.f32 %v235, %v1227
  %v1229 = vpop.f32.mrb[0].mxu0
  %v1230 = vpop.f32.mrb[0].mxu0
  %v1231 = vadd.f32 %v235, %v1230
  %v1232 = vpop.f32.mrb[0].mxu0
  %1233 = vmatprep.mubr.bf16.mxu0 0
  %1234 = vmatmul.mubr.bf16.gmra.mrb[0].mxu0 %v670
  %v1235 = vpop.f32.mrb[0].mxu0
  %v1236 = vadd.f32 %v235, %v1235
  %v1237 = vpop.f32.mrb[0].mxu0
  %v1238 = vpop.f32.mrb[0].mxu0
  %v1239 = vadd.f32 %v235, %v1238
  %v1240 = vpop.f32.mrb[0].mxu0
  %1241 = vmatprep.mubr.bf16.mxu0 0
  %1242 = vmatmul.mubr.bf16.gmra.mrb[0].mxu0 %v671
  %v1243 = vpop.f32.mrb[0].mxu0
  %v1244 = vadd.f32 %v235, %v1243
  %v1245 = vpop.f32.mrb[0].mxu0
  %v1246 = vpop.f32.mrb[0].mxu0
  %v1247 = vadd.f32 %v235, %v1246
  %v1248 = vpop.f32.mrb[0].mxu0
  %1249 = vmatprep.mubr.bf16.mxu0 0
  %1250 = vmatmul.mubr.bf16.gmra.mrb[0].mxu0 %v672
  %v1251 = vpop.f32.mrb[0].mxu0
  %v1252 = vadd.f32 %v235, %v1251
  %v1253 = vpop.f32.mrb[0].mxu0
  %v1254 = vpop.f32.mrb[0].mxu0
  %v1255 = vadd.f32 %v235, %v1254
  %v1256 = vpop.f32.mrb[0].mxu0
  %1257 = vmatprep.mubr.bf16.mxu0 0
  %1258 = vmatmul.mubr.bf16.gmra.mrb[0].mxu0 %v673
  %v1259 = vpop.f32.mrb[0].mxu0
  %v1260 = vadd.f32 %v235, %v1259
  %v1261 = vpop.f32.mrb[0].mxu0
  %v1262 = vpop.f32.mrb[0].mxu0
  %v1263 = vadd.f32 %v235, %v1262
  %v1264 = vpop.f32.mrb[0].mxu0
  %1265 = vmatprep.mubr.bf16.mxu0 0
  %1266 = vmatmul.mubr.bf16.gmra.mrb[0].mxu0 %v674
  %v1267 = vpop.f32.mrb[0].mxu0
  %v1268 = vadd.f32 %v235, %v1267
  %v1269 = vpop.f32.mrb[0].mxu0
  %v1270 = vpop.f32.mrb[0].mxu0
  %v1271 = vadd.f32 %v235, %v1270
  %v1272 = vpop.f32.mrb[0].mxu0
  %1273 = vmatprep.mubr.bf16.mxu0 0
  %1274 = vmatmul.mubr.bf16.gmra.mrb[0].mxu0 %v675
  %v1275 = vpop.f32.mrb[0].mxu0
  %v1276 = vadd.f32 %v235, %v1275
  %v1277 = vpop.f32.mrb[0].mxu0
  %v1278 = vpop.f32.mrb[0].mxu0
  %v1279 = vadd.f32 %v235, %v1278
  %v1280 = vpop.f32.mrb[0].mxu0
  %1281 = vmatprep.mubr.bf16.mxu0 0
  %1282 = vmatmul.mubr.bf16.gmra.mrb[0].mxu0 %v676
  %v1283 = vpop.f32.mrb[0].mxu0
  %v1284 = vadd.f32 %v235, %v1283
  %v1285 = vpop.f32.mrb[0].mxu0
  %v1286 = vpop.f32.mrb[0].mxu0
  %v1287 = vadd.f32 %v235, %v1286
  %v1288 = vpop.f32.mrb[0].mxu0
  %1289 = vmatprep.mubr.bf16.mxu0 0
  %1290 = vmatmul.mubr.bf16.gmra.mrb[0].mxu0 %v677
  %v1291 = vpop.f32.mrb[0].mxu0
  %v1292 = vadd.f32 %v235, %v1291
  %v1293 = vpop.f32.mrb[0].mxu0
  %v1294 = vpop.f32.mrb[0].mxu0
  %v1295 = vadd.f32 %v235, %v1294
  %v1296 = vpop.f32.mrb[0].mxu0
  %1297 = vmatprep.mubr.bf16.mxu0 0
  %1298 = vmatmul.mubr.bf16.gmra.mrb[0].mxu0 %v678
  %v1299 = vpop.f32.mrb[0].mxu0
  %v1300 = vadd.f32 %v235, %v1299
  %v1301 = vpop.f32.mrb[0].mxu0
  %v1302 = vpop.f32.mrb[0].mxu0
  %v1303 = vadd.f32 %v235, %v1302
  %v1304 = vpop.f32.mrb[0].mxu0
  %1305 = vmatprep.mubr.bf16.mxu0 0
  %1306 = vmatmul.mubr.bf16.gmra.mrb[0].mxu0 %v679
  %v1307 = vpop.f32.mrb[0].mxu0
  %v1308 = vadd.f32 %v235, %v1307
  %v1309 = vpop.f32.mrb[0].mxu0
  %v1310 = vpop.f32.mrb[0].mxu0
  %v1311 = vadd.f32 %v235, %v1310
  %v1312 = vpop.f32.mrb[0].mxu0
  %1313 = vmatprep.mubr.bf16.mxu0 0
  %1314 = vmatmul.mubr.bf16.gmra.mrb[0].mxu0 %v680
  %v1315 = vpop.f32.mrb[0].mxu0
  %v1316 = vadd.f32 %v235, %v1315
  %v1317 = vpop.f32.mrb[0].mxu0
  %v1318 = vpop.f32.mrb[0].mxu0
  %v1319 = vadd.f32 %v235, %v1318
  %v1320 = vpop.f32.mrb[0].mxu0
  %1321 = vmatprep.mubr.bf16.mxu0 0
  %1322 = vmatmul.mubr.bf16.gmra.mrb[0].mxu0 %v681
  %v1323 = vpop.f32.mrb[0].mxu0
  %v1324 = vadd.f32 %v235, %v1323
  %v1325 = vpop.f32.mrb[0].mxu0
  %v1326 = vpop.f32.mrb[0].mxu0
  %v1327 = vadd.f32 %v235, %v1326
  %v1328 = vpop.f32.mrb[0].mxu0
  %1329 = vmatprep.mubr.bf16.mxu0 0
  %1330 = vmatmul.mubr.bf16.gmra.mrb[0].mxu0 %v682
  %v1331 = vpop.f32.mrb[0].mxu0
  %v1332 = vadd.f32 %v235, %v1331
  %v1333 = vpop.f32.mrb[0].mxu0
  %v1334 = vpop.f32.mrb[0].mxu0
  %v1335 = vadd.f32 %v235, %v1334
  %v1336 = vpop.f32.mrb[0].mxu0
  %1337 = vmatprep.mubr.bf16.mxu0 0
  %1338 = vmatmul.mubr.bf16.gmra.mrb[0].mxu0 %v683
  %v1339 = vpop.f32.mrb[0].mxu0
  %v1340 = vadd.f32 %v235, %v1339
  %v1341 = vpop.f32.mrb[0].mxu0
  %v1342 = vpop.f32.mrb[0].mxu0
  %v1343 = vadd.f32 %v235, %v1342
  %v1344 = vpop.f32.mrb[0].mxu0
  %1345 = vmatprep.mubr.bf16.mxu0 0
  %1346 = vmatmul.mubr.bf16.gmra.mrb[0].mxu0 %v684
  %v1347 = vpop.f32.mrb[0].mxu0
  %v1348 = vadd.f32 %v235, %v1347
  %v1349 = vpop.f32.mrb[0].mxu0
  %v1350 = vpop.f32.mrb[0].mxu0
  %v1351 = vadd.f32 %v235, %v1350
  %v1352 = vpop.f32.mrb[0].mxu0
  %1353 = vmatprep.mubr.bf16.mxu0 0
  %1354 = vmatmul.mubr.bf16.gmra.mrb[0].mxu0 %v685
  %v1355 = vpop.f32.mrb[0].mxu0
  %v1356 = vadd.f32 %v235, %v1355
  %v1357 = vpop.f32.mrb[0].mxu0
  %v1358 = vpop.f32.mrb[0].mxu0
  %v1359 = vadd.f32 %v235, %v1358
  %v1360 = vpop.f32.mrb[0].mxu0
  %1361 = vmatprep.mubr.bf16.mxu0 0
  %1362 = vmatmul.mubr.bf16.gmra.mrb[0].mxu0 %v686
  %v1363 = vpop.f32.mrb[0].mxu0
  %v1364 = vadd.f32 %v235, %v1363
  %v1365 = vpop.f32.mrb[0].mxu0
  %v1366 = vpop.f32.mrb[0].mxu0
  %v1367 = vadd.f32 %v235, %v1366
  %v1368 = vpop.f32.mrb[0].mxu0
  %1369 = vmatprep.mubr.bf16.mxu0 0
  %1370 = vmatmul.mubr.bf16.gmra.mrb[0].mxu0 %v687
  %v1371 = vpop.f32.mrb[0].mxu0
  %v1372 = vadd.f32 %v235, %v1371
  %v1373 = vpop.f32.mrb[0].mxu0
  %v1374 = vpop.f32.mrb[0].mxu0
  %v1375 = vadd.f32 %v235, %v1374
  %v1376 = vpop.f32.mrb[0].mxu0
  %1377 = vmatprep.mubr.bf16.mxu0 0
  %1378 = vmatmul.mubr.bf16.gmra.mrb[0].mxu0 %v688
  %v1379 = vpop.f32.mrb[0].mxu0
  %v1380 = vadd.f32 %v235, %v1379
  %v1381 = vpop.f32.mrb[0].mxu0
  %v1382 = vpop.f32.mrb[0].mxu0
  %v1383 = vadd.f32 %v235, %v1382
  %v1384 = vpop.f32.mrb[0].mxu0
  %1385 = vmatprep.mubr.bf16.mxu0 0
  %1386 = vmatmul.mubr.bf16.gmra.mrb[0].mxu0 %v689
  %v1387 = vpop.f32.mrb[0].mxu0
  %v1388 = vadd.f32 %v235, %v1387
  %v1389 = vpop.f32.mrb[0].mxu0
  %v1390 = vpop.f32.mrb[0].mxu0
  %v1391 = vadd.f32 %v235, %v1390
  %v1392 = vpop.f32.mrb[0].mxu0
  %1393 = vmatprep.mubr.bf16.mxu0 0
  %1394 = vmatmul.mubr.bf16.gmra.mrb[0].mxu0 %v690
  %v1395 = vpop.f32.mrb[0].mxu0
  %v1396 = vadd.f32 %v235, %v1395
  %v1397 = vpop.f32.mrb[0].mxu0
  %v1398 = vpop.f32.mrb[0].mxu0
  %v1399 = vadd.f32 %v235, %v1398
  %v1400 = vpop.f32.mrb[0].mxu0
  %1401 = vmatprep.mubr.bf16.mxu0 0
  %1402 = vmatmul.mubr.bf16.gmra.mrb[0].mxu0 %v691
  %v1403 = vpop.f32.mrb[0].mxu0
  %v1404 = vadd.f32 %v235, %v1403
  %v1405 = vpop.f32.mrb[0].mxu0
  %v1406 = vpop.f32.mrb[0].mxu0
  %v1407 = vadd.f32 %v235, %v1406
  %v1408 = vpop.f32.mrb[0].mxu0
  %1409 = vmatprep.mubr.bf16.mxu0 0
  %1410 = vmatmul.mubr.bf16.gmra.mrb[0].mxu0 %v692
  %v1411 = vpop.f32.mrb[0].mxu0
  %v1412 = vadd.f32 %v235, %v1411
  %v1413 = vpop.f32.mrb[0].mxu0
  %v1414 = vpop.f32.mrb[0].mxu0
  %v1415 = vadd.f32 %v235, %v1414
  %v1416 = vpop.f32.mrb[0].mxu0
  %1417 = vmatprep.mubr.bf16.mxu0 0
  %1418 = vmatmul.mubr.bf16.gmra.mrb[0].mxu0 %v693
  %v1419 = vpop.f32.mrb[0].mxu0
  %v1420 = vadd.f32 %v235, %v1419
  %v1421 = vpop.f32.mrb[0].mxu0
  %v1422 = vpop.f32.mrb[0].mxu0
  %v1423 = vadd.f32 %v235, %v1422
  %v1424 = vpop.f32.mrb[0].mxu0
  %1425 = vmatprep.mubr.bf16.mxu0 0
  %1426 = vmatmul.mubr.bf16.gmra.mrb[0].mxu0 %v694
  %v1427 = vpop.f32.mrb[0].mxu0
  %v1428 = vadd.f32 %v235, %v1427
  %v1429 = vpop.f32.mrb[0].mxu0
  %v1430 = vpop.f32.mrb[0].mxu0
  %v1431 = vadd.f32 %v235, %v1430
  %v1432 = vpop.f32.mrb[0].mxu0
  %1433 = vmatprep.mubr.bf16.mxu0 0
  %1434 = vmatmul.mubr.bf16.gmra.mrb[0].mxu0 %v695
  %v1435 = vpop.f32.mrb[0].mxu0
  %v1436 = vadd.f32 %v235, %v1435
  %v1437 = vpop.f32.mrb[0].mxu0
  %v1438 = vpop.f32.mrb[0].mxu0
  %v1439 = vadd.f32 %v235, %v1438
  %v1440 = vpop.f32.mrb[0].mxu0
  %1441 = vmatprep.mubr.bf16.mxu0 0
  %1442 = vmatmul.mubr.bf16.gmra.mrb[0].mxu0 %v696
  %v1443 = vpop.f32.mrb[0].mxu0
  %v1444 = vadd.f32 %v235, %v1443
  %v1445 = vpop.f32.mrb[0].mxu0
  %v1446 = vpop.f32.mrb[0].mxu0
  %v1447 = vadd.f32 %v235, %v1446
  %v1448 = vpop.f32.mrb[0].mxu0
  %1449 = vmatprep.mubr.bf16.mxu0 0
  %1450 = vmatmul.mubr.bf16.gmra.mrb[0].mxu0 %v697
  %v1451 = vpop.f32.mrb[0].mxu0
  %v1452 = vadd.f32 %v235, %v1451
  %v1453 = vpop.f32.mrb[0].mxu0
  %v1454 = vpop.f32.mrb[0].mxu0
  %v1455 = vadd.f32 %v235, %v1454
  %v1456 = vpop.f32.mrb[0].mxu0
  %1457 = vmatprep.mubr.bf16.mxu0 0
  %1458 = vmatmul.mubr.bf16.gmra.mrb[0].mxu0 %v698
  %v1459 = vpop.f32.mrb[0].mxu0
  %v1460 = vadd.f32 %v235, %v1459
  %v1461 = vpop.f32.mrb[0].mxu0
  %v1462 = vpop.f32.mrb[0].mxu0
  %v1463 = vadd.f32 %v235, %v1462
  %v1464 = vpop.f32.mrb[0].mxu0
  %1465 = vmatprep.mubr.bf16.mxu0 0
  %1466 = vmatmul.mubr.bf16.gmra.mrb[0].mxu0 %v699
  %v1467 = vpop.f32.mrb[0].mxu0
  %v1468 = vadd.f32 %v235, %v1467
  %v1469 = vpop.f32.mrb[0].mxu0
  %v1470 = vpop.f32.mrb[0].mxu0
  %v1471 = vadd.f32 %v235, %v1470
  %v1472 = vpop.f32.mrb[0].mxu0
  %1473 = vmatprep.mubr.bf16.mxu0 0
  %1474 = vmatmul.mubr.bf16.gmra.mrb[0].mxu0 %v700
  %v1475 = vpop.f32.mrb[0].mxu0
  %v1476 = vadd.f32 %v235, %v1475
  %v1477 = vpop.f32.mrb[0].mxu0
  %v1478 = vpop.f32.mrb[0].mxu0
  %v1479 = vadd.f32 %v235, %v1478
  %v1480 = vpop.f32.mrb[0].mxu0
  %1481 = vmatprep.mubr.bf16.mxu0 0
  %1482 = vmatmul.mubr.bf16.gmra.mrb[0].mxu0 %v701
  %v1483 = vpop.f32.mrb[0].mxu0
  %v1484 = vadd.f32 %v235, %v1483
  %v1485 = vpop.f32.mrb[0].mxu0
  %v1486 = vpop.f32.mrb[0].mxu0
  %v1487 = vadd.f32 %v235, %v1486
  %v1488 = vpop.f32.mrb[0].mxu0
  %1489 = vmatprep.mubr.bf16.mxu0 0
  %1490 = vmatmul.mubr.bf16.gmra.mrb[0].mxu0 %v702
  %v1491 = vpop.f32.mrb[0].mxu0
  %v1492 = vadd.f32 %v235, %v1491
  %v1493 = vpop.f32.mrb[0].mxu0
  %v1494 = vpop.f32.mrb[0].mxu0
  %v1495 = vadd.f32 %v235, %v1494
  %v1496 = vpop.f32.mrb[0].mxu0
  %1497 = vmatprep.mubr.bf16.mxu0 0
  %1498 = vmatmul.mubr.bf16.gmra.mrb[0].mxu0 %v703
  %v1499 = vpop.f32.mrb[0].mxu0
  %v1500 = vadd.f32 %v235, %v1499
  %v1501 = vpop.f32.mrb[0].mxu0
  %v1502 = vpop.f32.mrb[0].mxu0
  %v1503 = vadd.f32 %v235, %v1502
  %v1504 = vpop.f32.mrb[0].mxu0
  %1505 = vmatprep.mubr.bf16.mxu0 0
  %1506 = vmatmul.mubr.bf16.gmra.mrb[0].mxu0 %v704
  %v1507 = vpop.f32.mrb[0].mxu0
  %v1508 = vadd.f32 %v235, %v1507
  %v1509 = vpop.f32.mrb[0].mxu0
  %v1510 = vpop.f32.mrb[0].mxu0
  %v1511 = vadd.f32 %v235, %v1510
  %v1512 = vpop.f32.mrb[0].mxu0
  %1513 = vmatprep.mubr.bf16.mxu0 0
  %1514 = vmatmul.mubr.bf16.gmra.mrb[0].mxu0 %v705
  %v1515 = vpop.f32.mrb[0].mxu0
  %v1516 = vadd.f32 %v235, %v1515
  %v1517 = vpop.f32.mrb[0].mxu0
  %v1518 = vpop.f32.mrb[0].mxu0
  %v1519 = vadd.f32 %v235, %v1518
  %v1520 = vpop.f32.mrb[0].mxu0
  %1521 = vmatprep.mubr.bf16.mxu0 0
  %1522 = vmatmul.mubr.bf16.gmra.mrb[0].mxu0 %v706
  %v1523 = vpop.f32.mrb[0].mxu0
  %v1524 = vadd.f32 %v235, %v1523
  %v1525 = vpop.f32.mrb[0].mxu0
  %v1526 = vpop.f32.mrb[0].mxu0
  %v1527 = vadd.f32 %v235, %v1526
  %v1528 = vpop.f32.mrb[0].mxu0
  %1529 = vmatprep.mubr.bf16.mxu0 0
  %1530 = vmatmul.mubr.bf16.gmra.mrb[0].mxu0 %v707
  %v1531 = vpop.f32.mrb[0].mxu0
  %v1532 = vadd.f32 %v235, %v1531
  %v1533 = vpop.f32.mrb[0].mxu0
  %v1534 = vpop.f32.mrb[0].mxu0
  %v1535 = vadd.f32 %v235, %v1534
  %v1536 = vpop.f32.mrb[0].mxu0
  %1537 = vmatprep.mubr.bf16.mxu0 0
  %1538 = vmatmul.mubr.bf16.gmra.mrb[0].mxu0 %v708
  %v1539 = vpop.f32.mrb[0].mxu0
  %v1540 = vadd.f32 %v235, %v1539
  %v1541 = vpop.f32.mrb[0].mxu0
  %v1542 = vpop.f32.mrb[0].mxu0
  %v1543 = vadd.f32 %v235, %v1542
  %v1544 = vpop.f32.mrb[0].mxu0
  %1545 = vmatprep.mubr.bf16.mxu0 0
  %1546 = vmatmul.mubr.bf16.gmra.mrb[0].mxu0 %v709
  %v1547 = vpop.f32.mrb[0].mxu0
  %v1548 = vadd.f32 %v235, %v1547
  %v1549 = vpop.f32.mrb[0].mxu0
  %v1550 = vpop.f32.mrb[0].mxu0
  %v1551 = vadd.f32 %v235, %v1550
  %v1552 = vpop.f32.mrb[0].mxu0
  %1553 = vmatprep.mubr.bf16.mxu0 0
  %1554 = vmatmul.mubr.bf16.gmra.mrb[0].mxu0 %v710
  %v1555 = vpop.f32.mrb[0].mxu0
  %v1556 = vadd.f32 %v235, %v1555
  %v1557 = vpop.f32.mrb[0].mxu0
  %v1558 = vpop.f32.mrb[0].mxu0
  %v1559 = vadd.f32 %v235, %v1558
  %v1560 = vpop.f32.mrb[0].mxu0
  %1561 = vmatprep.mubr.bf16.mxu0 0
  %1562 = vmatmul.mubr.bf16.gmra.mrb[0].mxu0 %v711
  %v1563 = vpop.f32.mrb[0].mxu0
  %v1564 = vadd.f32 %v235, %v1563
  %v1565 = vpop.f32.mrb[0].mxu0
  %v1566 = vpop.f32.mrb[0].mxu0
  %v1567 = vadd.f32 %v235, %v1566
  %v1568 = vpop.f32.mrb[0].mxu0
  %1569 = vmatprep.mubr.bf16.mxu0 0
  %1570 = vmatmul.mubr.bf16.gmra.mrb[0].mxu0 %v712
  %v1571 = vpop.f32.mrb[0].mxu0
  %v1572 = vadd.f32 %v235, %v1571
  %v1573 = vpop.f32.mrb[0].mxu0
  %v1574 = vpop.f32.mrb[0].mxu0
  %v1575 = vadd.f32 %v235, %v1574
  %v1576 = vpop.f32.mrb[0].mxu0
  %1577 = vmatprep.mubr.bf16.mxu0 0
  %1578 = vmatmul.mubr.bf16.gmra.mrb[0].mxu0 %v713
  %v1579 = vpop.f32.mrb[0].mxu0
  %v1580 = vadd.f32 %v235, %v1579
  %v1581 = vpop.f32.mrb[0].mxu0
  %v1582 = vpop.f32.mrb[0].mxu0
  %v1583 = vadd.f32 %v235, %v1582
  %v1584 = vpop.f32.mrb[0].mxu0
  %1585 = vmatprep.mubr.bf16.mxu0 0
  %1586 = vmatmul.mubr.bf16.gmra.mrb[0].mxu0 %v714
  %v1587 = vpop.f32.mrb[0].mxu0
  %v1588 = vadd.f32 %v235, %v1587
  %v1589 = vpop.f32.mrb[0].mxu0
  %v1590 = vpop.f32.mrb[0].mxu0
  %v1591 = vadd.f32 %v235, %v1590
  %v1592 = vpop.f32.mrb[0].mxu0
  %1593 = vmatprep.mubr.bf16.mxu0 0
  %1594 = vmatmul.mubr.bf16.gmra.mrb[0].mxu0 %v715
  %v1595 = vpop.f32.mrb[0].mxu0
  %v1596 = vadd.f32 %v235, %v1595
  %v1597 = vpop.f32.mrb[0].mxu0
  %v1598 = vpop.f32.mrb[0].mxu0
  %v1599 = vadd.f32 %v235, %v1598
  %v1600 = vpop.f32.mrb[0].mxu0
  %1601 = vmatprep.mubr.bf16.mxu0 0
  %1602 = vmatmul.mubr.bf16.gmra.mrb[0].mxu0 %v716
  %v1603 = vpop.f32.mrb[0].mxu0
  %v1604 = vadd.f32 %v235, %v1603
  %v1605 = vpop.f32.mrb[0].mxu0
  %v1606 = vpop.f32.mrb[0].mxu0
  %v1607 = vadd.f32 %v235, %v1606
  %v1608 = vpop.f32.mrb[0].mxu0
  %1609 = vmatprep.mubr.bf16.mxu0 0
  %1610 = vmatmul.mubr.bf16.gmra.mrb[0].mxu0 %v717
  %v1611 = vpop.f32.mrb[0].mxu0
  %v1612 = vadd.f32 %v235, %v1611
  %v1613 = vpop.f32.mrb[0].mxu0
  %v1614 = vpop.f32.mrb[0].mxu0
  %v1615 = vadd.f32 %v235, %v1614
  %v1616 = vpop.f32.mrb[0].mxu0
  %1617 = vmatprep.mubr.bf16.mxu0 0
  %1618 = vmatmul.mubr.bf16.gmra.mrb[0].mxu0 %v718
  %v1619 = vpop.f32.mrb[0].mxu0
  %v1620 = vadd.f32 %v235, %v1619
  %v1621 = vpop.f32.mrb[0].mxu0
  %v1622 = vpop.f32.mrb[0].mxu0
  %v1623 = vadd.f32 %v235, %v1622
  %v1624 = vpop.f32.mrb[0].mxu0
  %1625 = vmatprep.mubr.bf16.mxu0 0
  %1626 = vmatmul.mubr.bf16.gmra.mrb[0].mxu0 %v719
  %v1627 = vpop.f32.mrb[0].mxu0
  %v1628 = vadd.f32 %v235, %v1627
  %v1629 = vpop.f32.mrb[0].mxu0
  %v1630 = vpop.f32.mrb[0].mxu0
  %v1631 = vadd.f32 %v235, %v1630
  %v1632 = vpop.f32.mrb[0].mxu0
  %1633 = vmatprep.mubr.bf16.mxu0 0
  %1634 = vmatmul.mubr.bf16.gmra.mrb[0].mxu0 %v720
  %v1635 = vpop.f32.mrb[0].mxu0
  %v1636 = vadd.f32 %v235, %v1635
  %v1637 = vpop.f32.mrb[0].mxu0
  %v1638 = vpop.f32.mrb[0].mxu0
  %v1639 = vadd.f32 %v235, %v1638
  %v1640 = vpop.f32.mrb[0].mxu0
  %1641 = vmatprep.mubr.bf16.mxu0 0
  %1642 = vmatmul.mubr.bf16.gmra.mrb[0].mxu0 %v721
  %v1643 = vpop.f32.mrb[0].mxu0
  %v1644 = vadd.f32 %v235, %v1643
  %v1645 = vpop.f32.mrb[0].mxu0
  %v1646 = vpop.f32.mrb[0].mxu0
  %v1647 = vadd.f32 %v235, %v1646
  %v1648 = vpop.f32.mrb[0].mxu0
  %1649 = vmatprep.mubr.bf16.mxu0 0
  %1650 = vmatmul.mubr.bf16.gmra.mrb[0].mxu0 %v722
  %v1651 = vpop.f32.mrb[0].mxu0
  %v1652 = vadd.f32 %v235, %v1651
  %v1653 = vpop.f32.mrb[0].mxu0
  %v1654 = vpop.f32.mrb[0].mxu0
  %v1655 = vadd.f32 %v235, %v1654
  %v1656 = vpop.f32.mrb[0].mxu0
  %1657 = vmatprep.mubr.bf16.mxu0 0
  %1658 = vmatmul.mubr.bf16.gmra.mrb[0].mxu0 %v723
  %v1659 = vpop.f32.mrb[0].mxu0
  %v1660 = vadd.f32 %v235, %v1659
  %v1661 = vpop.f32.mrb[0].mxu0
  %v1662 = vpop.f32.mrb[0].mxu0
  %v1663 = vadd.f32 %v235, %v1662
  %v1664 = vpop.f32.mrb[0].mxu0
  %1665 = vmatprep.mubr.bf16.mxu0 0
  %1666 = vmatmul.mubr.bf16.gmra.mrb[0].mxu0 %v724
  %v1667 = vpop.f32.mrb[0].mxu0
  %v1668 = vadd.f32 %v235, %v1667
  %v1669 = vpop.f32.mrb[0].mxu0
  %v1670 = vpop.f32.mrb[0].mxu0
  %v1671 = vadd.f32 %v235, %v1670
  %v1672 = vpop.f32.mrb[0].mxu0
  %1673 = vmatprep.mubr.bf16.mxu0 0
  %1674 = vmatmul.mubr.bf16.gmra.mrb[0].mxu0 %v725
  %v1675 = vpop.f32.mrb[0].mxu0
  %v1676 = vadd.f32 %v235, %v1675
  %v1677 = vpop.f32.mrb[0].mxu0
  %v1678 = vpop.f32.mrb[0].mxu0
  %v1679 = vadd.f32 %v235, %v1678
  %v1680 = vpop.f32.mrb[0].mxu0
  %1681 = vmatprep.mubr.bf16.mxu0 0
  %1682 = vmatmul.mubr.bf16.gmra.mrb[0].mxu0 %v726
  %v1683 = vpop.f32.mrb[0].mxu0
  %v1684 = vadd.f32 %v235, %v1683
  %v1685 = vpop.f32.mrb[0].mxu0
  %v1686 = vpop.f32.mrb[0].mxu0
  %v1687 = vadd.f32 %v235, %v1686
  %v1688 = vpop.f32.mrb[0].mxu0
  %1689 = vdwg.mxu0
  %v1690 = vmax.f32 %v908, 0.0
  %v1691 = vmax.f32 %v911, 0.0
  %v1692 = vmax.f32 %v916, 0.0
  %v1693 = vmax.f32 %v919, 0.0
  %v1694 = vmax.f32 %v924, 0.0
  %v1695 = vmax.f32 %v927, 0.0
  %v1696 = vmax.f32 %v932, 0.0
  %v1697 = vmax.f32 %v935, 0.0
  %v1698 = vmax.f32 %v940, 0.0
  %v1699 = vmax.f32 %v943, 0.0
  %v1700 = vmax.f32 %v948, 0.0
  %v1701 = vmax.f32 %v951, 0.0
  %v1702 = vmax.f32 %v956, 0.0
  %v1703 = vmax.f32 %v959, 0.0
  %v1704 = vmax.f32 %v964, 0.0
  %v1705 = vmax.f32 %v967, 0.0
  %v1706 = vmax.f32 %v972, 0.0
  %v1707 = vmax.f32 %v975, 0.0
  %v1708 = vmax.f32 %v980, 0.0
  %v1709 = vmax.f32 %v983, 0.0
  %v1710 = vmax.f32 %v988, 0.0
  %v1711 = vmax.f32 %v991, 0.0
  %v1712 = vmax.f32 %v996, 0.0
  %v1713 = vmax.f32 %v999, 0.0
  %v1714 = vmax.f32 %v1004, 0.0
  %v1715 = vmax.f32 %v1007, 0.0
  %v1716 = vmax.f32 %v1012, 0.0
  %v1717 = vmax.f32 %v1015, 0.0
  %v1718 = vmax.f32 %v1020, 0.0
  %v1719 = vmax.f32 %v1023, 0.0
  %v1720 = vmax.f32 %v1028, 0.0
  %v1721 = vmax.f32 %v1031, 0.0
  %v1722 = vmax.f32 %v1036, 0.0
  %v1723 = vmax.f32 %v1039, 0.0
  %v1724 = vmax.f32 %v1044, 0.0
  %v1725 = vmax.f32 %v1047, 0.0
  %v1726 = vmax.f32 %v1052, 0.0
  %v1727 = vmax.f32 %v1055, 0.0
  %v1728 = vmax.f32 %v1060, 0.0
  %v1729 = vmax.f32 %v1063, 0.0
  %v1730 = vmax.f32 %v1068, 0.0
  %v1731 = vmax.f32 %v1071, 0.0
  %v1732 = vmax.f32 %v1076, 0.0
  %v1733 = vmax.f32 %v1079, 0.0
  %v1734 = vmax.f32 %v1084, 0.0
  %v1735 = vmax.f32 %v1087, 0.0
  %v1736 = vmax.f32 %v1092, 0.0
  %v1737 = vmax.f32 %v1095, 0.0
  %v1738 = vmax.f32 %v1100, 0.0
  %v1739 = vmax.f32 %v1103, 0.0
  %v1740 = vmax.f32 %v1108, 0.0
  %v1741 = vmax.f32 %v1111, 0.0
  %v1742 = vmax.f32 %v1116, 0.0
  %v1743 = vmax.f32 %v1119, 0.0
  %v1744 = vmax.f32 %v1124, 0.0
  %v1745 = vmax.f32 %v1127, 0.0
  %v1746 = vmax.f32 %v1132, 0.0
  %v1747 = vmax.f32 %v1135, 0.0
  %v1748 = vmax.f32 %v1140, 0.0
  %v1749 = vmax.f32 %v1143, 0.0
  %v1750 = vmax.f32 %v1148, 0.0
  %v1751 = vmax.f32 %v1151, 0.0
  %v1752 = vmax.f32 %v1156, 0.0
  %v1753 = vmax.f32 %v1159, 0.0
  %v1754 = vmax.f32 %v1164, 0.0
  %v1755 = vmax.f32 %v1167, 0.0
  %v1756 = vmax.f32 %v1172, 0.0
  %v1757 = vmax.f32 %v1175, 0.0
  %v1758 = vmax.f32 %v1180, 0.0
  %v1759 = vmax.f32 %v1183, 0.0
  %v1760 = vmax.f32 %v1188, 0.0
  %v1761 = vmax.f32 %v1191, 0.0
  %v1762 = vmax.f32 %v1196, 0.0
  %v1763 = vmax.f32 %v1199, 0.0
  %v1764 = vmax.f32 %v1204, 0.0
  %v1765 = vmax.f32 %v1207, 0.0
  %v1766 = vmax.f32 %v1212, 0.0
  %v1767 = vmax.f32 %v1215, 0.0
  %v1768 = vmax.f32 %v1220, 0.0
  %v1769 = vmax.f32 %v1223, 0.0
  %v1770 = vmax.f32 %v1228, 0.0
  %v1771 = vmax.f32 %v1231, 0.0
  %v1772 = vmax.f32 %v1236, 0.0
  %v1773 = vmax.f32 %v1239, 0.0
  %v1774 = vmax.f32 %v1244, 0.0
  %v1775 = vmax.f32 %v1247, 0.0
  %v1776 = vmax.f32 %v1252, 0.0
  %v1777 = vmax.f32 %v1255, 0.0
  %v1778 = vmax.f32 %v1260, 0.0
  %v1779 = vmax.f32 %v1263, 0.0
  %v1780 = vmax.f32 %v1268, 0.0
  %v1781 = vmax.f32 %v1271, 0.0
  %v1782 = vmax.f32 %v1276, 0.0
  %v1783 = vmax.f32 %v1279, 0.0
  %v1784 = vmax.f32 %v1284, 0.0
  %v1785 = vmax.f32 %v1287, 0.0
  %v1786 = vmax.f32 %v1292, 0.0
  %v1787 = vmax.f32 %v1295, 0.0
  %v1788 = vmax.f32 %v1300, 0.0
  %v1789 = vmax.f32 %v1303, 0.0
  %v1790 = vmax.f32 %v1308, 0.0
  %v1791 = vmax.f32 %v1311, 0.0
  %v1792 = vmax.f32 %v1316, 0.0
  %v1793 = vmax.f32 %v1319, 0.0
  %v1794 = vmax.f32 %v1324, 0.0
  %v1795 = vmax.f32 %v1327, 0.0
  %v1796 = vmax.f32 %v1332, 0.0
  %v1797 = vmax.f32 %v1335, 0.0
  %v1798 = vmax.f32 %v1340, 0.0
  %v1799 = vmax.f32 %v1343, 0.0
  %v1800 = vmax.f32 %v1348, 0.0
  %v1801 = vmax.f32 %v1351, 0.0
  %v1802 = vmax.f32 %v1356, 0.0
  %v1803 = vmax.f32 %v1359, 0.0
  %v1804 = vmax.f32 %v1364, 0.0
  %v1805 = vmax.f32 %v1367, 0.0
  %v1806 = vmax.f32 %v1372, 0.0
  %v1807 = vmax.f32 %v1375, 0.0
  %v1808 = vmax.f32 %v1380, 0.0
  %v1809 = vmax.f32 %v1383, 0.0
  %v1810 = vmax.f32 %v1388, 0.0
  %v1811 = vmax.f32 %v1391, 0.0
  %v1812 = vmax.f32 %v1396, 0.0
  %v1813 = vmax.f32 %v1399, 0.0
  %v1814 = vmax.f32 %v1404, 0.0
  %v1815 = vmax.f32 %v1407, 0.0
  %v1816 = vmax.f32 %v1412, 0.0
  %v1817 = vmax.f32 %v1415, 0.0
  %v1818 = vmax.f32 %v1420, 0.0
  %v1819 = vmax.f32 %v1423, 0.0
  %v1820 = vmax.f32 %v1428, 0.0
  %v1821 = vmax.f32 %v1431, 0.0
  %v1822 = vmax.f32 %v1436, 0.0
  %v1823 = vmax.f32 %v1439, 0.0
  %v1824 = vmax.f32 %v1444, 0.0
  %v1825 = vmax.f32 %v1447, 0.0
  %v1826 = vmax.f32 %v1452, 0.0
  %v1827 = vmax.f32 %v1455, 0.0
  %v1828 = vmax.f32 %v1460, 0.0
  %v1829 = vmax.f32 %v1463, 0.0
  %v1830 = vmax.f32 %v1468, 0.0
  %v1831 = vmax.f32 %v1471, 0.0
  %v1832 = vmax.f32 %v1476, 0.0
  %v1833 = vmax.f32 %v1479, 0.0
  %v1834 = vmax.f32 %v1484, 0.0
  %v1835 = vmax.f32 %v1487, 0.0
  %v1836 = vmax.f32 %v1492, 0.0
  %v1837 = vmax.f32 %v1495, 0.0
  %v1838 = vmax.f32 %v1500, 0.0
  %v1839 = vmax.f32 %v1503, 0.0
  %v1840 = vmax.f32 %v1508, 0.0
  %v1841 = vmax.f32 %v1511, 0.0
  %v1842 = vmax.f32 %v1516, 0.0
  %v1843 = vmax.f32 %v1519, 0.0
  %v1844 = vmax.f32 %v1524, 0.0
  %v1845 = vmax.f32 %v1527, 0.0
  %v1846 = vmax.f32 %v1532, 0.0
  %v1847 = vmax.f32 %v1535, 0.0
  %v1848 = vmax.f32 %v1540, 0.0
  %v1849 = vmax.f32 %v1543, 0.0
  %v1850 = vmax.f32 %v1548, 0.0
  %v1851 = vmax.f32 %v1551, 0.0
  %v1852 = vmax.f32 %v1556, 0.0
  %v1853 = vmax.f32 %v1559, 0.0
  %v1854 = vmax.f32 %v1564, 0.0
  %v1855 = vmax.f32 %v1567, 0.0
  %v1856 = vmax.f32 %v1572, 0.0
  %v1857 = vmax.f32 %v1575, 0.0
  %v1858 = vmax.f32 %v1580, 0.0
  %v1859 = vmax.f32 %v1583, 0.0
  %v1860 = vmax.f32 %v1588, 0.0
  %v1861 = vmax.f32 %v1591, 0.0
  %v1862 = vmax.f32 %v1596, 0.0
  %v1863 = vmax.f32 %v1599, 0.0
  %v1864 = vmax.f32 %v1604, 0.0
  %v1865 = vmax.f32 %v1607, 0.0
  %v1866 = vmax.f32 %v1612, 0.0
  %v1867 = vmax.f32 %v1615, 0.0
  %v1868 = vmax.f32 %v1620, 0.0
  %v1869 = vmax.f32 %v1623, 0.0
  %v1870 = vmax.f32 %v1628, 0.0
  %v1871 = vmax.f32 %v1631, 0.0
  %v1872 = vmax.f32 %v1636, 0.0
  %v1873 = vmax.f32 %v1639, 0.0
  %v1874 = vmax.f32 %v1644, 0.0
  %v1875 = vmax.f32 %v1647, 0.0
  %v1876 = vmax.f32 %v1652, 0.0
  %v1877 = vmax.f32 %v1655, 0.0
  %v1878 = vmax.f32 %v1660, 0.0
  %v1879 = vmax.f32 %v1663, 0.0
  %v1880 = vmax.f32 %v1668, 0.0
  %v1881 = vmax.f32 %v1671, 0.0
  %v1882 = vmax.f32 %v1676, 0.0
  %v1883 = vmax.f32 %v1679, 0.0
  %v1884 = vmax.f32 %v1684, 0.0
  %v1885 = vmax.f32 %v1687, 0.0
  %v1886 = vpack.c.bf16 %v1691, %v1690
  %v1887 = vpack.c.bf16 %v1693, %v1692
  %v1888 = vpack.c.bf16 %v1695, %v1694
  %v1889 = vpack.c.bf16 %v1697, %v1696
  %v1890 = vpack.c.bf16 %v1699, %v1698
  %v1891 = vpack.c.bf16 %v1701, %v1700
  %v1892 = vpack.c.bf16 %v1703, %v1702
  %v1893 = vpack.c.bf16 %v1705, %v1704
  %v1894 = vpack.c.bf16 %v1707, %v1706
  %v1895 = vpack.c.bf16 %v1709, %v1708
  %v1896 = vpack.c.bf16 %v1711, %v1710
  %v1897 = vpack.c.bf16 %v1713, %v1712
  %v1898 = vpack.c.bf16 %v1715, %v1714
  %v1899 = vpack.c.bf16 %v1717, %v1716
  %v1900 = vpack.c.bf16 %v1719, %v1718
  %v1901 = vpack.c.bf16 %v1721, %v1720
  %v1902 = vpack.c.bf16 %v1723, %v1722
  %v1903 = vpack.c.bf16 %v1725, %v1724
  %v1904 = vpack.c.bf16 %v1727, %v1726
  %v1905 = vpack.c.bf16 %v1729, %v1728
  %v1906 = vpack.c.bf16 %v1731, %v1730
  %v1907 = vpack.c.bf16 %v1733, %v1732
  %v1908 = vpack.c.bf16 %v1735, %v1734
  %v1909 = vpack.c.bf16 %v1737, %v1736
  %v1910 = vpack.c.bf16 %v1739, %v1738
  %v1911 = vpack.c.bf16 %v1741, %v1740
  %v1912 = vpack.c.bf16 %v1743, %v1742
  %v1913 = vpack.c.bf16 %v1745, %v1744
  %v1914 = vpack.c.bf16 %v1747, %v1746
  %v1915 = vpack.c.bf16 %v1749, %v1748
  %v1916 = vpack.c.bf16 %v1751, %v1750
  %v1917 = vpack.c.bf16 %v1753, %v1752
  %v1918 = vpack.c.bf16 %v1755, %v1754
  %v1919 = vpack.c.bf16 %v1757, %v1756
  %v1920 = vpack.c.bf16 %v1759, %v1758
  %v1921 = vpack.c.bf16 %v1761, %v1760
  %v1922 = vpack.c.bf16 %v1763, %v1762
  %v1923 = vpack.c.bf16 %v1765, %v1764
  %v1924 = vpack.c.bf16 %v1767, %v1766
  %v1925 = vpack.c.bf16 %v1769, %v1768
  %v1926 = vpack.c.bf16 %v1771, %v1770
  %v1927 = vpack.c.bf16 %v1773, %v1772
  %v1928 = vpack.c.bf16 %v1775, %v1774
  %v1929 = vpack.c.bf16 %v1777, %v1776
  %v1930 = vpack.c.bf16 %v1779, %v1778
  %v1931 = vpack.c.bf16 %v1781, %v1780
  %v1932 = vpack.c.bf16 %v1783, %v1782
  %v1933 = vpack.c.bf16 %v1785, %v1784
  %v1934 = vpack.c.bf16 %v1787, %v1786
  %v1935 = vpack.c.bf16 %v1789, %v1788
  %v1936 = vpack.c.bf16 %v1791, %v1790
  %v1937 = vpack.c.bf16 %v1793, %v1792
  %v1938 = vpack.c.bf16 %v1795, %v1794
  %v1939 = vpack.c.bf16 %v1797, %v1796
  %v1940 = vpack.c.bf16 %v1799, %v1798
  %v1941 = vpack.c.bf16 %v1801, %v1800
  %v1942 = vpack.c.bf16 %v1803, %v1802
  %v1943 = vpack.c.bf16 %v1805, %v1804
  %v1944 = vpack.c.bf16 %v1807, %v1806
  %v1945 = vpack.c.bf16 %v1809, %v1808
  %v1946 = vpack.c.bf16 %v1811, %v1810
  %v1947 = vpack.c.bf16 %v1813, %v1812
  %v1948 = vpack.c.bf16 %v1815, %v1814
  %v1949 = vpack.c.bf16 %v1817, %v1816
  %v1950 = vpack.c.bf16 %v1819, %v1818
  %v1951 = vpack.c.bf16 %v1821, %v1820
  %v1952 = vpack.c.bf16 %v1823, %v1822
  %v1953 = vpack.c.bf16 %v1825, %v1824
  %v1954 = vpack.c.bf16 %v1827, %v1826
  %v1955 = vpack.c.bf16 %v1829, %v1828
  %v1956 = vpack.c.bf16 %v1831, %v1830
  %v1957 = vpack.c.bf16 %v1833, %v1832
  %v1958 = vpack.c.bf16 %v1835, %v1834
  %v1959 = vpack.c.bf16 %v1837, %v1836
  %v1960 = vpack.c.bf16 %v1839, %v1838
  %v1961 = vpack.c.bf16 %v1841, %v1840
  %v1962 = vpack.c.bf16 %v1843, %v1842
  %v1963 = vpack.c.bf16 %v1845, %v1844
  %v1964 = vpack.c.bf16 %v1847, %v1846
  %v1965 = vpack.c.bf16 %v1849, %v1848
  %v1966 = vpack.c.bf16 %v1851, %v1850
  %v1967 = vpack.c.bf16 %v1853, %v1852
  %v1968 = vpack.c.bf16 %v1855, %v1854
  %v1969 = vpack.c.bf16 %v1857, %v1856
  %v1970 = vpack.c.bf16 %v1859, %v1858
  %v1971 = vpack.c.bf16 %v1861, %v1860
  %v1972 = vpack.c.bf16 %v1863, %v1862
  %v1973 = vpack.c.bf16 %v1865, %v1864
  %v1974 = vpack.c.bf16 %v1867, %v1866
  %v1975 = vpack.c.bf16 %v1869, %v1868
  %v1976 = vpack.c.bf16 %v1871, %v1870
  %v1977 = vpack.c.bf16 %v1873, %v1872
  %v1978 = vpack.c.bf16 %v1875, %v1874
  %v1979 = vpack.c.bf16 %v1877, %v1876
  %v1980 = vpack.c.bf16 %v1879, %v1878
  %v1981 = vpack.c.bf16 %v1881, %v1880
  %v1982 = vpack.c.bf16 %v1883, %v1882
  %v1983 = vpack.c.bf16 %v1885, %v1884
  %v1984 = vld [vmem:[%s3] sm:$0xff]
  %v1985 = vld [vmem:[%s3 + $0x8] sm:$0xff]
  %v1986 = vld [vmem:[%s3 + $0x10] sm:$0xff]
  %v1987 = vld [vmem:[%s3 + $0x18] sm:$0xff]
  %v1988 = vld [vmem:[%s3 + $0x20] sm:$0xff]
  %v1989 = vld [vmem:[%s3 + $0x28] sm:$0xff]
  %v1990 = vld [vmem:[%s3 + $0x30] sm:$0xf]
  %v1991 = vld [vmem:[%s3 + $0x34] sm:$0xff]
  %v1992 = vld [vmem:[%s3 + $0x3c] sm:$0xff]
  %v1993 = vld [vmem:[%s3 + $0x44] sm:$0xff]
  %v1994 = vld [vmem:[%s3 + $0x4c] sm:$0xff]
  %v1995 = vld [vmem:[%s3 + $0x54] sm:$0xff]
  %v1996 = vld [vmem:[%s3 + $0x5c] sm:$0xff]
  %v1997 = vld [vmem:[%s3 + $0x64] sm:$0xf]
  %v1998 = vld [vmem:[%s3 + $0x68] sm:$0xff]
  %v1999 = vld [vmem:[%s3 + $0x70] sm:$0xff]
  %v2000 = vld [vmem:[%s3 + $0x78] sm:$0xff]
  %v2001 = vld [vmem:[%s3 + $0x80] sm:$0xff]
  %v2002 = vld [vmem:[%s3 + $0x88] sm:$0xff]
  %v2003 = vld [vmem:[%s3 + $0x90] sm:$0xff]
  %v2004 = vld [vmem:[%s3 + $0x98] sm:$0xf]
  %v2005 = vld [vmem:[%s3 + $0x9c] sm:$0xff]
  %v2006 = vld [vmem:[%s3 + $0xa4] sm:$0xff]
  %v2007 = vld [vmem:[%s3 + $0xac] sm:$0xff]
  %v2008 = vld [vmem:[%s3 + $0xb4] sm:$0xff]
  %v2009 = vld [vmem:[%s3 + $0xbc] sm:$0xff]
  %v2010 = vld [vmem:[%s3 + $0xc4] sm:$0xff]
  %v2011 = vld [vmem:[%s3 + $0xcc] sm:$0xf]
  %v2012 = vld [vmem:[%s3 + $0xd0] sm:$0xff]
  %v2013 = vld [vmem:[%s3 + $0xd8] sm:$0xff]
  %v2014 = vld [vmem:[%s3 + $0xe0] sm:$0xff]
  %v2015 = vld [vmem:[%s3 + $0xe8] sm:$0xff]
  %v2016 = vld [vmem:[%s3 + $0xf0] sm:$0xff]
  %v2017 = vld [vmem:[%s3 + $0xf8] sm:$0xff]
  %v2018 = vld [vmem:[%s3 + $0x100] sm:$0xf]
  %v2019 = vld [vmem:[%s3 + $0x104] sm:$0xff]
  %v2020 = vld [vmem:[%s3 + $0x10c] sm:$0xff]
  %v2021 = vld [vmem:[%s3 + $0x114] sm:$0xff]
  %v2022 = vld [vmem:[%s3 + $0x11c] sm:$0xff]
  %v2023 = vld [vmem:[%s3 + $0x124] sm:$0xff]
  %v2024 = vld [vmem:[%s3 + $0x12c] sm:$0xff]
  %v2025 = vld [vmem:[%s3 + $0x134] sm:$0xf]
  %v2026 = vld [vmem:[%s3 + $0x138] sm:$0xff]
  %v2027 = vld [vmem:[%s3 + $0x140] sm:$0xff]
  %v2028 = vld [vmem:[%s3 + $0x148] sm:$0xff]
  %v2029 = vld [vmem:[%s3 + $0x150] sm:$0xff]
  %v2030 = vld [vmem:[%s3 + $0x158] sm:$0xff]
  %v2031 = vld [vmem:[%s3 + $0x160] sm:$0xff]
  %v2032 = vld [vmem:[%s3 + $0x168] sm:$0xf]
  %v2033 = vld [vmem:[%s3 + $0x16c] sm:$0xff]
  %v2034 = vld [vmem:[%s3 + $0x174] sm:$0xff]
  %v2035 = vld [vmem:[%s3 + $0x17c] sm:$0xff]
  %v2036 = vld [vmem:[%s3 + $0x184] sm:$0xff]
  %v2037 = vld [vmem:[%s3 + $0x18c] sm:$0xff]
  %v2038 = vld [vmem:[%s3 + $0x194] sm:$0xff]
  %v2039 = vld [vmem:[%s3 + $0x19c] sm:$0xf]
  %v2040 = vld [vmem:[%s3 + $0x1a0] sm:$0xff]
  %v2041 = vld [vmem:[%s3 + $0x1a8] sm:$0xff]
  %v2042 = vld [vmem:[%s3 + $0x1b0] sm:$0xff]
  %v2043 = vld [vmem:[%s3 + $0x1b8] sm:$0xff]
  %v2044 = vld [vmem:[%s3 + $0x1c0] sm:$0xff]
  %v2045 = vld [vmem:[%s3 + $0x1c8] sm:$0xff]
  %v2046 = vld [vmem:[%s3 + $0x1d0] sm:$0xf]
  %v2047 = vld [vmem:[%s3 + $0x1d4] sm:$0xff]
  %v2048 = vld [vmem:[%s3 + $0x1dc] sm:$0xff]
  %v2049 = vld [vmem:[%s3 + $0x1e4] sm:$0xff]
  %v2050 = vld [vmem:[%s3 + $0x1ec] sm:$0xff]
  %v2051 = vld [vmem:[%s3 + $0x1f4] sm:$0xff]
  %v2052 = vld [vmem:[%s3 + $0x1fc] sm:$0xff]
  %v2053 = vld [vmem:[%s3 + $0x204] sm:$0xf]
  %v2054 = vld [vmem:[%s3 + $0x208] sm:$0xff]
  %v2055 = vld [vmem:[%s3 + $0x210] sm:$0xff]
  %v2056 = vld [vmem:[%s3 + $0x218] sm:$0xff]
  %v2057 = vld [vmem:[%s3 + $0x220] sm:$0xff]
  %v2058 = vld [vmem:[%s3 + $0x228] sm:$0xff]
  %v2059 = vld [vmem:[%s3 + $0x230] sm:$0xff]
  %v2060 = vld [vmem:[%s3 + $0x238] sm:$0xf]
  %v2061 = vld [vmem:[%s3 + $0x23c] sm:$0xff]
  %v2062 = vld [vmem:[%s3 + $0x244] sm:$0xff]
  %v2063 = vld [vmem:[%s3 + $0x24c] sm:$0xff]
  %v2064 = vld [vmem:[%s3 + $0x254] sm:$0xff]
  %v2065 = vld [vmem:[%s3 + $0x25c] sm:$0xff]
  %v2066 = vld [vmem:[%s3 + $0x264] sm:$0xff]
  %v2067 = vld [vmem:[%s3 + $0x26c] sm:$0xf]
  %v2068 = vld [vmem:[%s3 + $0x270] sm:$0xff]
  %v2069 = vld [vmem:[%s3 + $0x278] sm:$0xff]
  %v2070 = vld [vmem:[%s3 + $0x280] sm:$0xff]
  %v2071 = vld [vmem:[%s3 + $0x288] sm:$0xff]
  %v2072 = vld [vmem:[%s3 + $0x290] sm:$0xff]
  %v2073 = vld [vmem:[%s3 + $0x298] sm:$0xff]
  %v2074 = vld [vmem:[%s3 + $0x2a0] sm:$0xf]
  %v2075 = vld [vmem:[%s3 + $0x2a4] sm:$0xff]
  %v2076 = vld [vmem:[%s3 + $0x2ac] sm:$0xff]
  %v2077 = vld [vmem:[%s3 + $0x2b4] sm:$0xff]
  %v2078 = vld [vmem:[%s3 + $0x2bc] sm:$0xff]
  %v2079 = vld [vmem:[%s3 + $0x2c4] sm:$0xff]
  %v2080 = vld [vmem:[%s3 + $0x2cc] sm:$0xff]
  %v2081 = vld [vmem:[%s3 + $0x2d4] sm:$0xf]
  %v2082 = vld [vmem:[%s3 + $0x2d8] sm:$0xff]
  %v2083 = vld [vmem:[%s3 + $0x2e0] sm:$0xff]
  %v2084 = vld [vmem:[%s3 + $0x2e8] sm:$0xff]
  %v2085 = vld [vmem:[%s3 + $0x2f0] sm:$0xff]
  %v2086 = vld [vmem:[%s3 + $0x2f8] sm:$0xff]
  %v2087 = vld [vmem:[%s3 + $0x300] sm:$0xff]
  %v2088 = vld [vmem:[%s3 + $0x308] sm:$0xf]
  %v2089 = vld [vmem:[%s3 + $0x30c] sm:$0xff]
  %v2090 = vld [vmem:[%s3 + $0x314] sm:$0xff]
  %v2091 = vld [vmem:[%s3 + $0x31c] sm:$0xff]
  %v2092 = vld [vmem:[%s3 + $0x324] sm:$0xff]
  %v2093 = vld [vmem:[%s3 + $0x32c] sm:$0xff]
  %v2094 = vld [vmem:[%s3 + $0x334] sm:$0xff]
  %v2095 = vld [vmem:[%s3 + $0x33c] sm:$0xf]
  %v2096 = vld [vmem:[%s3 + $0x340] sm:$0xff]
  %v2097 = vld [vmem:[%s3 + $0x348] sm:$0xff]
  %v2098 = vld [vmem:[%s3 + $0x350] sm:$0xff]
  %v2099 = vld [vmem:[%s3 + $0x358] sm:$0xff]
  %v2100 = vld [vmem:[%s3 + $0x360] sm:$0xff]
  %v2101 = vld [vmem:[%s3 + $0x368] sm:$0xff]
  %v2102 = vld [vmem:[%s3 + $0x370] sm:$0xf]
  %v2103 = vld [vmem:[%s3 + $0x374] sm:$0xff]
  %v2104 = vld [vmem:[%s3 + $0x37c] sm:$0xff]
  %v2105 = vld [vmem:[%s3 + $0x384] sm:$0xff]
  %v2106 = vld [vmem:[%s3 + $0x38c] sm:$0xff]
  %v2107 = vld [vmem:[%s3 + $0x394] sm:$0xff]
  %v2108 = vld [vmem:[%s3 + $0x39c] sm:$0xff]
  %v2109 = vld [vmem:[%s3 + $0x3a4] sm:$0xf]
  %v2110 = vld [vmem:[%s3 + $0x3a8] sm:$0xff]
  %v2111 = vld [vmem:[%s3 + $0x3b0] sm:$0xff]
  %v2112 = vld [vmem:[%s3 + $0x3b8] sm:$0xff]
  %v2113 = vld [vmem:[%s3 + $0x3c0] sm:$0xff]
  %v2114 = vld [vmem:[%s3 + $0x3c8] sm:$0xff]
  %v2115 = vld [vmem:[%s3 + $0x3d0] sm:$0xff]
  %v2116 = vld [vmem:[%s3 + $0x3d8] sm:$0xf]
  %v2117 = vld [vmem:[%s3 + $0x3dc] sm:$0xff]
  %v2118 = vld [vmem:[%s3 + $0x3e4] sm:$0xff]
  %v2119 = vld [vmem:[%s3 + $0x3ec] sm:$0xff]
  %v2120 = vld [vmem:[%s3 + $0x3f4] sm:$0xff]
  %v2121 = vld [vmem:[%s3 + $0x3fc] sm:$0xff]
  %v2122 = vld [vmem:[%s3 + $0x404] sm:$0xff]
  %v2123 = vld [vmem:[%s3 + $0x40c] sm:$0xf]
  %v2124 = vld [vmem:[%s3 + $0x410] sm:$0xff]
  %v2125 = vld [vmem:[%s3 + $0x418] sm:$0xff]
  %v2126 = vld [vmem:[%s3 + $0x420] sm:$0xff]
  %v2127 = vld [vmem:[%s3 + $0x428] sm:$0xff]
  %v2128 = vld [vmem:[%s3 + $0x430] sm:$0xff]
  %v2129 = vld [vmem:[%s3 + $0x438] sm:$0xff]
  %v2130 = vld [vmem:[%s3 + $0x440] sm:$0xf]
  %v2131 = vld [vmem:[%s3 + $0x444] sm:$0xff]
  %v2132 = vld [vmem:[%s3 + $0x44c] sm:$0xff]
  %v2133 = vld [vmem:[%s3 + $0x454] sm:$0xff]
  %v2134 = vld [vmem:[%s3 + $0x45c] sm:$0xff]
  %v2135 = vld [vmem:[%s3 + $0x464] sm:$0xff]
  %v2136 = vld [vmem:[%s3 + $0x46c] sm:$0xff]
  %v2137 = vld [vmem:[%s3 + $0x474] sm:$0xf]
  %v2138 = vld [vmem:[%s3 + $0x478] sm:$0xff]
  %v2139 = vld [vmem:[%s3 + $0x480] sm:$0xff]
  %v2140 = vld [vmem:[%s3 + $0x488] sm:$0xff]
  %v2141 = vld [vmem:[%s3 + $0x490] sm:$0xff]
  %v2142 = vld [vmem:[%s3 + $0x498] sm:$0xff]
  %v2143 = vld [vmem:[%s3 + $0x4a0] sm:$0xff]
  %v2144 = vld [vmem:[%s3 + $0x4a8] sm:$0xf]
  %v2145 = vld [vmem:[%s3 + $0x4ac] sm:$0xff]
  %v2146 = vld [vmem:[%s3 + $0x4b4] sm:$0xff]
  %v2147 = vld [vmem:[%s3 + $0x4bc] sm:$0xff]
  %v2148 = vld [vmem:[%s3 + $0x4c4] sm:$0xff]
  %v2149 = vld [vmem:[%s3 + $0x4cc] sm:$0xff]
  %v2150 = vld [vmem:[%s3 + $0x4d4] sm:$0xff]
  %v2151 = vld [vmem:[%s3 + $0x4dc] sm:$0xf]
  %v2152 = vld [vmem:[%s3 + $0x4e0] sm:$0xff]
  %v2153 = vld [vmem:[%s3 + $0x4e8] sm:$0xff]
  %v2154 = vld [vmem:[%s3 + $0x4f0] sm:$0xff]
  %v2155 = vld [vmem:[%s3 + $0x4f8] sm:$0xff]
  %v2156 = vld [vmem:[%s3 + $0x500] sm:$0xff]
  %v2157 = vld [vmem:[%s3 + $0x508] sm:$0xff]
  %v2158 = vld [vmem:[%s3 + $0x510] sm:$0xf]
  %v2159 = vld [vmem:[%s3 + $0x514] sm:$0xff]
  %v2160 = vld [vmem:[%s3 + $0x51c] sm:$0xff]
  %v2161 = vld [vmem:[%s3 + $0x524] sm:$0xff]
  %v2162 = vld [vmem:[%s3 + $0x52c] sm:$0xff]
  %v2163 = vld [vmem:[%s3 + $0x534] sm:$0xff]
  %v2164 = vld [vmem:[%s3 + $0x53c] sm:$0xff]
  %v2165 = vld [vmem:[%s3 + $0x544] sm:$0xf]
  %v2166 = vld [vmem:[%s3 + $0x548] sm:$0xff]
  %v2167 = vld [vmem:[%s3 + $0x550] sm:$0xff]
  %v2168 = vld [vmem:[%s3 + $0x558] sm:$0xff]
  %v2169 = vld [vmem:[%s3 + $0x560] sm:$0xff]
  %v2170 = vld [vmem:[%s3 + $0x568] sm:$0xff]
  %v2171 = vld [vmem:[%s3 + $0x570] sm:$0xff]
  %v2172 = vld [vmem:[%s3 + $0x578] sm:$0xf]
  %v2173 = vld [vmem:[%s3 + $0x57c] sm:$0xff]
  %v2174 = vld [vmem:[%s3 + $0x584] sm:$0xff]
  %v2175 = vld [vmem:[%s3 + $0x58c] sm:$0xff]
  %v2176 = vld [vmem:[%s3 + $0x594] sm:$0xff]
  %v2177 = vld [vmem:[%s3 + $0x59c] sm:$0xff]
  %v2178 = vld [vmem:[%s3 + $0x5a4] sm:$0xff]
  %v2179 = vld [vmem:[%s3 + $0x5ac] sm:$0xf]
  %v2180 = vld [vmem:[%s3 + $0x5b0] sm:$0xff]
  %v2181 = vld [vmem:[%s3 + $0x5b8] sm:$0xff]
  %v2182 = vld [vmem:[%s3 + $0x5c0] sm:$0xff]
  %v2183 = vld [vmem:[%s3 + $0x5c8] sm:$0xff]
  %v2184 = vld [vmem:[%s3 + $0x5d0] sm:$0xff]
  %v2185 = vld [vmem:[%s3 + $0x5d8] sm:$0xff]
  %v2186 = vld [vmem:[%s3 + $0x5e0] sm:$0xf]
  %v2187 = vld [vmem:[%s3 + $0x5e4] sm:$0xff]
  %v2188 = vld [vmem:[%s3 + $0x5ec] sm:$0xff]
  %v2189 = vld [vmem:[%s3 + $0x5f4] sm:$0xff]
  %v2190 = vld [vmem:[%s3 + $0x5fc] sm:$0xff]
  %v2191 = vld [vmem:[%s3 + $0x604] sm:$0xff]
  %v2192 = vld [vmem:[%s3 + $0x60c] sm:$0xff]
  %v2193 = vld [vmem:[%s3 + $0x614] sm:$0xf]
  %v2194 = vld [vmem:[%s3 + $0x618] sm:$0xff]
  %v2195 = vld [vmem:[%s3 + $0x620] sm:$0xff]
  %v2196 = vld [vmem:[%s3 + $0x628] sm:$0xff]
  %v2197 = vld [vmem:[%s3 + $0x630] sm:$0xff]
  %v2198 = vld [vmem:[%s3 + $0x638] sm:$0xff]
  %v2199 = vld [vmem:[%s3 + $0x640] sm:$0xff]
  %v2200 = vld [vmem:[%s3 + $0x648] sm:$0xf]
  %v2201 = vld [vmem:[%s3 + $0x64c] sm:$0xff]
  %v2202 = vld [vmem:[%s3 + $0x654] sm:$0xff]
  %v2203 = vld [vmem:[%s3 + $0x65c] sm:$0xff]
  %v2204 = vld [vmem:[%s3 + $0x664] sm:$0xff]
  %v2205 = vld [vmem:[%s3 + $0x66c] sm:$0xff]
  %v2206 = vld [vmem:[%s3 + $0x674] sm:$0xff]
  %v2207 = vld [vmem:[%s3 + $0x67c] sm:$0xf]
  %v2208 = vld [vmem:[%s3 + $0x680] sm:$0xff]
  %v2209 = vld [vmem:[%s3 + $0x688] sm:$0xff]
  %v2210 = vld [vmem:[%s3 + $0x690] sm:$0xff]
  %v2211 = vld [vmem:[%s3 + $0x698] sm:$0xff]
  %v2212 = vld [vmem:[%s3 + $0x6a0] sm:$0xff]
  %v2213 = vld [vmem:[%s3 + $0x6a8] sm:$0xff]
  %v2214 = vld [vmem:[%s3 + $0x6b0] sm:$0xf]
  %v2215 = vld [vmem:[%s3 + $0x6b4] sm:$0xff]
  %v2216 = vld [vmem:[%s3 + $0x6bc] sm:$0xff]
  %v2217 = vld [vmem:[%s3 + $0x6c4] sm:$0xff]
  %v2218 = vld [vmem:[%s3 + $0x6cc] sm:$0xff]
  %v2219 = vld [vmem:[%s3 + $0x6d4] sm:$0xff]
  %v2220 = vld [vmem:[%s3 + $0x6dc] sm:$0xff]
  %v2221 = vld [vmem:[%s3 + $0x6e4] sm:$0xf]
  %v2222 = vld [vmem:[%s3 + $0x6e8] sm:$0xff]
  %v2223 = vld [vmem:[%s3 + $0x6f0] sm:$0xff]
  %v2224 = vld [vmem:[%s3 + $0x6f8] sm:$0xff]
  %v2225 = vld [vmem:[%s3 + $0x700] sm:$0xff]
  %v2226 = vld [vmem:[%s3 + $0x708] sm:$0xff]
  %v2227 = vld [vmem:[%s3 + $0x710] sm:$0xff]
  %v2228 = vld [vmem:[%s3 + $0x718] sm:$0xf]
  %v2229 = vld [vmem:[%s3 + $0x71c] sm:$0xff]
  %v2230 = vld [vmem:[%s3 + $0x724] sm:$0xff]
  %v2231 = vld [vmem:[%s3 + $0x72c] sm:$0xff]
  %v2232 = vld [vmem:[%s3 + $0x734] sm:$0xff]
  %v2233 = vld [vmem:[%s3 + $0x73c] sm:$0xff]
  %v2234 = vld [vmem:[%s3 + $0x744] sm:$0xff]
  %v2235 = vld [vmem:[%s3 + $0x74c] sm:$0xf]
  %v2236 = vld [vmem:[%s3 + $0x750] sm:$0xff]
  %v2237 = vld [vmem:[%s3 + $0x758] sm:$0xff]
  %v2238 = vld [vmem:[%s3 + $0x760] sm:$0xff]
  %v2239 = vld [vmem:[%s3 + $0x768] sm:$0xff]
  %v2240 = vld [vmem:[%s3 + $0x770] sm:$0xff]
  %v2241 = vld [vmem:[%s3 + $0x778] sm:$0xff]
  %v2242 = vld [vmem:[%s3 + $0x780] sm:$0xf]
  %v2243 = vld [vmem:[%s3 + $0x784] sm:$0xff]
  %v2244 = vld [vmem:[%s3 + $0x78c] sm:$0xff]
  %v2245 = vld [vmem:[%s3 + $0x794] sm:$0xff]
  %v2246 = vld [vmem:[%s3 + $0x79c] sm:$0xff]
  %v2247 = vld [vmem:[%s3 + $0x7a4] sm:$0xff]
  %v2248 = vld [vmem:[%s3 + $0x7ac] sm:$0xff]
  %v2249 = vld [vmem:[%s3 + $0x7b4] sm:$0xf]
  %v2250 = vld [vmem:[%s3 + $0x7b8] sm:$0xff]
  %v2251 = vld [vmem:[%s3 + $0x7c0] sm:$0xff]
  %v2252 = vld [vmem:[%s3 + $0x7c8] sm:$0xff]
  %v2253 = vld [vmem:[%s3 + $0x7d0] sm:$0xff]
  %v2254 = vld [vmem:[%s3 + $0x7d8] sm:$0xff]
  %v2255 = vld [vmem:[%s3 + $0x7e0] sm:$0xff]
  %v2256 = vld [vmem:[%s3 + $0x7e8] sm:$0xf]
  %v2257 = vld [vmem:[%s3 + $0x7ec] sm:$0xff]
  %v2258 = vld [vmem:[%s3 + $0x7f4] sm:$0xff]
  %v2259 = vld [vmem:[%s3 + $0x7fc] sm:$0xff]
  %v2260 = vld [vmem:[%s3 + $0x804] sm:$0xff]
  %v2261 = vld [vmem:[%s3 + $0x80c] sm:$0xff]
  %v2262 = vld [vmem:[%s3 + $0x814] sm:$0xff]
  %v2263 = vld [vmem:[%s3 + $0x81c] sm:$0xf]
  %v2264 = vld [vmem:[%s3 + $0x820] sm:$0xff]
  %v2265 = vld [vmem:[%s3 + $0x828] sm:$0xff]
  %v2266 = vld [vmem:[%s3 + $0x830] sm:$0xff]
  %v2267 = vld [vmem:[%s3 + $0x838] sm:$0xff]
  %v2268 = vld [vmem:[%s3 + $0x840] sm:$0xff]
  %v2269 = vld [vmem:[%s3 + $0x848] sm:$0xff]
  %v2270 = vld [vmem:[%s3 + $0x850] sm:$0xf]
  %v2271 = vld [vmem:[%s3 + $0x854] sm:$0xff]
  %v2272 = vld [vmem:[%s3 + $0x85c] sm:$0xff]
  %v2273 = vld [vmem:[%s3 + $0x864] sm:$0xff]
  %v2274 = vld [vmem:[%s3 + $0x86c] sm:$0xff]
  %v2275 = vld [vmem:[%s3 + $0x874] sm:$0xff]
  %v2276 = vld [vmem:[%s3 + $0x87c] sm:$0xff]
  %v2277 = vld [vmem:[%s3 + $0x884] sm:$0xf]
  %v2278 = vld [vmem:[%s3 + $0x888] sm:$0xff]
  %v2279 = vld [vmem:[%s3 + $0x890] sm:$0xff]
  %v2280 = vld [vmem:[%s3 + $0x898] sm:$0xff]
  %v2281 = vld [vmem:[%s3 + $0x8a0] sm:$0xff]
  %v2282 = vld [vmem:[%s3 + $0x8a8] sm:$0xff]
  %v2283 = vld [vmem:[%s3 + $0x8b0] sm:$0xff]
  %v2284 = vld [vmem:[%s3 + $0x8b8] sm:$0xf]
  %v2285 = vld [vmem:[%s3 + $0x8bc] sm:$0xff]
  %v2286 = vld [vmem:[%s3 + $0x8c4] sm:$0xff]
  %v2287 = vld [vmem:[%s3 + $0x8cc] sm:$0xff]
  %v2288 = vld [vmem:[%s3 + $0x8d4] sm:$0xff]
  %v2289 = vld [vmem:[%s3 + $0x8dc] sm:$0xff]
  %v2290 = vld [vmem:[%s3 + $0x8e4] sm:$0xff]
  %v2291 = vld [vmem:[%s3 + $0x8ec] sm:$0xf]
  %v2292 = vld [vmem:[%s3 + $0x8f0] sm:$0xff]
  %v2293 = vld [vmem:[%s3 + $0x8f8] sm:$0xff]
  %v2294 = vld [vmem:[%s3 + $0x900] sm:$0xff]
  %v2295 = vld [vmem:[%s3 + $0x908] sm:$0xff]
  %v2296 = vld [vmem:[%s3 + $0x910] sm:$0xff]
  %v2297 = vld [vmem:[%s3 + $0x918] sm:$0xff]
  %v2298 = vld [vmem:[%s3 + $0x920] sm:$0xf]
  %v2299 = vld [vmem:[%s3 + $0x924] sm:$0xff]
  %v2300 = vld [vmem:[%s3 + $0x92c] sm:$0xff]
  %v2301 = vld [vmem:[%s3 + $0x934] sm:$0xff]
  %v2302 = vld [vmem:[%s3 + $0x93c] sm:$0xff]
  %v2303 = vld [vmem:[%s3 + $0x944] sm:$0xff]
  %v2304 = vld [vmem:[%s3 + $0x94c] sm:$0xff]
  %v2305 = vld [vmem:[%s3 + $0x954] sm:$0xf]
  %v2306 = vld [vmem:[%s3 + $0x958] sm:$0xff]
  %v2307 = vld [vmem:[%s3 + $0x960] sm:$0xff]
  %v2308 = vld [vmem:[%s3 + $0x968] sm:$0xff]
  %v2309 = vld [vmem:[%s3 + $0x970] sm:$0xff]
  %v2310 = vld [vmem:[%s3 + $0x978] sm:$0xff]
  %v2311 = vld [vmem:[%s3 + $0x980] sm:$0xff]
  %v2312 = vld [vmem:[%s3 + $0x988] sm:$0xf]
  %v2313 = vld [vmem:[%s3 + $0x98c] sm:$0xff]
  %v2314 = vld [vmem:[%s3 + $0x994] sm:$0xff]
  %v2315 = vld [vmem:[%s3 + $0x99c] sm:$0xff]
  %v2316 = vld [vmem:[%s3 + $0x9a4] sm:$0xff]
  %v2317 = vld [vmem:[%s3 + $0x9ac] sm:$0xff]
  %v2318 = vld [vmem:[%s3 + $0x9b4] sm:$0xff]
  %v2319 = vld [vmem:[%s3 + $0x9bc] sm:$0xf]
  %v2320 = vld [vmem:[%s3 + $0x9c0] sm:$0xff]
  %v2321 = vld [vmem:[%s3 + $0x9c8] sm:$0xff]
  %v2322 = vld [vmem:[%s3 + $0x9d0] sm:$0xff]
  %v2323 = vld [vmem:[%s3 + $0x9d8] sm:$0xff]
  %v2324 = vld [vmem:[%s3 + $0x9e0] sm:$0xff]
  %v2325 = vld [vmem:[%s3 + $0x9e8] sm:$0xff]
  %v2326 = vld [vmem:[%s3 + $0x9f0] sm:$0xf]
  %v2670 = vunpack.c.l.b16 %v1984
  %v2671 = vunpack.c.h.b16 %v1984
  %v2672 = vunpack.c.l.b16 %v1985
  %v2673 = vunpack.c.h.b16 %v1985
  %v2674 = vunpack.c.l.b16 %v1986
  %v2675 = vunpack.c.h.b16 %v1986
  %v2676 = vunpack.c.l.b16 %v1987
  %v2677 = vunpack.c.h.b16 %v1987
  %v2678 = vunpack.c.l.b16 %v1988
  %v2679 = vunpack.c.h.b16 %v1988
  %v2680 = vunpack.c.l.b16 %v1989
  %v2681 = vunpack.c.h.b16 %v1989
  %v2682 = vunpack.c.l.b16 %v1990
  %v2683 = vunpack.c.l.b16 %v1991
  %v2684 = vunpack.c.h.b16 %v1991
  %v2685 = vunpack.c.l.b16 %v1992
  %v2686 = vunpack.c.h.b16 %v1992
  %v2687 = vunpack.c.l.b16 %v1993
  %v2688 = vunpack.c.h.b16 %v1993
  %v2689 = vunpack.c.l.b16 %v1994
  %v2690 = vunpack.c.h.b16 %v1994
  %v2691 = vunpack.c.l.b16 %v1995
  %v2692 = vunpack.c.h.b16 %v1995
  %v2693 = vunpack.c.l.b16 %v1996
  %v2694 = vunpack.c.h.b16 %v1996
  %v2695 = vunpack.c.l.b16 %v1997
  %v2696 = vunpack.c.l.b16 %v1998
  %v2697 = vunpack.c.h.b16 %v1998
  %v2698 = vunpack.c.l.b16 %v1999
  %v2699 = vunpack.c.h.b16 %v1999
  %v2700 = vunpack.c.l.b16 %v2000
  %v2701 = vunpack.c.h.b16 %v2000
  %v2702 = vunpack.c.l.b16 %v2001
  %v2703 = vunpack.c.h.b16 %v2001
  %v2704 = vunpack.c.l.b16 %v2002
  %v2705 = vunpack.c.h.b16 %v2002
  %v2706 = vunpack.c.l.b16 %v2003
  %v2707 = vunpack.c.h.b16 %v2003
  %v2708 = vunpack.c.l.b16 %v2004
  %v2709 = vunpack.c.l.b16 %v2005
  %v2710 = vunpack.c.h.b16 %v2005
  %v2711 = vunpack.c.l.b16 %v2006
  %v2712 = vunpack.c.h.b16 %v2006
  %v2713 = vunpack.c.l.b16 %v2007
  %v2714 = vunpack.c.h.b16 %v2007
  %v2715 = vunpack.c.l.b16 %v2008
  %v2716 = vunpack.c.h.b16 %v2008
  %v2717 = vunpack.c.l.b16 %v2009
  %v2718 = vunpack.c.h.b16 %v2009
  %v2719 = vunpack.c.l.b16 %v2010
  %v2720 = vunpack.c.h.b16 %v2010
  %v2721 = vunpack.c.l.b16 %v2011
  %v2722 = vunpack.c.l.b16 %v2012
  %v2723 = vunpack.c.h.b16 %v2012
  %v2724 = vunpack.c.l.b16 %v2013
  %v2725 = vunpack.c.h.b16 %v2013
  %v2726 = vunpack.c.l.b16 %v2014
  %v2727 = vunpack.c.h.b16 %v2014
  %v2728 = vunpack.c.l.b16 %v2015
  %v2729 = vunpack.c.h.b16 %v2015
  %v2730 = vunpack.c.l.b16 %v2016
  %v2731 = vunpack.c.h.b16 %v2016
  %v2732 = vunpack.c.l.b16 %v2017
  %v2733 = vunpack.c.h.b16 %v2017
  %v2734 = vunpack.c.l.b16 %v2018
  %v2735 = vunpack.c.l.b16 %v2019
  %v2736 = vunpack.c.h.b16 %v2019
  %v2737 = vunpack.c.l.b16 %v2020
  %v2738 = vunpack.c.h.b16 %v2020
  %v2739 = vunpack.c.l.b16 %v2021
  %v2740 = vunpack.c.h.b16 %v2021
  %v2741 = vunpack.c.l.b16 %v2022
  %v2742 = vunpack.c.h.b16 %v2022
  %v2743 = vunpack.c.l.b16 %v2023
  %v2744 = vunpack.c.h.b16 %v2023
  %v2745 = vunpack.c.l.b16 %v2024
  %v2746 = vunpack.c.h.b16 %v2024
  %v2747 = vunpack.c.l.b16 %v2025
  %v2748 = vunpack.c.l.b16 %v2026
  %v2749 = vunpack.c.h.b16 %v2026
  %v2750 = vunpack.c.l.b16 %v2027
  %v2751 = vunpack.c.h.b16 %v2027
  %v2752 = vunpack.c.l.b16 %v2028
  %v2753 = vunpack.c.h.b16 %v2028
  %v2754 = vunpack.c.l.b16 %v2029
  %v2755 = vunpack.c.h.b16 %v2029
  %v2756 = vunpack.c.l.b16 %v2030
  %v2757 = vunpack.c.h.b16 %v2030
  %v2758 = vunpack.c.l.b16 %v2031
  %v2759 = vunpack.c.h.b16 %v2031
  %v2760 = vunpack.c.l.b16 %v2032
  %v2761 = vunpack.c.l.b16 %v2033
  %v2762 = vunpack.c.h.b16 %v2033
  %v2763 = vunpack.c.l.b16 %v2034
  %v2764 = vunpack.c.h.b16 %v2034
  %v2765 = vunpack.c.l.b16 %v2035
  %v2766 = vunpack.c.h.b16 %v2035
  %v2767 = vunpack.c.l.b16 %v2036
  %v2768 = vunpack.c.h.b16 %v2036
  %v2769 = vunpack.c.l.b16 %v2037
  %v2770 = vunpack.c.h.b16 %v2037
  %v2771 = vunpack.c.l.b16 %v2038
  %v2772 = vunpack.c.h.b16 %v2038
  %v2773 = vunpack.c.l.b16 %v2039
  %v2774 = vunpack.c.l.b16 %v2040
  %v2775 = vunpack.c.h.b16 %v2040
  %v2776 = vunpack.c.l.b16 %v2041
  %v2777 = vunpack.c.h.b16 %v2041
  %v2778 = vunpack.c.l.b16 %v2042
  %v2779 = vunpack.c.h.b16 %v2042
  %v2780 = vunpack.c.l.b16 %v2043
  %v2781 = vunpack.c.h.b16 %v2043
  %v2782 = vunpack.c.l.b16 %v2044
  %v2783 = vunpack.c.h.b16 %v2044
  %v2784 = vunpack.c.l.b16 %v2045
  %v2785 = vunpack.c.h.b16 %v2045
  %v2786 = vunpack.c.l.b16 %v2046
  %v2787 = vunpack.c.l.b16 %v2047
  %v2788 = vunpack.c.h.b16 %v2047
  %v2789 = vunpack.c.l.b16 %v2048
  %v2790 = vunpack.c.h.b16 %v2048
  %v2791 = vunpack.c.l.b16 %v2049
  %v2792 = vunpack.c.h.b16 %v2049
  %v2793 = vunpack.c.l.b16 %v2050
  %v2794 = vunpack.c.h.b16 %v2050
  %v2795 = vunpack.c.l.b16 %v2051
  %v2796 = vunpack.c.h.b16 %v2051
  %v2797 = vunpack.c.l.b16 %v2052
  %v2798 = vunpack.c.h.b16 %v2052
  %v2799 = vunpack.c.l.b16 %v2053
  %v2800 = vunpack.c.l.b16 %v2054
  %v2801 = vunpack.c.h.b16 %v2054
  %v2802 = vunpack.c.l.b16 %v2055
  %v2803 = vunpack.c.h.b16 %v2055
  %v2804 = vunpack.c.l.b16 %v2056
  %v2805 = vunpack.c.h.b16 %v2056
  %v2806 = vunpack.c.l.b16 %v2057
  %v2807 = vunpack.c.h.b16 %v2057
  %v2808 = vunpack.c.l.b16 %v2058
  %v2809 = vunpack.c.h.b16 %v2058
  %v2810 = vunpack.c.l.b16 %v2059
  %v2811 = vunpack.c.h.b16 %v2059
  %v2812 = vunpack.c.l.b16 %v2060
  %v2813 = vunpack.c.l.b16 %v2061
  %v2814 = vunpack.c.h.b16 %v2061
  %v2815 = vunpack.c.l.b16 %v2062
  %v2816 = vunpack.c.h.b16 %v2062
  %v2817 = vunpack.c.l.b16 %v2063
  %v2818 = vunpack.c.h.b16 %v2063
  %v2819 = vunpack.c.l.b16 %v2064
  %v2820 = vunpack.c.h.b16 %v2064
  %v2821 = vunpack.c.l.b16 %v2065
  %v2822 = vunpack.c.h.b16 %v2065
  %v2823 = vunpack.c.l.b16 %v2066
  %v2824 = vunpack.c.h.b16 %v2066
  %v2825 = vunpack.c.l.b16 %v2067
  %v2826 = vunpack.c.l.b16 %v2068
  %v2827 = vunpack.c.h.b16 %v2068
  %v2828 = vunpack.c.l.b16 %v2069
  %v2829 = vunpack.c.h.b16 %v2069
  %v2830 = vunpack.c.l.b16 %v2070
  %v2831 = vunpack.c.h.b16 %v2070
  %v2832 = vunpack.c.l.b16 %v2071
  %v2833 = vunpack.c.h.b16 %v2071
  %v2834 = vunpack.c.l.b16 %v2072
  %v2835 = vunpack.c.h.b16 %v2072
  %v2836 = vunpack.c.l.b16 %v2073
  %v2837 = vunpack.c.h.b16 %v2073
  %v2838 = vunpack.c.l.b16 %v2074
  %v2839 = vunpack.c.l.b16 %v2075
  %v2840 = vunpack.c.h.b16 %v2075
  %v2841 = vunpack.c.l.b16 %v2076
  %v2842 = vunpack.c.h.b16 %v2076
  %v2843 = vunpack.c.l.b16 %v2077
  %v2844 = vunpack.c.h.b16 %v2077
  %v2845 = vunpack.c.l.b16 %v2078
  %v2846 = vunpack.c.h.b16 %v2078
  %v2847 = vunpack.c.l.b16 %v2079
  %v2848 = vunpack.c.h.b16 %v2079
  %v2849 = vunpack.c.l.b16 %v2080
  %v2850 = vunpack.c.h.b16 %v2080
  %v2851 = vunpack.c.l.b16 %v2081
  %v2852 = vunpack.c.l.b16 %v2082
  %v2853 = vunpack.c.h.b16 %v2082
  %v2854 = vunpack.c.l.b16 %v2083
  %v2855 = vunpack.c.h.b16 %v2083
  %v2856 = vunpack.c.l.b16 %v2084
  %v2857 = vunpack.c.h.b16 %v2084
  %v2858 = vunpack.c.l.b16 %v2085
  %v2859 = vunpack.c.h.b16 %v2085
  %v2860 = vunpack.c.l.b16 %v2086
  %v2861 = vunpack.c.h.b16 %v2086
  %v2862 = vunpack.c.l.b16 %v2087
  %v2863 = vunpack.c.h.b16 %v2087
  %v2864 = vunpack.c.l.b16 %v2088
  %v2865 = vunpack.c.l.b16 %v2089
  %v2866 = vunpack.c.h.b16 %v2089
  %v2867 = vunpack.c.l.b16 %v2090
  %v2868 = vunpack.c.h.b16 %v2090
  %v2869 = vunpack.c.l.b16 %v2091
  %v2870 = vunpack.c.h.b16 %v2091
  %v2871 = vunpack.c.l.b16 %v2092
  %v2872 = vunpack.c.h.b16 %v2092
  %v2873 = vunpack.c.l.b16 %v2093
  %v2874 = vunpack.c.h.b16 %v2093
  %v2875 = vunpack.c.l.b16 %v2094
  %v2876 = vunpack.c.h.b16 %v2094
  %v2877 = vunpack.c.l.b16 %v2095
  %v2878 = vunpack.c.l.b16 %v2096
  %v2879 = vunpack.c.h.b16 %v2096
  %v2880 = vunpack.c.l.b16 %v2097
  %v2881 = vunpack.c.h.b16 %v2097
  %v2882 = vunpack.c.l.b16 %v2098
  %v2883 = vunpack.c.h.b16 %v2098
  %v2884 = vunpack.c.l.b16 %v2099
  %v2885 = vunpack.c.h.b16 %v2099
  %v2886 = vunpack.c.l.b16 %v2100
  %v2887 = vunpack.c.h.b16 %v2100
  %v2888 = vunpack.c.l.b16 %v2101
  %v2889 = vunpack.c.h.b16 %v2101
  %v2890 = vunpack.c.l.b16 %v2102
  %v2891 = vunpack.c.l.b16 %v2103
  %v2892 = vunpack.c.h.b16 %v2103
  %v2893 = vunpack.c.l.b16 %v2104
  %v2894 = vunpack.c.h.b16 %v2104
  %v2895 = vunpack.c.l.b16 %v2105
  %v2896 = vunpack.c.h.b16 %v2105
  %v2897 = vunpack.c.l.b16 %v2106
  %v2898 = vunpack.c.h.b16 %v2106
  %v2899 = vunpack.c.l.b16 %v2107
  %v2900 = vunpack.c.h.b16 %v2107
  %v2901 = vunpack.c.l.b16 %v2108
  %v2902 = vunpack.c.h.b16 %v2108
  %v2903 = vunpack.c.l.b16 %v2109
  %v2904 = vunpack.c.l.b16 %v2110
  %v2905 = vunpack.c.h.b16 %v2110
  %v2906 = vunpack.c.l.b16 %v2111
  %v2907 = vunpack.c.h.b16 %v2111
  %v2908 = vunpack.c.l.b16 %v2112
  %v2909 = vunpack.c.h.b16 %v2112
  %v2910 = vunpack.c.l.b16 %v2113
  %v2911 = vunpack.c.h.b16 %v2113
  %v2912 = vunpack.c.l.b16 %v2114
  %v2913 = vunpack.c.h.b16 %v2114
  %v2914 = vunpack.c.l.b16 %v2115
  %v2915 = vunpack.c.h.b16 %v2115
  %v2916 = vunpack.c.l.b16 %v2116
  %v2917 = vunpack.c.l.b16 %v2117
  %v2918 = vunpack.c.h.b16 %v2117
  %v2919 = vunpack.c.l.b16 %v2118
  %v2920 = vunpack.c.h.b16 %v2118
  %v2921 = vunpack.c.l.b16 %v2119
  %v2922 = vunpack.c.h.b16 %v2119
  %v2923 = vunpack.c.l.b16 %v2120
  %v2924 = vunpack.c.h.b16 %v2120
  %v2925 = vunpack.c.l.b16 %v2121
  %v2926 = vunpack.c.h.b16 %v2121
  %v2927 = vunpack.c.l.b16 %v2122
  %v2928 = vunpack.c.h.b16 %v2122
  %v2929 = vunpack.c.l.b16 %v2123
  %v2930 = vunpack.c.l.b16 %v2124
  %v2931 = vunpack.c.h.b16 %v2124
  %v2932 = vunpack.c.l.b16 %v2125
  %v2933 = vunpack.c.h.b16 %v2125
  %v2934 = vunpack.c.l.b16 %v2126
  %v2935 = vunpack.c.h.b16 %v2126
  %v2936 = vunpack.c.l.b16 %v2127
  %v2937 = vunpack.c.h.b16 %v2127
  %v2938 = vunpack.c.l.b16 %v2128
  %v2939 = vunpack.c.h.b16 %v2128
  %v2940 = vunpack.c.l.b16 %v2129
  %v2941 = vunpack.c.h.b16 %v2129
  %v2942 = vunpack.c.l.b16 %v2130
  %v2943 = vunpack.c.l.b16 %v2131
  %v2944 = vunpack.c.h.b16 %v2131
  %v2945 = vunpack.c.l.b16 %v2132
  %v2946 = vunpack.c.h.b16 %v2132
  %v2947 = vunpack.c.l.b16 %v2133
  %v2948 = vunpack.c.h.b16 %v2133
  %v2949 = vunpack.c.l.b16 %v2134
  %v2950 = vunpack.c.h.b16 %v2134
  %v2951 = vunpack.c.l.b16 %v2135
  %v2952 = vunpack.c.h.b16 %v2135
  %v2953 = vunpack.c.l.b16 %v2136
  %v2954 = vunpack.c.h.b16 %v2136
  %v2955 = vunpack.c.l.b16 %v2137
  %v2956 = vunpack.c.l.b16 %v2138
  %v2957 = vunpack.c.h.b16 %v2138
  %v2958 = vunpack.c.l.b16 %v2139
  %v2959 = vunpack.c.h.b16 %v2139
  %v2960 = vunpack.c.l.b16 %v2140
  %v2961 = vunpack.c.h.b16 %v2140
  %v2962 = vunpack.c.l.b16 %v2141
  %v2963 = vunpack.c.h.b16 %v2141
  %v2964 = vunpack.c.l.b16 %v2142
  %v2965 = vunpack.c.h.b16 %v2142
  %v2966 = vunpack.c.l.b16 %v2143
  %v2967 = vunpack.c.h.b16 %v2143
  %v2968 = vunpack.c.l.b16 %v2144
  %v2969 = vunpack.c.l.b16 %v2145
  %v2970 = vunpack.c.h.b16 %v2145
  %v2971 = vunpack.c.l.b16 %v2146
  %v2972 = vunpack.c.h.b16 %v2146
  %v2973 = vunpack.c.l.b16 %v2147
  %v2974 = vunpack.c.h.b16 %v2147
  %v2975 = vunpack.c.l.b16 %v2148
  %v2976 = vunpack.c.h.b16 %v2148
  %v2977 = vunpack.c.l.b16 %v2149
  %v2978 = vunpack.c.h.b16 %v2149
  %v2979 = vunpack.c.l.b16 %v2150
  %v2980 = vunpack.c.h.b16 %v2150
  %v2981 = vunpack.c.l.b16 %v2151
  %v2982 = vunpack.c.l.b16 %v2152
  %v2983 = vunpack.c.h.b16 %v2152
  %v2984 = vunpack.c.l.b16 %v2153
  %v2985 = vunpack.c.h.b16 %v2153
  %v2986 = vunpack.c.l.b16 %v2154
  %v2987 = vunpack.c.h.b16 %v2154
  %v2988 = vunpack.c.l.b16 %v2155
  %v2989 = vunpack.c.h.b16 %v2155
  %v2990 = vunpack.c.l.b16 %v2156
  %v2991 = vunpack.c.h.b16 %v2156
  %v2992 = vunpack.c.l.b16 %v2157
  %v2993 = vunpack.c.h.b16 %v2157
  %v2994 = vunpack.c.l.b16 %v2158
  %v2995 = vunpack.c.l.b16 %v2159
  %v2996 = vunpack.c.h.b16 %v2159
  %v2997 = vunpack.c.l.b16 %v2160
  %v2998 = vunpack.c.h.b16 %v2160
  %v2999 = vunpack.c.l.b16 %v2161
  %v3000 = vunpack.c.h.b16 %v2161
  %v3001 = vunpack.c.l.b16 %v2162
  %v3002 = vunpack.c.h.b16 %v2162
  %v3003 = vunpack.c.l.b16 %v2163
  %v3004 = vunpack.c.h.b16 %v2163
  %v3005 = vunpack.c.l.b16 %v2164
  %v3006 = vunpack.c.h.b16 %v2164
  %v3007 = vunpack.c.l.b16 %v2165
  %v3008 = vunpack.c.l.b16 %v2166
  %v3009 = vunpack.c.h.b16 %v2166
  %v3010 = vunpack.c.l.b16 %v2167
  %v3011 = vunpack.c.h.b16 %v2167
  %v3012 = vunpack.c.l.b16 %v2168
  %v3013 = vunpack.c.h.b16 %v2168
  %v3014 = vunpack.c.l.b16 %v2169
  %v3015 = vunpack.c.h.b16 %v2169
  %v3016 = vunpack.c.l.b16 %v2170
  %v3017 = vunpack.c.h.b16 %v2170
  %v3018 = vunpack.c.l.b16 %v2171
  %v3019 = vunpack.c.h.b16 %v2171
  %v3020 = vunpack.c.l.b16 %v2172
  %v3021 = vunpack.c.l.b16 %v2173
  %v3022 = vunpack.c.h.b16 %v2173
  %v3023 = vunpack.c.l.b16 %v2174
  %v3024 = vunpack.c.h.b16 %v2174
  %v3025 = vunpack.c.l.b16 %v2175
  %v3026 = vunpack.c.h.b16 %v2175
  %v3027 = vunpack.c.l.b16 %v2176
  %v3028 = vunpack.c.h.b16 %v2176
  %v3029 = vunpack.c.l.b16 %v2177
  %v3030 = vunpack.c.h.b16 %v2177
  %v3031 = vunpack.c.l.b16 %v2178
  %v3032 = vunpack.c.h.b16 %v2178
  %v3033 = vunpack.c.l.b16 %v2179
  %v3034 = vunpack.c.l.b16 %v2180
  %v3035 = vunpack.c.h.b16 %v2180
  %v3036 = vunpack.c.l.b16 %v2181
  %v3037 = vunpack.c.h.b16 %v2181
  %v3038 = vunpack.c.l.b16 %v2182
  %v3039 = vunpack.c.h.b16 %v2182
  %v3040 = vunpack.c.l.b16 %v2183
  %v3041 = vunpack.c.h.b16 %v2183
  %v3042 = vunpack.c.l.b16 %v2184
  %v3043 = vunpack.c.h.b16 %v2184
  %v3044 = vunpack.c.l.b16 %v2185
  %v3045 = vunpack.c.h.b16 %v2185
  %v3046 = vunpack.c.l.b16 %v2186
  %v3047 = vunpack.c.l.b16 %v2187
  %v3048 = vunpack.c.h.b16 %v2187
  %v3049 = vunpack.c.l.b16 %v2188
  %v3050 = vunpack.c.h.b16 %v2188
  %v3051 = vunpack.c.l.b16 %v2189
  %v3052 = vunpack.c.h.b16 %v2189
  %v3053 = vunpack.c.l.b16 %v2190
  %v3054 = vunpack.c.h.b16 %v2190
  %v3055 = vunpack.c.l.b16 %v2191
  %v3056 = vunpack.c.h.b16 %v2191
  %v3057 = vunpack.c.l.b16 %v2192
  %v3058 = vunpack.c.h.b16 %v2192
  %v3059 = vunpack.c.l.b16 %v2193
  %v3060 = vunpack.c.l.b16 %v2194
  %v3061 = vunpack.c.h.b16 %v2194
  %v3062 = vunpack.c.l.b16 %v2195
  %v3063 = vunpack.c.h.b16 %v2195
  %v3064 = vunpack.c.l.b16 %v2196
  %v3065 = vunpack.c.h.b16 %v2196
  %v3066 = vunpack.c.l.b16 %v2197
  %v3067 = vunpack.c.h.b16 %v2197
  %v3068 = vunpack.c.l.b16 %v2198
  %v3069 = vunpack.c.h.b16 %v2198
  %v3070 = vunpack.c.l.b16 %v2199
  %v3071 = vunpack.c.h.b16 %v2199
  %v3072 = vunpack.c.l.b16 %v2200
  %v3073 = vunpack.c.l.b16 %v2201
  %v3074 = vunpack.c.h.b16 %v2201
  %v3075 = vunpack.c.l.b16 %v2202
  %v3076 = vunpack.c.h.b16 %v2202
  %v3077 = vunpack.c.l.b16 %v2203
  %v3078 = vunpack.c.h.b16 %v2203
  %v3079 = vunpack.c.l.b16 %v2204
  %v3080 = vunpack.c.h.b16 %v2204
  %v3081 = vunpack.c.l.b16 %v2205
  %v3082 = vunpack.c.h.b16 %v2205
  %v3083 = vunpack.c.l.b16 %v2206
  %v3084 = vunpack.c.h.b16 %v2206
  %v3085 = vunpack.c.l.b16 %v2207
  %v3086 = vunpack.c.l.b16 %v2208
  %v3087 = vunpack.c.h.b16 %v2208
  %v3088 = vunpack.c.l.b16 %v2209
  %v3089 = vunpack.c.h.b16 %v2209
  %v3090 = vunpack.c.l.b16 %v2210
  %v3091 = vunpack.c.h.b16 %v2210
  %v3092 = vunpack.c.l.b16 %v2211
  %v3093 = vunpack.c.h.b16 %v2211
  %v3094 = vunpack.c.l.b16 %v2212
  %v3095 = vunpack.c.h.b16 %v2212
  %v3096 = vunpack.c.l.b16 %v2213
  %v3097 = vunpack.c.h.b16 %v2213
  %v3098 = vunpack.c.l.b16 %v2214
  %v3099 = vunpack.c.l.b16 %v2215
  %v3100 = vunpack.c.h.b16 %v2215
  %v3101 = vunpack.c.l.b16 %v2216
  %v3102 = vunpack.c.h.b16 %v2216
  %v3103 = vunpack.c.l.b16 %v2217
  %v3104 = vunpack.c.h.b16 %v2217
  %v3105 = vunpack.c.l.b16 %v2218
  %v3106 = vunpack.c.h.b16 %v2218
  %v3107 = vunpack.c.l.b16 %v2219
  %v3108 = vunpack.c.h.b16 %v2219
  %v3109 = vunpack.c.l.b16 %v2220
  %v3110 = vunpack.c.h.b16 %v2220
  %v3111 = vunpack.c.l.b16 %v2221
  %v3112 = vunpack.c.l.b16 %v2222
  %v3113 = vunpack.c.h.b16 %v2222
  %v3114 = vunpack.c.l.b16 %v2223
  %v3115 = vunpack.c.h.b16 %v2223
  %v3116 = vunpack.c.l.b16 %v2224
  %v3117 = vunpack.c.h.b16 %v2224
  %v3118 = vunpack.c.l.b16 %v2225
  %v3119 = vunpack.c.h.b16 %v2225
  %v3120 = vunpack.c.l.b16 %v2226
  %v3121 = vunpack.c.h.b16 %v2226
  %v3122 = vunpack.c.l.b16 %v2227
  %v3123 = vunpack.c.h.b16 %v2227
  %v3124 = vunpack.c.l.b16 %v2228
  %v3125 = vunpack.c.l.b16 %v2229
  %v3126 = vunpack.c.h.b16 %v2229
  %v3127 = vunpack.c.l.b16 %v2230
  %v3128 = vunpack.c.h.b16 %v2230
  %v3129 = vunpack.c.l.b16 %v2231
  %v3130 = vunpack.c.h.b16 %v2231
  %v3131 = vunpack.c.l.b16 %v2232
  %v3132 = vunpack.c.h.b16 %v2232
  %v3133 = vunpack.c.l.b16 %v2233
  %v3134 = vunpack.c.h.b16 %v2233
  %v3135 = vunpack.c.l.b16 %v2234
  %v3136 = vunpack.c.h.b16 %v2234
  %v3137 = vunpack.c.l.b16 %v2235
  %v3138 = vunpack.c.l.b16 %v2236
  %v3139 = vunpack.c.h.b16 %v2236
  %v3140 = vunpack.c.l.b16 %v2237
  %v3141 = vunpack.c.h.b16 %v2237
  %v3142 = vunpack.c.l.b16 %v2238
  %v3143 = vunpack.c.h.b16 %v2238
  %v3144 = vunpack.c.l.b16 %v2239
  %v3145 = vunpack.c.h.b16 %v2239
  %v3146 = vunpack.c.l.b16 %v2240
  %v3147 = vunpack.c.h.b16 %v2240
  %v3148 = vunpack.c.l.b16 %v2241
  %v3149 = vunpack.c.h.b16 %v2241
  %v3150 = vunpack.c.l.b16 %v2242
  %v3151 = vunpack.c.l.b16 %v2243
  %v3152 = vunpack.c.h.b16 %v2243
  %v3153 = vunpack.c.l.b16 %v2244
  %v3154 = vunpack.c.h.b16 %v2244
  %v3155 = vunpack.c.l.b16 %v2245
  %v3156 = vunpack.c.h.b16 %v2245
  %v3157 = vunpack.c.l.b16 %v2246
  %v3158 = vunpack.c.h.b16 %v2246
  %v3159 = vunpack.c.l.b16 %v2247
  %v3160 = vunpack.c.h.b16 %v2247
  %v3161 = vunpack.c.l.b16 %v2248
  %v3162 = vunpack.c.h.b16 %v2248
  %v3163 = vunpack.c.l.b16 %v2249
  %v3164 = vunpack.c.l.b16 %v2250
  %v3165 = vunpack.c.h.b16 %v2250
  %v3166 = vunpack.c.l.b16 %v2251
  %v3167 = vunpack.c.h.b16 %v2251
  %v3168 = vunpack.c.l.b16 %v2252
  %v3169 = vunpack.c.h.b16 %v2252
  %v3170 = vunpack.c.l.b16 %v2253
  %v3171 = vunpack.c.h.b16 %v2253
  %v3172 = vunpack.c.l.b16 %v2254
  %v3173 = vunpack.c.h.b16 %v2254
  %v3174 = vunpack.c.l.b16 %v2255
  %v3175 = vunpack.c.h.b16 %v2255
  %v3176 = vunpack.c.l.b16 %v2256
  %v3177 = vunpack.c.l.b16 %v2257
  %v3178 = vunpack.c.h.b16 %v2257
  %v3179 = vunpack.c.l.b16 %v2258
  %v3180 = vunpack.c.h.b16 %v2258
  %v3181 = vunpack.c.l.b16 %v2259
  %v3182 = vunpack.c.h.b16 %v2259
  %v3183 = vunpack.c.l.b16 %v2260
  %v3184 = vunpack.c.h.b16 %v2260
  %v3185 = vunpack.c.l.b16 %v2261
  %v3186 = vunpack.c.h.b16 %v2261
  %v3187 = vunpack.c.l.b16 %v2262
  %v3188 = vunpack.c.h.b16 %v2262
  %v3189 = vunpack.c.l.b16 %v2263
  %v3190 = vunpack.c.l.b16 %v2264
  %v3191 = vunpack.c.h.b16 %v2264
  %v3192 = vunpack.c.l.b16 %v2265
  %v3193 = vunpack.c.h.b16 %v2265
  %v3194 = vunpack.c.l.b16 %v2266
  %v3195 = vunpack.c.h.b16 %v2266
  %v3196 = vunpack.c.l.b16 %v2267
  %v3197 = vunpack.c.h.b16 %v2267
  %v3198 = vunpack.c.l.b16 %v2268
  %v3199 = vunpack.c.h.b16 %v2268
  %v3200 = vunpack.c.l.b16 %v2269
  %v3201 = vunpack.c.h.b16 %v2269
  %v3202 = vunpack.c.l.b16 %v2270
  %v3203 = vunpack.c.l.b16 %v2271
  %v3204 = vunpack.c.h.b16 %v2271
  %v3205 = vunpack.c.l.b16 %v2272
  %v3206 = vunpack.c.h.b16 %v2272
  %v3207 = vunpack.c.l.b16 %v2273
  %v3208 = vunpack.c.h.b16 %v2273
  %v3209 = vunpack.c.l.b16 %v2274
  %v3210 = vunpack.c.h.b16 %v2274
  %v3211 = vunpack.c.l.b16 %v2275
  %v3212 = vunpack.c.h.b16 %v2275
  %v3213 = vunpack.c.l.b16 %v2276
  %v3214 = vunpack.c.h.b16 %v2276
  %v3215 = vunpack.c.l.b16 %v2277
  %v3216 = vunpack.c.l.b16 %v2278
  %v3217 = vunpack.c.h.b16 %v2278
  %v3218 = vunpack.c.l.b16 %v2279
  %v3219 = vunpack.c.h.b16 %v2279
  %v3220 = vunpack.c.l.b16 %v2280
  %v3221 = vunpack.c.h.b16 %v2280
  %v3222 = vunpack.c.l.b16 %v2281
  %v3223 = vunpack.c.h.b16 %v2281
  %v3224 = vunpack.c.l.b16 %v2282
  %v3225 = vunpack.c.h.b16 %v2282
  %v3226 = vunpack.c.l.b16 %v2283
  %v3227 = vunpack.c.h.b16 %v2283
  %v3228 = vunpack.c.l.b16 %v2284
  %v3229 = vunpack.c.l.b16 %v2285
  %v3230 = vunpack.c.h.b16 %v2285
  %v3231 = vunpack.c.l.b16 %v2286
  %v3232 = vunpack.c.h.b16 %v2286
  %v3233 = vunpack.c.l.b16 %v2287
  %v3234 = vunpack.c.h.b16 %v2287
  %v3235 = vunpack.c.l.b16 %v2288
  %v3236 = vunpack.c.h.b16 %v2288
  %v3237 = vunpack.c.l.b16 %v2289
  %v3238 = vunpack.c.h.b16 %v2289
  %v3239 = vunpack.c.l.b16 %v2290
  %v3240 = vunpack.c.h.b16 %v2290
  %v3241 = vunpack.c.l.b16 %v2291
  %v3242 = vunpack.c.l.b16 %v2292
  %v3243 = vunpack.c.h.b16 %v2292
  %v3244 = vunpack.c.l.b16 %v2293
  %v3245 = vunpack.c.h.b16 %v2293
  %v3246 = vunpack.c.l.b16 %v2294
  %v3247 = vunpack.c.h.b16 %v2294
  %v3248 = vunpack.c.l.b16 %v2295
  %v3249 = vunpack.c.h.b16 %v2295
  %v3250 = vunpack.c.l.b16 %v2296
  %v3251 = vunpack.c.h.b16 %v2296
  %v3252 = vunpack.c.l.b16 %v2297
  %v3253 = vunpack.c.h.b16 %v2297
  %v3254 = vunpack.c.l.b16 %v2298
  %v3255 = vunpack.c.l.b16 %v2299
  %v3256 = vunpack.c.h.b16 %v2299
  %v3257 = vunpack.c.l.b16 %v2300
  %v3258 = vunpack.c.h.b16 %v2300
  %v3259 = vunpack.c.l.b16 %v2301
  %v3260 = vunpack.c.h.b16 %v2301
  %v3261 = vunpack.c.l.b16 %v2302
  %v3262 = vunpack.c.h.b16 %v2302
  %v3263 = vunpack.c.l.b16 %v2303
  %v3264 = vunpack.c.h.b16 %v2303
  %v3265 = vunpack.c.l.b16 %v2304
  %v3266 = vunpack.c.h.b16 %v2304
  %v3267 = vunpack.c.l.b16 %v2305
  %v3268 = vunpack.c.l.b16 %v2306
  %v3269 = vunpack.c.h.b16 %v2306
  %v3270 = vunpack.c.l.b16 %v2307
  %v3271 = vunpack.c.h.b16 %v2307
  %v3272 = vunpack.c.l.b16 %v2308
  %v3273 = vunpack.c.h.b16 %v2308
  %v3274 = vunpack.c.l.b16 %v2309
  %v3275 = vunpack.c.h.b16 %v2309
  %v3276 = vunpack.c.l.b16 %v2310
  %v3277 = vunpack.c.h.b16 %v2310
  %v3278 = vunpack.c.l.b16 %v2311
  %v3279 = vunpack.c.h.b16 %v2311
  %v3280 = vunpack.c.l.b16 %v2312
  %v3281 = vunpack.c.l.b16 %v2313
  %v3282 = vunpack.c.h.b16 %v2313
  %v3283 = vunpack.c.l.b16 %v2314
  %v3284 = vunpack.c.h.b16 %v2314
  %v3285 = vunpack.c.l.b16 %v2315
  %v3286 = vunpack.c.h.b16 %v2315
  %v3287 = vunpack.c.l.b16 %v2316
  %v3288 = vunpack.c.h.b16 %v2316
  %v3289 = vunpack.c.l.b16 %v2317
  %v3290 = vunpack.c.h.b16 %v2317
  %v3291 = vunpack.c.l.b16 %v2318
  %v3292 = vunpack.c.h.b16 %v2318
  %v3293 = vunpack.c.l.b16 %v2319
  %v3294 = vunpack.c.l.b16 %v2320
  %v3295 = vunpack.c.h.b16 %v2320
  %v3296 = vunpack.c.l.b16 %v2321
  %v3297 = vunpack.c.h.b16 %v2321
  %v3298 = vunpack.c.l.b16 %v2322
  %v3299 = vunpack.c.h.b16 %v2322
  %v3300 = vunpack.c.l.b16 %v2323
  %v3301 = vunpack.c.h.b16 %v2323
  %v3302 = vunpack.c.l.b16 %v2324
  %v3303 = vunpack.c.h.b16 %v2324
  %v3304 = vunpack.c.l.b16 %v2325
  %v3305 = vunpack.c.h.b16 %v2325
  %v3306 = vunpack.c.l.b16 %v2326
  %v3307 = vpack.c.b16 %v2683, %v2670
  %v3308 = vpack.c.b16 %v2684, %v2671
  %v3309 = vpack.c.b16 %v2685, %v2672
  %v3310 = vpack.c.b16 %v2686, %v2673
  %v3311 = vpack.c.b16 %v2687, %v2674
  %v3312 = vpack.c.b16 %v2688, %v2675
  %v3313 = vpack.c.b16 %v2689, %v2676
  %v3314 = vpack.c.b16 %v2690, %v2677
  %v3315 = vpack.c.b16 %v2691, %v2678
  %v3316 = vpack.c.b16 %v2692, %v2679
  %v3317 = vpack.c.b16 %v2693, %v2680
  %v3318 = vpack.c.b16 %v2694, %v2681
  %v3319 = vpack.c.b16 %v2695, %v2682
  %v3320 = vpack.c.b16 %v2709, %v2696
  %v3321 = vpack.c.b16 %v2710, %v2697
  %v3322 = vpack.c.b16 %v2711, %v2698
  %v3323 = vpack.c.b16 %v2712, %v2699
  %v3324 = vpack.c.b16 %v2713, %v2700
  %v3325 = vpack.c.b16 %v2714, %v2701
  %v3326 = vpack.c.b16 %v2715, %v2702
  %v3327 = vpack.c.b16 %v2716, %v2703
  %v3328 = vpack.c.b16 %v2717, %v2704
  %v3329 = vpack.c.b16 %v2718, %v2705
  %v3330 = vpack.c.b16 %v2719, %v2706
  %v3331 = vpack.c.b16 %v2720, %v2707
  %v3332 = vpack.c.b16 %v2721, %v2708
  %v3333 = vpack.c.b16 %v2735, %v2722
  %v3334 = vpack.c.b16 %v2736, %v2723
  %v3335 = vpack.c.b16 %v2737, %v2724
  %v3336 = vpack.c.b16 %v2738, %v2725
  %v3337 = vpack.c.b16 %v2739, %v2726
  %v3338 = vpack.c.b16 %v2740, %v2727
  %v3339 = vpack.c.b16 %v2741, %v2728
  %v3340 = vpack.c.b16 %v2742, %v2729
  %v3341 = vpack.c.b16 %v2743, %v2730
  %v3342 = vpack.c.b16 %v2744, %v2731
  %v3343 = vpack.c.b16 %v2745, %v2732
  %v3344 = vpack.c.b16 %v2746, %v2733
  %v3345 = vpack.c.b16 %v2747, %v2734
  %v3346 = vpack.c.b16 %v2761, %v2748
  %v3347 = vpack.c.b16 %v2762, %v2749
  %v3348 = vpack.c.b16 %v2763, %v2750
  %v3349 = vpack.c.b16 %v2764, %v2751
  %v3350 = vpack.c.b16 %v2765, %v2752
  %v3351 = vpack.c.b16 %v2766, %v2753
  %v3352 = vpack.c.b16 %v2767, %v2754
  %v3353 = vpack.c.b16 %v2768, %v2755
  %v3354 = vpack.c.b16 %v2769, %v2756
  %v3355 = vpack.c.b16 %v2770, %v2757
  %v3356 = vpack.c.b16 %v2771, %v2758
  %v3357 = vpack.c.b16 %v2772, %v2759
  %v3358 = vpack.c.b16 %v2773, %v2760
  %v3359 = vpack.c.b16 %v2787, %v2774
  %v3360 = vpack.c.b16 %v2788, %v2775
  %v3361 = vpack.c.b16 %v2789, %v2776
  %v3362 = vpack.c.b16 %v2790, %v2777
  %v3363 = vpack.c.b16 %v2791, %v2778
  %v3364 = vpack.c.b16 %v2792, %v2779
  %v3365 = vpack.c.b16 %v2793, %v2780
  %v3366 = vpack.c.b16 %v2794, %v2781
  %v3367 = vpack.c.b16 %v2795, %v2782
  %v3368 = vpack.c.b16 %v2796, %v2783
  %v3369 = vpack.c.b16 %v2797, %v2784
  %v3370 = vpack.c.b16 %v2798, %v2785
  %v3371 = vpack.c.b16 %v2799, %v2786
  %v3372 = vpack.c.b16 %v2813, %v2800
  %v3373 = vpack.c.b16 %v2814, %v2801
  %v3374 = vpack.c.b16 %v2815, %v2802
  %v3375 = vpack.c.b16 %v2816, %v2803
  %v3376 = vpack.c.b16 %v2817, %v2804
  %v3377 = vpack.c.b16 %v2818, %v2805
  %v3378 = vpack.c.b16 %v2819, %v2806
  %v3379 = vpack.c.b16 %v2820, %v2807
  %v3380 = vpack.c.b16 %v2821, %v2808
  %v3381 = vpack.c.b16 %v2822, %v2809
  %v3382 = vpack.c.b16 %v2823, %v2810
  %v3383 = vpack.c.b16 %v2824, %v2811
  %v3384 = vpack.c.b16 %v2825, %v2812
  %v3385 = vpack.c.b16 %v2839, %v2826
  %v3386 = vpack.c.b16 %v2840, %v2827
  %v3387 = vpack.c.b16 %v2841, %v2828
  %v3388 = vpack.c.b16 %v2842, %v2829
  %v3389 = vpack.c.b16 %v2843, %v2830
  %v3390 = vpack.c.b16 %v2844, %v2831
  %v3391 = vpack.c.b16 %v2845, %v2832
  %v3392 = vpack.c.b16 %v2846, %v2833
  %v3393 = vpack.c.b16 %v2847, %v2834
  %v3394 = vpack.c.b16 %v2848, %v2835
  %v3395 = vpack.c.b16 %v2849, %v2836
  %v3396 = vpack.c.b16 %v2850, %v2837
  %v3397 = vpack.c.b16 %v2851, %v2838
  %v3398 = vpack.c.b16 %v2865, %v2852
  %v3399 = vpack.c.b16 %v2866, %v2853
  %v3400 = vpack.c.b16 %v2867, %v2854
  %v3401 = vpack.c.b16 %v2868, %v2855
  %v3402 = vpack.c.b16 %v2869, %v2856
  %v3403 = vpack.c.b16 %v2870, %v2857
  %v3404 = vpack.c.b16 %v2871, %v2858
  %v3405 = vpack.c.b16 %v2872, %v2859
  %v3406 = vpack.c.b16 %v2873, %v2860
  %v3407 = vpack.c.b16 %v2874, %v2861
  %v3408 = vpack.c.b16 %v2875, %v2862
  %v3409 = vpack.c.b16 %v2876, %v2863
  %v3410 = vpack.c.b16 %v2877, %v2864
  %v3411 = vpack.c.b16 %v2891, %v2878
  %v3412 = vpack.c.b16 %v2892, %v2879
  %v3413 = vpack.c.b16 %v2893, %v2880
  %v3414 = vpack.c.b16 %v2894, %v2881
  %v3415 = vpack.c.b16 %v2895, %v2882
  %v3416 = vpack.c.b16 %v2896, %v2883
  %v3417 = vpack.c.b16 %v2897, %v2884
  %v3418 = vpack.c.b16 %v2898, %v2885
  %v3419 = vpack.c.b16 %v2899, %v2886
  %v3420 = vpack.c.b16 %v2900, %v2887
  %v3421 = vpack.c.b16 %v2901, %v2888
  %v3422 = vpack.c.b16 %v2902, %v2889
  %v3423 = vpack.c.b16 %v2903, %v2890
  %v3424 = vpack.c.b16 %v2917, %v2904
  %v3425 = vpack.c.b16 %v2918, %v2905
  %v3426 = vpack.c.b16 %v2919, %v2906
  %v3427 = vpack.c.b16 %v2920, %v2907
  %v3428 = vpack.c.b16 %v2921, %v2908
  %v3429 = vpack.c.b16 %v2922, %v2909
  %v3430 = vpack.c.b16 %v2923, %v2910
  %v3431 = vpack.c.b16 %v2924, %v2911
  %v3432 = vpack.c.b16 %v2925, %v2912
  %v3433 = vpack.c.b16 %v2926, %v2913
  %v3434 = vpack.c.b16 %v2927, %v2914
  %v3435 = vpack.c.b16 %v2928, %v2915
  %v3436 = vpack.c.b16 %v2929, %v2916
  %v3437 = vpack.c.b16 %v2943, %v2930
  %v3438 = vpack.c.b16 %v2944, %v2931
  %v3439 = vpack.c.b16 %v2945, %v2932
  %v3440 = vpack.c.b16 %v2946, %v2933
  %v3441 = vpack.c.b16 %v2947, %v2934
  %v3442 = vpack.c.b16 %v2948, %v2935
  %v3443 = vpack.c.b16 %v2949, %v2936
  %v3444 = vpack.c.b16 %v2950, %v2937
  %v3445 = vpack.c.b16 %v2951, %v2938
  %v3446 = vpack.c.b16 %v2952, %v2939
  %v3447 = vpack.c.b16 %v2953, %v2940
  %v3448 = vpack.c.b16 %v2954, %v2941
  %v3449 = vpack.c.b16 %v2955, %v2942
  %v3450 = vpack.c.b16 %v2969, %v2956
  %v3451 = vpack.c.b16 %v2970, %v2957
  %v3452 = vpack.c.b16 %v2971, %v2958
  %v3453 = vpack.c.b16 %v2972, %v2959
  %v3454 = vpack.c.b16 %v2973, %v2960
  %v3455 = vpack.c.b16 %v2974, %v2961
  %v3456 = vpack.c.b16 %v2975, %v2962
  %v3457 = vpack.c.b16 %v2976, %v2963
  %v3458 = vpack.c.b16 %v2977, %v2964
  %v3459 = vpack.c.b16 %v2978, %v2965
  %v3460 = vpack.c.b16 %v2979, %v2966
  %v3461 = vpack.c.b16 %v2980, %v2967
  %v3462 = vpack.c.b16 %v2981, %v2968
  %v3463 = vpack.c.b16 %v2995, %v2982
  %v3464 = vpack.c.b16 %v2996, %v2983
  %v3465 = vpack.c.b16 %v2997, %v2984
  %v3466 = vpack.c.b16 %v2998, %v2985
  %v3467 = vpack.c.b16 %v2999, %v2986
  %v3468 = vpack.c.b16 %v3000, %v2987
  %v3469 = vpack.c.b16 %v3001, %v2988
  %v3470 = vpack.c.b16 %v3002, %v2989
  %v3471 = vpack.c.b16 %v3003, %v2990
  %v3472 = vpack.c.b16 %v3004, %v2991
  %v3473 = vpack.c.b16 %v3005, %v2992
  %v3474 = vpack.c.b16 %v3006, %v2993
  %v3475 = vpack.c.b16 %v3007, %v2994
  %v3476 = vpack.c.b16 %v3021, %v3008
  %v3477 = vpack.c.b16 %v3022, %v3009
  %v3478 = vpack.c.b16 %v3023, %v3010
  %v3479 = vpack.c.b16 %v3024, %v3011
  %v3480 = vpack.c.b16 %v3025, %v3012
  %v3481 = vpack.c.b16 %v3026, %v3013
  %v3482 = vpack.c.b16 %v3027, %v3014
  %v3483 = vpack.c.b16 %v3028, %v3015
  %v3484 = vpack.c.b16 %v3029, %v3016
  %v3485 = vpack.c.b16 %v3030, %v3017
  %v3486 = vpack.c.b16 %v3031, %v3018
  %v3487 = vpack.c.b16 %v3032, %v3019
  %v3488 = vpack.c.b16 %v3033, %v3020
  %v3489 = vpack.c.b16 %v3047, %v3034
  %v3490 = vpack.c.b16 %v3048, %v3035
  %v3491 = vpack.c.b16 %v3049, %v3036
  %v3492 = vpack.c.b16 %v3050, %v3037
  %v3493 = vpack.c.b16 %v3051, %v3038
  %v3494 = vpack.c.b16 %v3052, %v3039
  %v3495 = vpack.c.b16 %v3053, %v3040
  %v3496 = vpack.c.b16 %v3054, %v3041
  %v3497 = vpack.c.b16 %v3055, %v3042
  %v3498 = vpack.c.b16 %v3056, %v3043
  %v3499 = vpack.c.b16 %v3057, %v3044
  %v3500 = vpack.c.b16 %v3058, %v3045
  %v3501 = vpack.c.b16 %v3059, %v3046
  %v3502 = vpack.c.b16 %v3073, %v3060
  %v3503 = vpack.c.b16 %v3074, %v3061
  %v3504 = vpack.c.b16 %v3075, %v3062
  %v3505 = vpack.c.b16 %v3076, %v3063
  %v3506 = vpack.c.b16 %v3077, %v3064
  %v3507 = vpack.c.b16 %v3078, %v3065
  %v3508 = vpack.c.b16 %v3079, %v3066
  %v3509 = vpack.c.b16 %v3080, %v3067
  %v3510 = vpack.c.b16 %v3081, %v3068
  %v3511 = vpack.c.b16 %v3082, %v3069
  %v3512 = vpack.c.b16 %v3083, %v3070
  %v3513 = vpack.c.b16 %v3084, %v3071
  %v3514 = vpack.c.b16 %v3085, %v3072
  %v3515 = vpack.c.b16 %v3099, %v3086
  %v3516 = vpack.c.b16 %v3100, %v3087
  %v3517 = vpack.c.b16 %v3101, %v3088
  %v3518 = vpack.c.b16 %v3102, %v3089
  %v3519 = vpack.c.b16 %v3103, %v3090
  %v3520 = vpack.c.b16 %v3104, %v3091
  %v3521 = vpack.c.b16 %v3105, %v3092
  %v3522 = vpack.c.b16 %v3106, %v3093
  %v3523 = vpack.c.b16 %v3107, %v3094
  %v3524 = vpack.c.b16 %v3108, %v3095
  %v3525 = vpack.c.b16 %v3109, %v3096
  %v3526 = vpack.c.b16 %v3110, %v3097
  %v3527 = vpack.c.b16 %v3111, %v3098
  %v3528 = vpack.c.b16 %v3125, %v3112
  %v3529 = vpack.c.b16 %v3126, %v3113
  %v3530 = vpack.c.b16 %v3127, %v3114
  %v3531 = vpack.c.b16 %v3128, %v3115
  %v3532 = vpack.c.b16 %v3129, %v3116
  %v3533 = vpack.c.b16 %v3130, %v3117
  %v3534 = vpack.c.b16 %v3131, %v3118
  %v3535 = vpack.c.b16 %v3132, %v3119
  %v3536 = vpack.c.b16 %v3133, %v3120
  %v3537 = vpack.c.b16 %v3134, %v3121
  %v3538 = vpack.c.b16 %v3135, %v3122
  %v3539 = vpack.c.b16 %v3136, %v3123
  %v3540 = vpack.c.b16 %v3137, %v3124
  %v3541 = vpack.c.b16 %v3151, %v3138
  %v3542 = vpack.c.b16 %v3152, %v3139
  %v3543 = vpack.c.b16 %v3153, %v3140
  %v3544 = vpack.c.b16 %v3154, %v3141
  %v3545 = vpack.c.b16 %v3155, %v3142
  %v3546 = vpack.c.b16 %v3156, %v3143
  %v3547 = vpack.c.b16 %v3157, %v3144
  %v3548 = vpack.c.b16 %v3158, %v3145
  %v3549 = vpack.c.b16 %v3159, %v3146
  %v3550 = vpack.c.b16 %v3160, %v3147
  %v3551 = vpack.c.b16 %v3161, %v3148
  %v3552 = vpack.c.b16 %v3162, %v3149
  %v3553 = vpack.c.b16 %v3163, %v3150
  %v3554 = vpack.c.b16 %v3177, %v3164
  %v3555 = vpack.c.b16 %v3178, %v3165
  %v3556 = vpack.c.b16 %v3179, %v3166
  %v3557 = vpack.c.b16 %v3180, %v3167
  %v3558 = vpack.c.b16 %v3181, %v3168
  %v3559 = vpack.c.b16 %v3182, %v3169
  %v3560 = vpack.c.b16 %v3183, %v3170
  %v3561 = vpack.c.b16 %v3184, %v3171
  %v3562 = vpack.c.b16 %v3185, %v3172
  %v3563 = vpack.c.b16 %v3186, %v3173
  %v3564 = vpack.c.b16 %v3187, %v3174
  %v3565 = vpack.c.b16 %v3188, %v3175
  %v3566 = vpack.c.b16 %v3189, %v3176
  %v3567 = vpack.c.b16 %v3203, %v3190
  %v3568 = vpack.c.b16 %v3204, %v3191
  %v3569 = vpack.c.b16 %v3205, %v3192
  %v3570 = vpack.c.b16 %v3206, %v3193
  %v3571 = vpack.c.b16 %v3207, %v3194
  %v3572 = vpack.c.b16 %v3208, %v3195
  %v3573 = vpack.c.b16 %v3209, %v3196
  %v3574 = vpack.c.b16 %v3210, %v3197
  %v3575 = vpack.c.b16 %v3211, %v3198
  %v3576 = vpack.c.b16 %v3212, %v3199
  %v3577 = vpack.c.b16 %v3213, %v3200
  %v3578 = vpack.c.b16 %v3214, %v3201
  %v3579 = vpack.c.b16 %v3215, %v3202
  %v3580 = vpack.c.b16 %v3229, %v3216
  %v3581 = vpack.c.b16 %v3230, %v3217
  %v3582 = vpack.c.b16 %v3231, %v3218
  %v3583 = vpack.c.b16 %v3232, %v3219
  %v3584 = vpack.c.b16 %v3233, %v3220
  %v3585 = vpack.c.b16 %v3234, %v3221
  %v3586 = vpack.c.b16 %v3235, %v3222
  %v3587 = vpack.c.b16 %v3236, %v3223
  %v3588 = vpack.c.b16 %v3237, %v3224
  %v3589 = vpack.c.b16 %v3238, %v3225
  %v3590 = vpack.c.b16 %v3239, %v3226
  %v3591 = vpack.c.b16 %v3240, %v3227
  %v3592 = vpack.c.b16 %v3241, %v3228
  %v3593 = vpack.c.b16 %v3255, %v3242
  %v3594 = vpack.c.b16 %v3256, %v3243
  %v3595 = vpack.c.b16 %v3257, %v3244
  %v3596 = vpack.c.b16 %v3258, %v3245
  %v3597 = vpack.c.b16 %v3259, %v3246
  %v3598 = vpack.c.b16 %v3260, %v3247
  %v3599 = vpack.c.b16 %v3261, %v3248
  %v3600 = vpack.c.b16 %v3262, %v3249
  %v3601 = vpack.c.b16 %v3263, %v3250
  %v3602 = vpack.c.b16 %v3264, %v3251
  %v3603 = vpack.c.b16 %v3265, %v3252
  %v3604 = vpack.c.b16 %v3266, %v3253
  %v3605 = vpack.c.b16 %v3267, %v3254
  %v3606 = vpack.c.b16 %v3281, %v3268
  %v3607 = vpack.c.b16 %v3282, %v3269
  %v3608 = vpack.c.b16 %v3283, %v3270
  %v3609 = vpack.c.b16 %v3284, %v3271
  %v3610 = vpack.c.b16 %v3285, %v3272
  %v3611 = vpack.c.b16 %v3286, %v3273
  %v3612 = vpack.c.b16 %v3287, %v3274
  %v3613 = vpack.c.b16 %v3288, %v3275
  %v3614 = vpack.c.b16 %v3289, %v3276
  %v3615 = vpack.c.b16 %v3290, %v3277
  %v3616 = vpack.c.b16 %v3291, %v3278
  %v3617 = vpack.c.b16 %v3292, %v3279
  %v3618 = vpack.c.b16 %v3293, %v3280
  %v3619 = vpack.c.b16 %v3294, %v3294
  %v3620 = vpack.c.b16 %v3295, %v3295
  %v3621 = vpack.c.b16 %v3296, %v3296
  %v3622 = vpack.c.b16 %v3297, %v3297
  %v3623 = vpack.c.b16 %v3298, %v3298
  %v3624 = vpack.c.b16 %v3299, %v3299
  %v3625 = vpack.c.b16 %v3300, %v3300
  %v3626 = vpack.c.b16 %v3301, %v3301
  %v3627 = vpack.c.b16 %v3302, %v3302
  %v3628 = vpack.c.b16 %v3303, %v3303
  %v3629 = vpack.c.b16 %v3304, %v3304
  %v3630 = vpack.c.b16 %v3305, %v3305
  %v3631 = vpack.c.b16 %v3306, %v3306
  %vm3932 = vcmask 261120
  %v3934 = vsel %vm3932, %v3319, 0
  %v3937 = vsel %vm3932, %v3332, 0
  %v3940 = vsel %vm3932, %v3345, 0
  %v3943 = vsel %vm3932, %v3358, 0
  %v3946 = vsel %vm3932, %v3371, 0
  %v3949 = vsel %vm3932, %v3384, 0
  %v3952 = vsel %vm3932, %v3397, 0
  %v3955 = vsel %vm3932, %v3410, 0
  %v3958 = vsel %vm3932, %v3423, 0
  %v3961 = vsel %vm3932, %v3436, 0
  %v3964 = vsel %vm3932, %v3449, 0
  %v3967 = vsel %vm3932, %v3462, 0
  %v3970 = vsel %vm3932, %v3475, 0
  %v3973 = vsel %vm3932, %v3488, 0
  %v3976 = vsel %vm3932, %v3501, 0
  %v3979 = vsel %vm3932, %v3514, 0
  %v3982 = vsel %vm3932, %v3527, 0
  %v3985 = vsel %vm3932, %v3540, 0
  %v3988 = vsel %vm3932, %v3553, 0
  %v3991 = vsel %vm3932, %v3566, 0
  %v3994 = vsel %vm3932, %v3579, 0
  %v3997 = vsel %vm3932, %v3592, 0
  %v4000 = vsel %vm3932, %v3605, 0
  %v4003 = vsel %vm3932, %v3618, 0
  %v4006 = vsel %vm3932, %v3631, 0
  %4008 = vmatprep.subr.bf16.mxu0 0
  %4009 = vmatpush1.bf16.msra.mxu0 %v1886
  %4010 = vmatprep.subr.bf16.mxu0 0
  %4011 = vmatpush1.bf16.msra.mxu0 %v1887
  %4012 = vmatprep.subr.bf16.mxu0 0
  %4013 = vmatpush1.bf16.msra.mxu0 %v1888
  %4014 = vmatprep.subr.bf16.mxu0 0
  %4015 = vmatpush1.bf16.msra.mxu0 %v1889
  %4016 = vmatprep.subr.bf16.mxu0 0
  %4017 = vmatpush1.bf16.msra.mxu0 %v1890
  %4018 = vmatprep.subr.bf16.mxu0 0
  %4019 = vmatpush1.bf16.msra.mxu0 %v1891
  %4020 = vmatprep.subr.bf16.mxu0 0
  %4021 = vmatpush1.bf16.msra.mxu0 %v1892
  %4022 = vmatprep.subr.bf16.mxu0 0
  %4023 = vmatpush1.bf16.msra.mxu0 %v1893
  %4024 = vmatprep.subr.bf16.mxu0 0
  %4025 = vmatpush1.bf16.msra.mxu0 %v1894
  %4026 = vmatprep.subr.bf16.mxu0 0
  %4027 = vmatpush1.bf16.msra.mxu0 %v1895
  %4028 = vmatprep.subr.bf16.mxu0 0
  %4029 = vmatpush1.bf16.msra.mxu0 %v1896
  %4030 = vmatprep.subr.bf16.mxu0 0
  %4031 = vmatpush1.bf16.msra.mxu0 %v1897
  %4032 = vmatprep.subr.bf16.mxu0 0
  %4033 = vmatpush1.bf16.msra.mxu0 %v1898
  %4034 = vmatprep.subr.bf16.mxu0 0
  %4035 = vmatpush1.bf16.msra.mxu0 %v1899
  %4036 = vmatprep.subr.bf16.mxu0 0
  %4037 = vmatpush1.bf16.msra.mxu0 %v1900
  %4038 = vmatprep.subr.bf16.mxu0 0
  %4039 = vmatpush1.bf16.msra.mxu0 %v1901
  %4040 = vmatprep.mubr.bf16.mxu0 %v3308
  %4041 = vmatmul.mubr.bf16.gmra.mrb[0].mxu0 %v3307
  %v4042 = vpop.f32.mrb[0].mxu0
  %v4043 = vadd.f32 0.0, %v4042
  %v4044 = vpop.f32.mrb[0].mxu0
  %v4045 = vpop.f32.mrb[0].mxu0
  %v4046 = vadd.f32 0.0, %v4045
  %v4047 = vpop.f32.mrb[0].mxu0
  %4048 = vmatprep.mubr.bf16.mxu0 %v3321
  %4049 = vmatmul.mubr.bf16.gmra.mrb[0].mxu0 %v3320
  %v4050 = vpop.f32.mrb[0].mxu0
  %v4051 = vadd.f32 0.0, %v4050
  %v4052 = vpop.f32.mrb[0].mxu0
  %v4053 = vpop.f32.mrb[0].mxu0
  %v4054 = vadd.f32 0.0, %v4053
  %v4055 = vpop.f32.mrb[0].mxu0
  %4056 = vmatprep.mubr.bf16.mxu0 %v3334
  %4057 = vmatmul.mubr.bf16.gmra.mrb[0].mxu0 %v3333
  %v4058 = vpop.f32.mrb[0].mxu0
  %v4059 = vadd.f32 0.0, %v4058
  %v4060 = vpop.f32.mrb[0].mxu0
  %v4061 = vpop.f32.mrb[0].mxu0
  %v4062 = vadd.f32 0.0, %v4061
  %v4063 = vpop.f32.mrb[0].mxu0
  %4064 = vmatprep.mubr.bf16.mxu0 %v3347
  %4065 = vmatmul.mubr.bf16.gmra.mrb[0].mxu0 %v3346
  %v4066 = vpop.f32.mrb[0].mxu0
  %v4067 = vadd.f32 0.0, %v4066
  %v4068 = vpop.f32.mrb[0].mxu0
  %v4069 = vpop.f32.mrb[0].mxu0
  %v4070 = vadd.f32 0.0, %v4069
  %v4071 = vpop.f32.mrb[0].mxu0
  %4072 = vmatprep.mubr.bf16.mxu0 %v3360
  %4073 = vmatmul.mubr.bf16.gmra.mrb[0].mxu0 %v3359
  %v4074 = vpop.f32.mrb[0].mxu0
  %v4075 = vadd.f32 0.0, %v4074
  %v4076 = vpop.f32.mrb[0].mxu0
  %v4077 = vpop.f32.mrb[0].mxu0
  %v4078 = vadd.f32 0.0, %v4077
  %v4079 = vpop.f32.mrb[0].mxu0
  %4080 = vmatprep.mubr.bf16.mxu0 %v3373
  %4081 = vmatmul.mubr.bf16.gmra.mrb[0].mxu0 %v3372
  %v4082 = vpop.f32.mrb[0].mxu0
  %v4083 = vadd.f32 0.0, %v4082
  %v4084 = vpop.f32.mrb[0].mxu0
  %v4085 = vpop.f32.mrb[0].mxu0
  %v4086 = vadd.f32 0.0, %v4085
  %v4087 = vpop.f32.mrb[0].mxu0
  %4088 = vmatprep.mubr.bf16.mxu0 %v3386
  %4089 = vmatmul.mubr.bf16.gmra.mrb[0].mxu0 %v3385
  %v4090 = vpop.f32.mrb[0].mxu0
  %v4091 = vadd.f32 0.0, %v4090
  %v4092 = vpop.f32.mrb[0].mxu0
  %v4093 = vpop.f32.mrb[0].mxu0
  %v4094 = vadd.f32 0.0, %v4093
  %v4095 = vpop.f32.mrb[0].mxu0
  %4096 = vmatprep.mubr.bf16.mxu0 %v3399
  %4097 = vmatmul.mubr.bf16.gmra.mrb[0].mxu0 %v3398
  %v4098 = vpop.f32.mrb[0].mxu0
  %v4099 = vadd.f32 0.0, %v4098
  %v4100 = vpop.f32.mrb[0].mxu0
  %v4101 = vpop.f32.mrb[0].mxu0
  %v4102 = vadd.f32 0.0, %v4101
  %v4103 = vpop.f32.mrb[0].mxu0
  %4104 = vmatprep.mubr.bf16.mxu0 %v3412
  %4105 = vmatmul.mubr.bf16.gmra.mrb[0].mxu0 %v3411
  %v4106 = vpop.f32.mrb[0].mxu0
  %v4107 = vadd.f32 0.0, %v4106
  %v4108 = vpop.f32.mrb[0].mxu0
  %v4109 = vpop.f32.mrb[0].mxu0
  %v4110 = vadd.f32 0.0, %v4109
  %v4111 = vpop.f32.mrb[0].mxu0
  %4112 = vmatprep.mubr.bf16.mxu0 %v3425
  %4113 = vmatmul.mubr.bf16.gmra.mrb[0].mxu0 %v3424
  %v4114 = vpop.f32.mrb[0].mxu0
  %v4115 = vadd.f32 0.0, %v4114
  %v4116 = vpop.f32.mrb[0].mxu0
  %v4117 = vpop.f32.mrb[0].mxu0
  %v4118 = vadd.f32 0.0, %v4117
  %v4119 = vpop.f32.mrb[0].mxu0
  %4120 = vmatprep.mubr.bf16.mxu0 %v3438
  %4121 = vmatmul.mubr.bf16.gmra.mrb[0].mxu0 %v3437
  %v4122 = vpop.f32.mrb[0].mxu0
  %v4123 = vadd.f32 0.0, %v4122
  %v4124 = vpop.f32.mrb[0].mxu0
  %v4125 = vpop.f32.mrb[0].mxu0
  %v4126 = vadd.f32 0.0, %v4125
  %v4127 = vpop.f32.mrb[0].mxu0
  %4128 = vmatprep.mubr.bf16.mxu0 %v3451
  %4129 = vmatmul.mubr.bf16.gmra.mrb[0].mxu0 %v3450
  %v4130 = vpop.f32.mrb[0].mxu0
  %v4131 = vadd.f32 0.0, %v4130
  %v4132 = vpop.f32.mrb[0].mxu0
  %v4133 = vpop.f32.mrb[0].mxu0
  %v4134 = vadd.f32 0.0, %v4133
  %v4135 = vpop.f32.mrb[0].mxu0
  %4136 = vmatprep.mubr.bf16.mxu0 %v3464
  %4137 = vmatmul.mubr.bf16.gmra.mrb[0].mxu0 %v3463
  %v4138 = vpop.f32.mrb[0].mxu0
  %v4139 = vadd.f32 0.0, %v4138
  %v4140 = vpop.f32.mrb[0].mxu0
  %v4141 = vpop.f32.mrb[0].mxu0
  %v4142 = vadd.f32 0.0, %v4141
  %v4143 = vpop.f32.mrb[0].mxu0
  %4144 = vmatprep.mubr.bf16.mxu0 %v3477
  %4145 = vmatmul.mubr.bf16.gmra.mrb[0].mxu0 %v3476
  %v4146 = vpop.f32.mrb[0].mxu0
  %v4147 = vadd.f32 0.0, %v4146
  %v4148 = vpop.f32.mrb[0].mxu0
  %v4149 = vpop.f32.mrb[0].mxu0
  %v4150 = vadd.f32 0.0, %v4149
  %v4151 = vpop.f32.mrb[0].mxu0
  %4152 = vmatprep.mubr.bf16.mxu0 %v3490
  %4153 = vmatmul.mubr.bf16.gmra.mrb[0].mxu0 %v3489
  %v4154 = vpop.f32.mrb[0].mxu0
  %v4155 = vadd.f32 0.0, %v4154
  %v4156 = vpop.f32.mrb[0].mxu0
  %v4157 = vpop.f32.mrb[0].mxu0
  %v4158 = vadd.f32 0.0, %v4157
  %v4159 = vpop.f32.mrb[0].mxu0
  %4160 = vmatprep.mubr.bf16.mxu0 %v3503
  %4161 = vmatmul.mubr.bf16.gmra.mrb[0].mxu0 %v3502
  %v4162 = vpop.f32.mrb[0].mxu0
  %v4163 = vadd.f32 0.0, %v4162
  %v4164 = vpop.f32.mrb[0].mxu0
  %v4165 = vpop.f32.mrb[0].mxu0
  %v4166 = vadd.f32 0.0, %v4165
  %v4167 = vpop.f32.mrb[0].mxu0
  %4168 = vmatprep.mubr.bf16.mxu0 %v3516
  %4169 = vmatmul.mubr.bf16.gmra.mrb[0].mxu0 %v3515
  %v4170 = vpop.f32.mrb[0].mxu0
  %v4171 = vadd.f32 0.0, %v4170
  %v4172 = vpop.f32.mrb[0].mxu0
  %v4173 = vpop.f32.mrb[0].mxu0
  %v4174 = vadd.f32 0.0, %v4173
  %v4175 = vpop.f32.mrb[0].mxu0
  %4176 = vmatprep.mubr.bf16.mxu0 %v3529
  %4177 = vmatmul.mubr.bf16.gmra.mrb[0].mxu0 %v3528
  %v4178 = vpop.f32.mrb[0].mxu0
  %v4179 = vadd.f32 0.0, %v4178
  %v4180 = vpop.f32.mrb[0].mxu0
  %v4181 = vpop.f32.mrb[0].mxu0
  %v4182 = vadd.f32 0.0, %v4181
  %v4183 = vpop.f32.mrb[0].mxu0
  %4184 = vmatprep.mubr.bf16.mxu0 %v3542
  %4185 = vmatmul.mubr.bf16.gmra.mrb[0].mxu0 %v3541
  %v4186 = vpop.f32.mrb[0].mxu0
  %v4187 = vadd.f32 0.0, %v4186
  %v4188 = vpop.f32.mrb[0].mxu0
  %v4189 = vpop.f32.mrb[0].mxu0
  %v4190 = vadd.f32 0.0, %v4189
  %v4191 = vpop.f32.mrb[0].mxu0
  %4192 = vmatprep.mubr.bf16.mxu0 %v3555
  %4193 = vmatmul.mubr.bf16.gmra.mrb[0].mxu0 %v3554
  %v4194 = vpop.f32.mrb[0].mxu0
  %v4195 = vadd.f32 0.0, %v4194
  %v4196 = vpop.f32.mrb[0].mxu0
  %v4197 = vpop.f32.mrb[0].mxu0
  %v4198 = vadd.f32 0.0, %v4197
  %v4199 = vpop.f32.mrb[0].mxu0
  %4200 = vmatprep.mubr.bf16.mxu0 %v3568
  %4201 = vmatmul.mubr.bf16.gmra.mrb[0].mxu0 %v3567
  %v4202 = vpop.f32.mrb[0].mxu0
  %v4203 = vadd.f32 0.0, %v4202
  %v4204 = vpop.f32.mrb[0].mxu0
  %v4205 = vpop.f32.mrb[0].mxu0
  %v4206 = vadd.f32 0.0, %v4205
  %v4207 = vpop.f32.mrb[0].mxu0
  %4208 = vmatprep.mubr.bf16.mxu0 %v3581
  %4209 = vmatmul.mubr.bf16.gmra.mrb[0].mxu0 %v3580
  %v4210 = vpop.f32.mrb[0].mxu0
  %v4211 = vadd.f32 0.0, %v4210
  %v4212 = vpop.f32.mrb[0].mxu0
  %v4213 = vpop.f32.mrb[0].mxu0
  %v4214 = vadd.f32 0.0, %v4213
  %v4215 = vpop.f32.mrb[0].mxu0
  %4216 = vmatprep.mubr.bf16.mxu0 %v3594
  %4217 = vmatmul.mubr.bf16.gmra.mrb[0].mxu0 %v3593
  %v4218 = vpop.f32.mrb[0].mxu0
  %v4219 = vadd.f32 0.0, %v4218
  %v4220 = vpop.f32.mrb[0].mxu0
  %v4221 = vpop.f32.mrb[0].mxu0
  %v4222 = vadd.f32 0.0, %v4221
  %v4223 = vpop.f32.mrb[0].mxu0
  %4224 = vmatprep.mubr.bf16.mxu0 %v3607
  %4225 = vmatmul.mubr.bf16.gmra.mrb[0].mxu0 %v3606
  %v4226 = vpop.f32.mrb[0].mxu0
  %v4227 = vadd.f32 0.0, %v4226
  %v4228 = vpop.f32.mrb[0].mxu0
  %v4229 = vpop.f32.mrb[0].mxu0
  %v4230 = vadd.f32 0.0, %v4229
  %v4231 = vpop.f32.mrb[0].mxu0
  %4232 = vmatprep.mubr.bf16.mxu0 %v3620
  %4233 = vmatmul.mubr.bf16.gmra.mrb[0].mxu0 %v3619
  %v4234 = vpop.f32.mrb[0].mxu0
  %v4235 = vadd.f32 0.0, %v4234
  %v4236 = vpop.f32.mrb[0].mxu0
  %v4237 = vpop.f32.mrb[0].mxu0
  %v4238 = vpop.f32.mrb[0].mxu0
  %4239 = vdwg.mxu0
  %4240 = vmatprep.subr.bf16.mxu0 0
  %4241 = vmatpush1.bf16.msra.mxu0 %v1902
  %4242 = vmatprep.subr.bf16.mxu0 0
  %4243 = vmatpush1.bf16.msra.mxu0 %v1903
  %4244 = vmatprep.subr.bf16.mxu0 0
  %4245 = vmatpush1.bf16.msra.mxu0 %v1904
  %4246 = vmatprep.subr.bf16.mxu0 0
  %4247 = vmatpush1.bf16.msra.mxu0 %v1905
  %4248 = vmatprep.subr.bf16.mxu0 0
  %4249 = vmatpush1.bf16.msra.mxu0 %v1906
  %4250 = vmatprep.subr.bf16.mxu0 0
  %4251 = vmatpush1.bf16.msra.mxu0 %v1907
  %4252 = vmatprep.subr.bf16.mxu0 0
  %4253 = vmatpush1.bf16.msra.mxu0 %v1908
  %4254 = vmatprep.subr.bf16.mxu0 0
  %4255 = vmatpush1.bf16.msra.mxu0 %v1909
  %4256 = vmatprep.subr.bf16.mxu0 0
  %4257 = vmatpush1.bf16.msra.mxu0 %v1910
  %4258 = vmatprep.subr.bf16.mxu0 0
  %4259 = vmatpush1.bf16.msra.mxu0 %v1911
  %4260 = vmatprep.subr.bf16.mxu0 0
  %4261 = vmatpush1.bf16.msra.mxu0 %v1912
  %4262 = vmatprep.subr.bf16.mxu0 0
  %4263 = vmatpush1.bf16.msra.mxu0 %v1913
  %4264 = vmatprep.subr.bf16.mxu0 0
  %4265 = vmatpush1.bf16.msra.mxu0 %v1914
  %4266 = vmatprep.subr.bf16.mxu0 0
  %4267 = vmatpush1.bf16.msra.mxu0 %v1915
  %4268 = vmatprep.subr.bf16.mxu0 0
  %4269 = vmatpush1.bf16.msra.mxu0 %v1916
  %4270 = vmatprep.subr.bf16.mxu0 0
  %4271 = vmatpush1.bf16.msra.mxu0 %v1917
  %4272 = vmatprep.mubr.bf16.mxu0 %v3310
  %4273 = vmatmul.mubr.bf16.gmra.mrb[0].mxu0 %v3309
  %v4274 = vpop.f32.mrb[0].mxu0
  %v4275 = vadd.f32 %v4043, %v4274
  %v4276 = vpop.f32.mrb[0].mxu0
  %v4277 = vpop.f32.mrb[0].mxu0
  %v4278 = vadd.f32 %v4046, %v4277
  %v4279 = vpop.f32.mrb[0].mxu0
  %4280 = vmatprep.mubr.bf16.mxu0 %v3323
  %4281 = vmatmul.mubr.bf16.gmra.mrb[0].mxu0 %v3322
  %v4282 = vpop.f32.mrb[0].mxu0
  %v4283 = vadd.f32 %v4051, %v4282
  %v4284 = vpop.f32.mrb[0].mxu0
  %v4285 = vpop.f32.mrb[0].mxu0
  %v4286 = vadd.f32 %v4054, %v4285
  %v4287 = vpop.f32.mrb[0].mxu0
  %4288 = vmatprep.mubr.bf16.mxu0 %v3336
  %4289 = vmatmul.mubr.bf16.gmra.mrb[0].mxu0 %v3335
  %v4290 = vpop.f32.mrb[0].mxu0
  %v4291 = vadd.f32 %v4059, %v4290
  %v4292 = vpop.f32.mrb[0].mxu0
  %v4293 = vpop.f32.mrb[0].mxu0
  %v4294 = vadd.f32 %v4062, %v4293
  %v4295 = vpop.f32.mrb[0].mxu0
  %4296 = vmatprep.mubr.bf16.mxu0 %v3349
  %4297 = vmatmul.mubr.bf16.gmra.mrb[0].mxu0 %v3348
  %v4298 = vpop.f32.mrb[0].mxu0
  %v4299 = vadd.f32 %v4067, %v4298
  %v4300 = vpop.f32.mrb[0].mxu0
  %v4301 = vpop.f32.mrb[0].mxu0
  %v4302 = vadd.f32 %v4070, %v4301
  %v4303 = vpop.f32.mrb[0].mxu0
  %4304 = vmatprep.mubr.bf16.mxu0 %v3362
  %4305 = vmatmul.mubr.bf16.gmra.mrb[0].mxu0 %v3361
  %v4306 = vpop.f32.mrb[0].mxu0
  %v4307 = vadd.f32 %v4075, %v4306
  %v4308 = vpop.f32.mrb[0].mxu0
  %v4309 = vpop.f32.mrb[0].mxu0
  %v4310 = vadd.f32 %v4078, %v4309
  %v4311 = vpop.f32.mrb[0].mxu0
  %4312 = vmatprep.mubr.bf16.mxu0 %v3375
  %4313 = vmatmul.mubr.bf16.gmra.mrb[0].mxu0 %v3374
  %v4314 = vpop.f32.mrb[0].mxu0
  %v4315 = vadd.f32 %v4083, %v4314
  %v4316 = vpop.f32.mrb[0].mxu0
  %v4317 = vpop.f32.mrb[0].mxu0
  %v4318 = vadd.f32 %v4086, %v4317
  %v4319 = vpop.f32.mrb[0].mxu0
  %4320 = vmatprep.mubr.bf16.mxu0 %v3388
  %4321 = vmatmul.mubr.bf16.gmra.mrb[0].mxu0 %v3387
  %v4322 = vpop.f32.mrb[0].mxu0
  %v4323 = vadd.f32 %v4091, %v4322
  %v4324 = vpop.f32.mrb[0].mxu0
  %v4325 = vpop.f32.mrb[0].mxu0
  %v4326 = vadd.f32 %v4094, %v4325
  %v4327 = vpop.f32.mrb[0].mxu0
  %4328 = vmatprep.mubr.bf16.mxu0 %v3401
  %4329 = vmatmul.mubr.bf16.gmra.mrb[0].mxu0 %v3400
  %v4330 = vpop.f32.mrb[0].mxu0
  %v4331 = vadd.f32 %v4099, %v4330
  %v4332 = vpop.f32.mrb[0].mxu0
  %v4333 = vpop.f32.mrb[0].mxu0
  %v4334 = vadd.f32 %v4102, %v4333
  %v4335 = vpop.f32.mrb[0].mxu0
  %4336 = vmatprep.mubr.bf16.mxu0 %v3414
  %4337 = vmatmul.mubr.bf16.gmra.mrb[0].mxu0 %v3413
  %v4338 = vpop.f32.mrb[0].mxu0
  %v4339 = vadd.f32 %v4107, %v4338
  %v4340 = vpop.f32.mrb[0].mxu0
  %v4341 = vpop.f32.mrb[0].mxu0
  %v4342 = vadd.f32 %v4110, %v4341
  %v4343 = vpop.f32.mrb[0].mxu0
  %4344 = vmatprep.mubr.bf16.mxu0 %v3427
  %4345 = vmatmul.mubr.bf16.gmra.mrb[0].mxu0 %v3426
  %v4346 = vpop.f32.mrb[0].mxu0
  %v4347 = vadd.f32 %v4115, %v4346
  %v4348 = vpop.f32.mrb[0].mxu0
  %v4349 = vpop.f32.mrb[0].mxu0
  %v4350 = vadd.f32 %v4118, %v4349
  %v4351 = vpop.f32.mrb[0].mxu0
  %4352 = vmatprep.mubr.bf16.mxu0 %v3440
  %4353 = vmatmul.mubr.bf16.gmra.mrb[0].mxu0 %v3439
  %v4354 = vpop.f32.mrb[0].mxu0
  %v4355 = vadd.f32 %v4123, %v4354
  %v4356 = vpop.f32.mrb[0].mxu0
  %v4357 = vpop.f32.mrb[0].mxu0
  %v4358 = vadd.f32 %v4126, %v4357
  %v4359 = vpop.f32.mrb[0].mxu0
  %4360 = vmatprep.mubr.bf16.mxu0 %v3453
  %4361 = vmatmul.mubr.bf16.gmra.mrb[0].mxu0 %v3452
  %v4362 = vpop.f32.mrb[0].mxu0
  %v4363 = vadd.f32 %v4131, %v4362
  %v4364 = vpop.f32.mrb[0].mxu0
  %v4365 = vpop.f32.mrb[0].mxu0
  %v4366 = vadd.f32 %v4134, %v4365
  %v4367 = vpop.f32.mrb[0].mxu0
  %4368 = vmatprep.mubr.bf16.mxu0 %v3466
  %4369 = vmatmul.mubr.bf16.gmra.mrb[0].mxu0 %v3465
  %v4370 = vpop.f32.mrb[0].mxu0
  %v4371 = vadd.f32 %v4139, %v4370
  %v4372 = vpop.f32.mrb[0].mxu0
  %v4373 = vpop.f32.mrb[0].mxu0
  %v4374 = vadd.f32 %v4142, %v4373
  %v4375 = vpop.f32.mrb[0].mxu0
  %4376 = vmatprep.mubr.bf16.mxu0 %v3479
  %4377 = vmatmul.mubr.bf16.gmra.mrb[0].mxu0 %v3478
  %v4378 = vpop.f32.mrb[0].mxu0
  %v4379 = vadd.f32 %v4147, %v4378
  %v4380 = vpop.f32.mrb[0].mxu0
  %v4381 = vpop.f32.mrb[0].mxu0
  %v4382 = vadd.f32 %v4150, %v4381
  %v4383 = vpop.f32.mrb[0].mxu0
  %4384 = vmatprep.mubr.bf16.mxu0 %v3492
  %4385 = vmatmul.mubr.bf16.gmra.mrb[0].mxu0 %v3491
  %v4386 = vpop.f32.mrb[0].mxu0
  %v4387 = vadd.f32 %v4155, %v4386
  %v4388 = vpop.f32.mrb[0].mxu0
  %v4389 = vpop.f32.mrb[0].mxu0
  %v4390 = vadd.f32 %v4158, %v4389
  %v4391 = vpop.f32.mrb[0].mxu0
  %4392 = vmatprep.mubr.bf16.mxu0 %v3505
  %4393 = vmatmul.mubr.bf16.gmra.mrb[0].mxu0 %v3504
  %v4394 = vpop.f32.mrb[0].mxu0
  %v4395 = vadd.f32 %v4163, %v4394
  %v4396 = vpop.f32.mrb[0].mxu0
  %v4397 = vpop.f32.mrb[0].mxu0
  %v4398 = vadd.f32 %v4166, %v4397
  %v4399 = vpop.f32.mrb[0].mxu0
  %4400 = vmatprep.mubr.bf16.mxu0 %v3518
  %4401 = vmatmul.mubr.bf16.gmra.mrb[0].mxu0 %v3517
  %v4402 = vpop.f32.mrb[0].mxu0
  %v4403 = vadd.f32 %v4171, %v4402
  %v4404 = vpop.f32.mrb[0].mxu0
  %v4405 = vpop.f32.mrb[0].mxu0
  %v4406 = vadd.f32 %v4174, %v4405
  %v4407 = vpop.f32.mrb[0].mxu0
  %4408 = vmatprep.mubr.bf16.mxu0 %v3531
  %4409 = vmatmul.mubr.bf16.gmra.mrb[0].mxu0 %v3530
  %v4410 = vpop.f32.mrb[0].mxu0
  %v4411 = vadd.f32 %v4179, %v4410
  %v4412 = vpop.f32.mrb[0].mxu0
  %v4413 = vpop.f32.mrb[0].mxu0
  %v4414 = vadd.f32 %v4182, %v4413
  %v4415 = vpop.f32.mrb[0].mxu0
  %4416 = vmatprep.mubr.bf16.mxu0 %v3544
  %4417 = vmatmul.mubr.bf16.gmra.mrb[0].mxu0 %v3543
  %v4418 = vpop.f32.mrb[0].mxu0
  %v4419 = vadd.f32 %v4187, %v4418
  %v4420 = vpop.f32.mrb[0].mxu0
  %v4421 = vpop.f32.mrb[0].mxu0
  %v4422 = vadd.f32 %v4190, %v4421
  %v4423 = vpop.f32.mrb[0].mxu0
  %4424 = vmatprep.mubr.bf16.mxu0 %v3557
  %4425 = vmatmul.mubr.bf16.gmra.mrb[0].mxu0 %v3556
  %v4426 = vpop.f32.mrb[0].mxu0
  %v4427 = vadd.f32 %v4195, %v4426
  %v4428 = vpop.f32.mrb[0].mxu0
  %v4429 = vpop.f32.mrb[0].mxu0
  %v4430 = vadd.f32 %v4198, %v4429
  %v4431 = vpop.f32.mrb[0].mxu0
  %4432 = vmatprep.mubr.bf16.mxu0 %v3570
  %4433 = vmatmul.mubr.bf16.gmra.mrb[0].mxu0 %v3569
  %v4434 = vpop.f32.mrb[0].mxu0
  %v4435 = vadd.f32 %v4203, %v4434
  %v4436 = vpop.f32.mrb[0].mxu0
  %v4437 = vpop.f32.mrb[0].mxu0
  %v4438 = vadd.f32 %v4206, %v4437
  %v4439 = vpop.f32.mrb[0].mxu0
  %4440 = vmatprep.mubr.bf16.mxu0 %v3583
  %4441 = vmatmul.mubr.bf16.gmra.mrb[0].mxu0 %v3582
  %v4442 = vpop.f32.mrb[0].mxu0
  %v4443 = vadd.f32 %v4211, %v4442
  %v4444 = vpop.f32.mrb[0].mxu0
  %v4445 = vpop.f32.mrb[0].mxu0
  %v4446 = vadd.f32 %v4214, %v4445
  %v4447 = vpop.f32.mrb[0].mxu0
  %4448 = vmatprep.mubr.bf16.mxu0 %v3596
  %4449 = vmatmul.mubr.bf16.gmra.mrb[0].mxu0 %v3595
  %v4450 = vpop.f32.mrb[0].mxu0
  %v4451 = vadd.f32 %v4219, %v4450
  %v4452 = vpop.f32.mrb[0].mxu0
  %v4453 = vpop.f32.mrb[0].mxu0
  %v4454 = vadd.f32 %v4222, %v4453
  %v4455 = vpop.f32.mrb[0].mxu0
  %4456 = vmatprep.mubr.bf16.mxu0 %v3609
  %4457 = vmatmul.mubr.bf16.gmra.mrb[0].mxu0 %v3608
  %v4458 = vpop.f32.mrb[0].mxu0
  %v4459 = vadd.f32 %v4227, %v4458
  %v4460 = vpop.f32.mrb[0].mxu0
  %v4461 = vpop.f32.mrb[0].mxu0
  %v4462 = vadd.f32 %v4230, %v4461
  %v4463 = vpop.f32.mrb[0].mxu0
  %4464 = vmatprep.mubr.bf16.mxu0 %v3622
  %4465 = vmatmul.mubr.bf16.gmra.mrb[0].mxu0 %v3621
  %v4466 = vpop.f32.mrb[0].mxu0
  %v4467 = vadd.f32 %v4235, %v4466
  %v4468 = vpop.f32.mrb[0].mxu0
  %v4469 = vpop.f32.mrb[0].mxu0
  %v4470 = vpop.f32.mrb[0].mxu0
  %4471 = vdwg.mxu0
  %4472 = vmatprep.subr.bf16.mxu0 0
  %4473 = vmatpush1.bf16.msra.mxu0 %v1918
  %4474 = vmatprep.subr.bf16.mxu0 0
  %4475 = vmatpush1.bf16.msra.mxu0 %v1919
  %4476 = vmatprep.subr.bf16.mxu0 0
  %4477 = vmatpush1.bf16.msra.mxu0 %v1920
  %4478 = vmatprep.subr.bf16.mxu0 0
  %4479 = vmatpush1.bf16.msra.mxu0 %v1921
  %4480 = vmatprep.subr.bf16.mxu0 0
  %4481 = vmatpush1.bf16.msra.mxu0 %v1922
  %4482 = vmatprep.subr.bf16.mxu0 0
  %4483 = vmatpush1.bf16.msra.mxu0 %v1923
  %4484 = vmatprep.subr.bf16.mxu0 0
  %4485 = vmatpush1.bf16.msra.mxu0 %v1924
  %4486 = vmatprep.subr.bf16.mxu0 0
  %4487 = vmatpush1.bf16.msra.mxu0 %v1925
  %4488 = vmatprep.subr.bf16.mxu0 0
  %4489 = vmatpush1.bf16.msra.mxu0 %v1926
  %4490 = vmatprep.subr.bf16.mxu0 0
  %4491 = vmatpush1.bf16.msra.mxu0 %v1927
  %4492 = vmatprep.subr.bf16.mxu0 0
  %4493 = vmatpush1.bf16.msra.mxu0 %v1928
  %4494 = vmatprep.subr.bf16.mxu0 0
  %4495 = vmatpush1.bf16.msra.mxu0 %v1929
  %4496 = vmatprep.subr.bf16.mxu0 0
  %4497 = vmatpush1.bf16.msra.mxu0 %v1930
  %4498 = vmatprep.subr.bf16.mxu0 0
  %4499 = vmatpush1.bf16.msra.mxu0 %v1931
  %4500 = vmatprep.subr.bf16.mxu0 0
  %4501 = vmatpush1.bf16.msra.mxu0 %v1932
  %4502 = vmatprep.subr.bf16.mxu0 0
  %4503 = vmatpush1.bf16.msra.mxu0 %v1933
  %4504 = vmatprep.mubr.bf16.mxu0 %v3312
  %4505 = vmatmul.mubr.bf16.gmra.mrb[0].mxu0 %v3311
  %v4506 = vpop.f32.mrb[0].mxu0
  %v4507 = vadd.f32 %v4275, %v4506
  %v4508 = vpop.f32.mrb[0].mxu0
  %v4509 = vpop.f32.mrb[0].mxu0
  %v4510 = vadd.f32 %v4278, %v4509
  %v4511 = vpop.f32.mrb[0].mxu0
  %4512 = vmatprep.mubr.bf16.mxu0 %v3325
  %4513 = vmatmul.mubr.bf16.gmra.mrb[0].mxu0 %v3324
  %v4514 = vpop.f32.mrb[0].mxu0
  %v4515 = vadd.f32 %v4283, %v4514
  %v4516 = vpop.f32.mrb[0].mxu0
  %v4517 = vpop.f32.mrb[0].mxu0
  %v4518 = vadd.f32 %v4286, %v4517
  %v4519 = vpop.f32.mrb[0].mxu0
  %4520 = vmatprep.mubr.bf16.mxu0 %v3338
  %4521 = vmatmul.mubr.bf16.gmra.mrb[0].mxu0 %v3337
  %v4522 = vpop.f32.mrb[0].mxu0
  %v4523 = vadd.f32 %v4291, %v4522
  %v4524 = vpop.f32.mrb[0].mxu0
  %v4525 = vpop.f32.mrb[0].mxu0
  %v4526 = vadd.f32 %v4294, %v4525
  %v4527 = vpop.f32.mrb[0].mxu0
  %4528 = vmatprep.mubr.bf16.mxu0 %v3351
  %4529 = vmatmul.mubr.bf16.gmra.mrb[0].mxu0 %v3350
  %v4530 = vpop.f32.mrb[0].mxu0
  %v4531 = vadd.f32 %v4299, %v4530
  %v4532 = vpop.f32.mrb[0].mxu0
  %v4533 = vpop.f32.mrb[0].mxu0
  %v4534 = vadd.f32 %v4302, %v4533
  %v4535 = vpop.f32.mrb[0].mxu0
  %4536 = vmatprep.mubr.bf16.mxu0 %v3364
  %4537 = vmatmul.mubr.bf16.gmra.mrb[0].mxu0 %v3363
  %v4538 = vpop.f32.mrb[0].mxu0
  %v4539 = vadd.f32 %v4307, %v4538
  %v4540 = vpop.f32.mrb[0].mxu0
  %v4541 = vpop.f32.mrb[0].mxu0
  %v4542 = vadd.f32 %v4310, %v4541
  %v4543 = vpop.f32.mrb[0].mxu0
  %4544 = vmatprep.mubr.bf16.mxu0 %v3377
  %4545 = vmatmul.mubr.bf16.gmra.mrb[0].mxu0 %v3376
  %v4546 = vpop.f32.mrb[0].mxu0
  %v4547 = vadd.f32 %v4315, %v4546
  %v4548 = vpop.f32.mrb[0].mxu0
  %v4549 = vpop.f32.mrb[0].mxu0
  %v4550 = vadd.f32 %v4318, %v4549
  %v4551 = vpop.f32.mrb[0].mxu0
  %4552 = vmatprep.mubr.bf16.mxu0 %v3390
  %4553 = vmatmul.mubr.bf16.gmra.mrb[0].mxu0 %v3389
  %v4554 = vpop.f32.mrb[0].mxu0
  %v4555 = vadd.f32 %v4323, %v4554
  %v4556 = vpop.f32.mrb[0].mxu0
  %v4557 = vpop.f32.mrb[0].mxu0
  %v4558 = vadd.f32 %v4326, %v4557
  %v4559 = vpop.f32.mrb[0].mxu0
  %4560 = vmatprep.mubr.bf16.mxu0 %v3403
  %4561 = vmatmul.mubr.bf16.gmra.mrb[0].mxu0 %v3402
  %v4562 = vpop.f32.mrb[0].mxu0
  %v4563 = vadd.f32 %v4331, %v4562
  %v4564 = vpop.f32.mrb[0].mxu0
  %v4565 = vpop.f32.mrb[0].mxu0
  %v4566 = vadd.f32 %v4334, %v4565
  %v4567 = vpop.f32.mrb[0].mxu0
  %4568 = vmatprep.mubr.bf16.mxu0 %v3416
  %4569 = vmatmul.mubr.bf16.gmra.mrb[0].mxu0 %v3415
  %v4570 = vpop.f32.mrb[0].mxu0
  %v4571 = vadd.f32 %v4339, %v4570
  %v4572 = vpop.f32.mrb[0].mxu0
  %v4573 = vpop.f32.mrb[0].mxu0
  %v4574 = vadd.f32 %v4342, %v4573
  %v4575 = vpop.f32.mrb[0].mxu0
  %4576 = vmatprep.mubr.bf16.mxu0 %v3429
  %4577 = vmatmul.mubr.bf16.gmra.mrb[0].mxu0 %v3428
  %v4578 = vpop.f32.mrb[0].mxu0
  %v4579 = vadd.f32 %v4347, %v4578
  %v4580 = vpop.f32.mrb[0].mxu0
  %v4581 = vpop.f32.mrb[0].mxu0
  %v4582 = vadd.f32 %v4350, %v4581
  %v4583 = vpop.f32.mrb[0].mxu0
  %4584 = vmatprep.mubr.bf16.mxu0 %v3442
  %4585 = vmatmul.mubr.bf16.gmra.mrb[0].mxu0 %v3441
  %v4586 = vpop.f32.mrb[0].mxu0
  %v4587 = vadd.f32 %v4355, %v4586
  %v4588 = vpop.f32.mrb[0].mxu0
  %v4589 = vpop.f32.mrb[0].mxu0
  %v4590 = vadd.f32 %v4358, %v4589
  %v4591 = vpop.f32.mrb[0].mxu0
  %4592 = vmatprep.mubr.bf16.mxu0 %v3455
  %4593 = vmatmul.mubr.bf16.gmra.mrb[0].mxu0 %v3454
  %v4594 = vpop.f32.mrb[0].mxu0
  %v4595 = vadd.f32 %v4363, %v4594
  %v4596 = vpop.f32.mrb[0].mxu0
  %v4597 = vpop.f32.mrb[0].mxu0
  %v4598 = vadd.f32 %v4366, %v4597
  %v4599 = vpop.f32.mrb[0].mxu0
  %4600 = vmatprep.mubr.bf16.mxu0 %v3468
  %4601 = vmatmul.mubr.bf16.gmra.mrb[0].mxu0 %v3467
  %v4602 = vpop.f32.mrb[0].mxu0
  %v4603 = vadd.f32 %v4371, %v4602
  %v4604 = vpop.f32.mrb[0].mxu0
  %v4605 = vpop.f32.mrb[0].mxu0
  %v4606 = vadd.f32 %v4374, %v4605
  %v4607 = vpop.f32.mrb[0].mxu0
  %4608 = vmatprep.mubr.bf16.mxu0 %v3481
  %4609 = vmatmul.mubr.bf16.gmra.mrb[0].mxu0 %v3480
  %v4610 = vpop.f32.mrb[0].mxu0
  %v4611 = vadd.f32 %v4379, %v4610
  %v4612 = vpop.f32.mrb[0].mxu0
  %v4613 = vpop.f32.mrb[0].mxu0
  %v4614 = vadd.f32 %v4382, %v4613
  %v4615 = vpop.f32.mrb[0].mxu0
  %4616 = vmatprep.mubr.bf16.mxu0 %v3494
  %4617 = vmatmul.mubr.bf16.gmra.mrb[0].mxu0 %v3493
  %v4618 = vpop.f32.mrb[0].mxu0
  %v4619 = vadd.f32 %v4387, %v4618
  %v4620 = vpop.f32.mrb[0].mxu0
  %v4621 = vpop.f32.mrb[0].mxu0
  %v4622 = vadd.f32 %v4390, %v4621
  %v4623 = vpop.f32.mrb[0].mxu0
  %4624 = vmatprep.mubr.bf16.mxu0 %v3507
  %4625 = vmatmul.mubr.bf16.gmra.mrb[0].mxu0 %v3506
  %v4626 = vpop.f32.mrb[0].mxu0
  %v4627 = vadd.f32 %v4395, %v4626
  %v4628 = vpop.f32.mrb[0].mxu0
  %v4629 = vpop.f32.mrb[0].mxu0
  %v4630 = vadd.f32 %v4398, %v4629
  %v4631 = vpop.f32.mrb[0].mxu0
  %4632 = vmatprep.mubr.bf16.mxu0 %v3520
  %4633 = vmatmul.mubr.bf16.gmra.mrb[0].mxu0 %v3519
  %v4634 = vpop.f32.mrb[0].mxu0
  %v4635 = vadd.f32 %v4403, %v4634
  %v4636 = vpop.f32.mrb[0].mxu0
  %v4637 = vpop.f32.mrb[0].mxu0
  %v4638 = vadd.f32 %v4406, %v4637
  %v4639 = vpop.f32.mrb[0].mxu0
  %4640 = vmatprep.mubr.bf16.mxu0 %v3533
  %4641 = vmatmul.mubr.bf16.gmra.mrb[0].mxu0 %v3532
  %v4642 = vpop.f32.mrb[0].mxu0
  %v4643 = vadd.f32 %v4411, %v4642
  %v4644 = vpop.f32.mrb[0].mxu0
  %v4645 = vpop.f32.mrb[0].mxu0
  %v4646 = vadd.f32 %v4414, %v4645
  %v4647 = vpop.f32.mrb[0].mxu0
  %4648 = vmatprep.mubr.bf16.mxu0 %v3546
  %4649 = vmatmul.mubr.bf16.gmra.mrb[0].mxu0 %v3545
  %v4650 = vpop.f32.mrb[0].mxu0
  %v4651 = vadd.f32 %v4419, %v4650
  %v4652 = vpop.f32.mrb[0].mxu0
  %v4653 = vpop.f32.mrb[0].mxu0
  %v4654 = vadd.f32 %v4422, %v4653
  %v4655 = vpop.f32.mrb[0].mxu0
  %4656 = vmatprep.mubr.bf16.mxu0 %v3559
  %4657 = vmatmul.mubr.bf16.gmra.mrb[0].mxu0 %v3558
  %v4658 = vpop.f32.mrb[0].mxu0
  %v4659 = vadd.f32 %v4427, %v4658
  %v4660 = vpop.f32.mrb[0].mxu0
  %v4661 = vpop.f32.mrb[0].mxu0
  %v4662 = vadd.f32 %v4430, %v4661
  %v4663 = vpop.f32.mrb[0].mxu0
  %4664 = vmatprep.mubr.bf16.mxu0 %v3572
  %4665 = vmatmul.mubr.bf16.gmra.mrb[0].mxu0 %v3571
  %v4666 = vpop.f32.mrb[0].mxu0
  %v4667 = vadd.f32 %v4435, %v4666
  %v4668 = vpop.f32.mrb[0].mxu0
  %v4669 = vpop.f32.mrb[0].mxu0
  %v4670 = vadd.f32 %v4438, %v4669
  %v4671 = vpop.f32.mrb[0].mxu0
  %4672 = vmatprep.mubr.bf16.mxu0 %v3585
  %4673 = vmatmul.mubr.bf16.gmra.mrb[0].mxu0 %v3584
  %v4674 = vpop.f32.mrb[0].mxu0
  %v4675 = vadd.f32 %v4443, %v4674
  %v4676 = vpop.f32.mrb[0].mxu0
  %v4677 = vpop.f32.mrb[0].mxu0
  %v4678 = vadd.f32 %v4446, %v4677
  %v4679 = vpop.f32.mrb[0].mxu0
  %4680 = vmatprep.mubr.bf16.mxu0 %v3598
  %4681 = vmatmul.mubr.bf16.gmra.mrb[0].mxu0 %v3597
  %v4682 = vpop.f32.mrb[0].mxu0
  %v4683 = vadd.f32 %v4451, %v4682
  %v4684 = vpop.f32.mrb[0].mxu0
  %v4685 = vpop.f32.mrb[0].mxu0
  %v4686 = vadd.f32 %v4454, %v4685
  %v4687 = vpop.f32.mrb[0].mxu0
  %4688 = vmatprep.mubr.bf16.mxu0 %v3611
  %4689 = vmatmul.mubr.bf16.gmra.mrb[0].mxu0 %v3610
  %v4690 = vpop.f32.mrb[0].mxu0
  %v4691 = vadd.f32 %v4459, %v4690
  %v4692 = vpop.f32.mrb[0].mxu0
  %v4693 = vpop.f32.mrb[0].mxu0
  %v4694 = vadd.f32 %v4462, %v4693
  %v4695 = vpop.f32.mrb[0].mxu0
  %4696 = vmatprep.mubr.bf16.mxu0 %v3624
  %4697 = vmatmul.mubr.bf16.gmra.mrb[0].mxu0 %v3623
  %v4698 = vpop.f32.mrb[0].mxu0
  %v4699 = vadd.f32 %v4467, %v4698
  %v4700 = vpop.f32.mrb[0].mxu0
  %v4701 = vpop.f32.mrb[0].mxu0
  %v4702 = vpop.f32.mrb[0].mxu0
  %4703 = vdwg.mxu0
  %4704 = vmatprep.subr.bf16.mxu0 0
  %4705 = vmatpush1.bf16.msra.mxu0 %v1934
  %4706 = vmatprep.subr.bf16.mxu0 0
  %4707 = vmatpush1.bf16.msra.mxu0 %v1935
  %4708 = vmatprep.subr.bf16.mxu0 0
  %4709 = vmatpush1.bf16.msra.mxu0 %v1936
  %4710 = vmatprep.subr.bf16.mxu0 0
  %4711 = vmatpush1.bf16.msra.mxu0 %v1937
  %4712 = vmatprep.subr.bf16.mxu0 0
  %4713 = vmatpush1.bf16.msra.mxu0 %v1938
  %4714 = vmatprep.subr.bf16.mxu0 0
  %4715 = vmatpush1.bf16.msra.mxu0 %v1939
  %4716 = vmatprep.subr.bf16.mxu0 0
  %4717 = vmatpush1.bf16.msra.mxu0 %v1940
  %4718 = vmatprep.subr.bf16.mxu0 0
  %4719 = vmatpush1.bf16.msra.mxu0 %v1941
  %4720 = vmatprep.subr.bf16.mxu0 0
  %4721 = vmatpush1.bf16.msra.mxu0 %v1942
  %4722 = vmatprep.subr.bf16.mxu0 0
  %4723 = vmatpush1.bf16.msra.mxu0 %v1943
  %4724 = vmatprep.subr.bf16.mxu0 0
  %4725 = vmatpush1.bf16.msra.mxu0 %v1944
  %4726 = vmatprep.subr.bf16.mxu0 0
  %4727 = vmatpush1.bf16.msra.mxu0 %v1945
  %4728 = vmatprep.subr.bf16.mxu0 0
  %4729 = vmatpush1.bf16.msra.mxu0 %v1946
  %4730 = vmatprep.subr.bf16.mxu0 0
  %4731 = vmatpush1.bf16.msra.mxu0 %v1947
  %4732 = vmatprep.subr.bf16.mxu0 0
  %4733 = vmatpush1.bf16.msra.mxu0 %v1948
  %4734 = vmatprep.subr.bf16.mxu0 0
  %4735 = vmatpush1.bf16.msra.mxu0 %v1949
  %4736 = vmatprep.mubr.bf16.mxu0 %v3314
  %4737 = vmatmul.mubr.bf16.gmra.mrb[0].mxu0 %v3313
  %v4738 = vpop.f32.mrb[0].mxu0
  %v4739 = vadd.f32 %v4507, %v4738
  %v4740 = vpop.f32.mrb[0].mxu0
  %v4741 = vpop.f32.mrb[0].mxu0
  %v4742 = vadd.f32 %v4510, %v4741
  %v4743 = vpop.f32.mrb[0].mxu0
  %4744 = vmatprep.mubr.bf16.mxu0 %v3327
  %4745 = vmatmul.mubr.bf16.gmra.mrb[0].mxu0 %v3326
  %v4746 = vpop.f32.mrb[0].mxu0
  %v4747 = vadd.f32 %v4515, %v4746
  %v4748 = vpop.f32.mrb[0].mxu0
  %v4749 = vpop.f32.mrb[0].mxu0
  %v4750 = vadd.f32 %v4518, %v4749
  %v4751 = vpop.f32.mrb[0].mxu0
  %4752 = vmatprep.mubr.bf16.mxu0 %v3340
  %4753 = vmatmul.mubr.bf16.gmra.mrb[0].mxu0 %v3339
  %v4754 = vpop.f32.mrb[0].mxu0
  %v4755 = vadd.f32 %v4523, %v4754
  %v4756 = vpop.f32.mrb[0].mxu0
  %v4757 = vpop.f32.mrb[0].mxu0
  %v4758 = vadd.f32 %v4526, %v4757
  %v4759 = vpop.f32.mrb[0].mxu0
  %4760 = vmatprep.mubr.bf16.mxu0 %v3353
  %4761 = vmatmul.mubr.bf16.gmra.mrb[0].mxu0 %v3352
  %v4762 = vpop.f32.mrb[0].mxu0
  %v4763 = vadd.f32 %v4531, %v4762
  %v4764 = vpop.f32.mrb[0].mxu0
  %v4765 = vpop.f32.mrb[0].mxu0
  %v4766 = vadd.f32 %v4534, %v4765
  %v4767 = vpop.f32.mrb[0].mxu0
  %4768 = vmatprep.mubr.bf16.mxu0 %v3366
  %4769 = vmatmul.mubr.bf16.gmra.mrb[0].mxu0 %v3365
  %v4770 = vpop.f32.mrb[0].mxu0
  %v4771 = vadd.f32 %v4539, %v4770
  %v4772 = vpop.f32.mrb[0].mxu0
  %v4773 = vpop.f32.mrb[0].mxu0
  %v4774 = vadd.f32 %v4542, %v4773
  %v4775 = vpop.f32.mrb[0].mxu0
  %4776 = vmatprep.mubr.bf16.mxu0 %v3379
  %4777 = vmatmul.mubr.bf16.gmra.mrb[0].mxu0 %v3378
  %v4778 = vpop.f32.mrb[0].mxu0
  %v4779 = vadd.f32 %v4547, %v4778
  %v4780 = vpop.f32.mrb[0].mxu0
  %v4781 = vpop.f32.mrb[0].mxu0
  %v4782 = vadd.f32 %v4550, %v4781
  %v4783 = vpop.f32.mrb[0].mxu0
  %4784 = vmatprep.mubr.bf16.mxu0 %v3392
  %4785 = vmatmul.mubr.bf16.gmra.mrb[0].mxu0 %v3391
  %v4786 = vpop.f32.mrb[0].mxu0
  %v4787 = vadd.f32 %v4555, %v4786
  %v4788 = vpop.f32.mrb[0].mxu0
  %v4789 = vpop.f32.mrb[0].mxu0
  %v4790 = vadd.f32 %v4558, %v4789
  %v4791 = vpop.f32.mrb[0].mxu0
  %4792 = vmatprep.mubr.bf16.mxu0 %v3405
  %4793 = vmatmul.mubr.bf16.gmra.mrb[0].mxu0 %v3404
  %v4794 = vpop.f32.mrb[0].mxu0
  %v4795 = vadd.f32 %v4563, %v4794
  %v4796 = vpop.f32.mrb[0].mxu0
  %v4797 = vpop.f32.mrb[0].mxu0
  %v4798 = vadd.f32 %v4566, %v4797
  %v4799 = vpop.f32.mrb[0].mxu0
  %4800 = vmatprep.mubr.bf16.mxu0 %v3418
  %4801 = vmatmul.mubr.bf16.gmra.mrb[0].mxu0 %v3417
  %v4802 = vpop.f32.mrb[0].mxu0
  %v4803 = vadd.f32 %v4571, %v4802
  %v4804 = vpop.f32.mrb[0].mxu0
  %v4805 = vpop.f32.mrb[0].mxu0
  %v4806 = vadd.f32 %v4574, %v4805
  %v4807 = vpop.f32.mrb[0].mxu0
  %4808 = vmatprep.mubr.bf16.mxu0 %v3431
  %4809 = vmatmul.mubr.bf16.gmra.mrb[0].mxu0 %v3430
  %v4810 = vpop.f32.mrb[0].mxu0
  %v4811 = vadd.f32 %v4579, %v4810
  %v4812 = vpop.f32.mrb[0].mxu0
  %v4813 = vpop.f32.mrb[0].mxu0
  %v4814 = vadd.f32 %v4582, %v4813
  %v4815 = vpop.f32.mrb[0].mxu0
  %4816 = vmatprep.mubr.bf16.mxu0 %v3444
  %4817 = vmatmul.mubr.bf16.gmra.mrb[0].mxu0 %v3443
  %v4818 = vpop.f32.mrb[0].mxu0
  %v4819 = vadd.f32 %v4587, %v4818
  %v4820 = vpop.f32.mrb[0].mxu0
  %v4821 = vpop.f32.mrb[0].mxu0
  %v4822 = vadd.f32 %v4590, %v4821
  %v4823 = vpop.f32.mrb[0].mxu0
  %4824 = vmatprep.mubr.bf16.mxu0 %v3457
  %4825 = vmatmul.mubr.bf16.gmra.mrb[0].mxu0 %v3456
  %v4826 = vpop.f32.mrb[0].mxu0
  %v4827 = vadd.f32 %v4595, %v4826
  %v4828 = vpop.f32.mrb[0].mxu0
  %v4829 = vpop.f32.mrb[0].mxu0
  %v4830 = vadd.f32 %v4598, %v4829
  %v4831 = vpop.f32.mrb[0].mxu0
  %4832 = vmatprep.mubr.bf16.mxu0 %v3470
  %4833 = vmatmul.mubr.bf16.gmra.mrb[0].mxu0 %v3469
  %v4834 = vpop.f32.mrb[0].mxu0
  %v4835 = vadd.f32 %v4603, %v4834
  %v4836 = vpop.f32.mrb[0].mxu0
  %v4837 = vpop.f32.mrb[0].mxu0
  %v4838 = vadd.f32 %v4606, %v4837
  %v4839 = vpop.f32.mrb[0].mxu0
  %4840 = vmatprep.mubr.bf16.mxu0 %v3483
  %4841 = vmatmul.mubr.bf16.gmra.mrb[0].mxu0 %v3482
  %v4842 = vpop.f32.mrb[0].mxu0
  %v4843 = vadd.f32 %v4611, %v4842
  %v4844 = vpop.f32.mrb[0].mxu0
  %v4845 = vpop.f32.mrb[0].mxu0
  %v4846 = vadd.f32 %v4614, %v4845
  %v4847 = vpop.f32.mrb[0].mxu0
  %4848 = vmatprep.mubr.bf16.mxu0 %v3496
  %4849 = vmatmul.mubr.bf16.gmra.mrb[0].mxu0 %v3495
  %v4850 = vpop.f32.mrb[0].mxu0
  %v4851 = vadd.f32 %v4619, %v4850
  %v4852 = vpop.f32.mrb[0].mxu0
  %v4853 = vpop.f32.mrb[0].mxu0
  %v4854 = vadd.f32 %v4622, %v4853
  %v4855 = vpop.f32.mrb[0].mxu0
  %4856 = vmatprep.mubr.bf16.mxu0 %v3509
  %4857 = vmatmul.mubr.bf16.gmra.mrb[0].mxu0 %v3508
  %v4858 = vpop.f32.mrb[0].mxu0
  %v4859 = vadd.f32 %v4627, %v4858
  %v4860 = vpop.f32.mrb[0].mxu0
  %v4861 = vpop.f32.mrb[0].mxu0
  %v4862 = vadd.f32 %v4630, %v4861
  %v4863 = vpop.f32.mrb[0].mxu0
  %4864 = vmatprep.mubr.bf16.mxu0 %v3522
  %4865 = vmatmul.mubr.bf16.gmra.mrb[0].mxu0 %v3521
  %v4866 = vpop.f32.mrb[0].mxu0
  %v4867 = vadd.f32 %v4635, %v4866
  %v4868 = vpop.f32.mrb[0].mxu0
  %v4869 = vpop.f32.mrb[0].mxu0
  %v4870 = vadd.f32 %v4638, %v4869
  %v4871 = vpop.f32.mrb[0].mxu0
  %4872 = vmatprep.mubr.bf16.mxu0 %v3535
  %4873 = vmatmul.mubr.bf16.gmra.mrb[0].mxu0 %v3534
  %v4874 = vpop.f32.mrb[0].mxu0
  %v4875 = vadd.f32 %v4643, %v4874
  %v4876 = vpop.f32.mrb[0].mxu0
  %v4877 = vpop.f32.mrb[0].mxu0
  %v4878 = vadd.f32 %v4646, %v4877
  %v4879 = vpop.f32.mrb[0].mxu0
  %4880 = vmatprep.mubr.bf16.mxu0 %v3548
  %4881 = vmatmul.mubr.bf16.gmra.mrb[0].mxu0 %v3547
  %v4882 = vpop.f32.mrb[0].mxu0
  %v4883 = vadd.f32 %v4651, %v4882
  %v4884 = vpop.f32.mrb[0].mxu0
  %v4885 = vpop.f32.mrb[0].mxu0
  %v4886 = vadd.f32 %v4654, %v4885
  %v4887 = vpop.f32.mrb[0].mxu0
  %4888 = vmatprep.mubr.bf16.mxu0 %v3561
  %4889 = vmatmul.mubr.bf16.gmra.mrb[0].mxu0 %v3560
  %v4890 = vpop.f32.mrb[0].mxu0
  %v4891 = vadd.f32 %v4659, %v4890
  %v4892 = vpop.f32.mrb[0].mxu0
  %v4893 = vpop.f32.mrb[0].mxu0
  %v4894 = vadd.f32 %v4662, %v4893
  %v4895 = vpop.f32.mrb[0].mxu0
  %4896 = vmatprep.mubr.bf16.mxu0 %v3574
  %4897 = vmatmul.mubr.bf16.gmra.mrb[0].mxu0 %v3573
  %v4898 = vpop.f32.mrb[0].mxu0
  %v4899 = vadd.f32 %v4667, %v4898
  %v4900 = vpop.f32.mrb[0].mxu0
  %v4901 = vpop.f32.mrb[0].mxu0
  %v4902 = vadd.f32 %v4670, %v4901
  %v4903 = vpop.f32.mrb[0].mxu0
  %4904 = vmatprep.mubr.bf16.mxu0 %v3587
  %4905 = vmatmul.mubr.bf16.gmra.mrb[0].mxu0 %v3586
  %v4906 = vpop.f32.mrb[0].mxu0
  %v4907 = vadd.f32 %v4675, %v4906
  %v4908 = vpop.f32.mrb[0].mxu0
  %v4909 = vpop.f32.mrb[0].mxu0
  %v4910 = vadd.f32 %v4678, %v4909
  %v4911 = vpop.f32.mrb[0].mxu0
  %4912 = vmatprep.mubr.bf16.mxu0 %v3600
  %4913 = vmatmul.mubr.bf16.gmra.mrb[0].mxu0 %v3599
  %v4914 = vpop.f32.mrb[0].mxu0
  %v4915 = vadd.f32 %v4683, %v4914
  %v4916 = vpop.f32.mrb[0].mxu0
  %v4917 = vpop.f32.mrb[0].mxu0
  %v4918 = vadd.f32 %v4686, %v4917
  %v4919 = vpop.f32.mrb[0].mxu0
  %4920 = vmatprep.mubr.bf16.mxu0 %v3613
  %4921 = vmatmul.mubr.bf16.gmra.mrb[0].mxu0 %v3612
  %v4922 = vpop.f32.mrb[0].mxu0
  %v4923 = vadd.f32 %v4691, %v4922
  %v4924 = vpop.f32.mrb[0].mxu0
  %v4925 = vpop.f32.mrb[0].mxu0
  %v4926 = vadd.f32 %v4694, %v4925
  %v4927 = vpop.f32.mrb[0].mxu0
  %4928 = vmatprep.mubr.bf16.mxu0 %v3626
  %4929 = vmatmul.mubr.bf16.gmra.mrb[0].mxu0 %v3625
  %v4930 = vpop.f32.mrb[0].mxu0
  %v4931 = vadd.f32 %v4699, %v4930
  %v4932 = vpop.f32.mrb[0].mxu0
  %v4933 = vpop.f32.mrb[0].mxu0
  %v4934 = vpop.f32.mrb[0].mxu0
  %4935 = vdwg.mxu0
  %4936 = vmatprep.subr.bf16.mxu0 0
  %4937 = vmatpush1.bf16.msra.mxu0 %v1950
  %4938 = vmatprep.subr.bf16.mxu0 0
  %4939 = vmatpush1.bf16.msra.mxu0 %v1951
  %4940 = vmatprep.subr.bf16.mxu0 0
  %4941 = vmatpush1.bf16.msra.mxu0 %v1952
  %4942 = vmatprep.subr.bf16.mxu0 0
  %4943 = vmatpush1.bf16.msra.mxu0 %v1953
  %4944 = vmatprep.subr.bf16.mxu0 0
  %4945 = vmatpush1.bf16.msra.mxu0 %v1954
  %4946 = vmatprep.subr.bf16.mxu0 0
  %4947 = vmatpush1.bf16.msra.mxu0 %v1955
  %4948 = vmatprep.subr.bf16.mxu0 0
  %4949 = vmatpush1.bf16.msra.mxu0 %v1956
  %4950 = vmatprep.subr.bf16.mxu0 0
  %4951 = vmatpush1.bf16.msra.mxu0 %v1957
  %4952 = vmatprep.subr.bf16.mxu0 0
  %4953 = vmatpush1.bf16.msra.mxu0 %v1958
  %4954 = vmatprep.subr.bf16.mxu0 0
  %4955 = vmatpush1.bf16.msra.mxu0 %v1959
  %4956 = vmatprep.subr.bf16.mxu0 0
  %4957 = vmatpush1.bf16.msra.mxu0 %v1960
  %4958 = vmatprep.subr.bf16.mxu0 0
  %4959 = vmatpush1.bf16.msra.mxu0 %v1961
  %4960 = vmatprep.subr.bf16.mxu0 0
  %4961 = vmatpush1.bf16.msra.mxu0 %v1962
  %4962 = vmatprep.subr.bf16.mxu0 0
  %4963 = vmatpush1.bf16.msra.mxu0 %v1963
  %4964 = vmatprep.subr.bf16.mxu0 0
  %4965 = vmatpush1.bf16.msra.mxu0 %v1964
  %4966 = vmatprep.subr.bf16.mxu0 0
  %4967 = vmatpush1.bf16.msra.mxu0 %v1965
  %4968 = vmatprep.mubr.bf16.mxu0 %v3316
  %4969 = vmatmul.mubr.bf16.gmra.mrb[0].mxu0 %v3315
  %v4970 = vpop.f32.mrb[0].mxu0
  %v4971 = vadd.f32 %v4739, %v4970
  %v4972 = vpop.f32.mrb[0].mxu0
  %v4973 = vpop.f32.mrb[0].mxu0
  %v4974 = vadd.f32 %v4742, %v4973
  %v4975 = vpop.f32.mrb[0].mxu0
  %4976 = vmatprep.mubr.bf16.mxu0 %v3329
  %4977 = vmatmul.mubr.bf16.gmra.mrb[0].mxu0 %v3328
  %v4978 = vpop.f32.mrb[0].mxu0
  %v4979 = vadd.f32 %v4747, %v4978
  %v4980 = vpop.f32.mrb[0].mxu0
  %v4981 = vpop.f32.mrb[0].mxu0
  %v4982 = vadd.f32 %v4750, %v4981
  %v4983 = vpop.f32.mrb[0].mxu0
  %4984 = vmatprep.mubr.bf16.mxu0 %v3342
  %4985 = vmatmul.mubr.bf16.gmra.mrb[0].mxu0 %v3341
  %v4986 = vpop.f32.mrb[0].mxu0
  %v4987 = vadd.f32 %v4755, %v4986
  %v4988 = vpop.f32.mrb[0].mxu0
  %v4989 = vpop.f32.mrb[0].mxu0
  %v4990 = vadd.f32 %v4758, %v4989
  %v4991 = vpop.f32.mrb[0].mxu0
  %4992 = vmatprep.mubr.bf16.mxu0 %v3355
  %4993 = vmatmul.mubr.bf16.gmra.mrb[0].mxu0 %v3354
  %v4994 = vpop.f32.mrb[0].mxu0
  %v4995 = vadd.f32 %v4763, %v4994
  %v4996 = vpop.f32.mrb[0].mxu0
  %v4997 = vpop.f32.mrb[0].mxu0
  %v4998 = vadd.f32 %v4766, %v4997
  %v4999 = vpop.f32.mrb[0].mxu0
  %5000 = vmatprep.mubr.bf16.mxu0 %v3368
  %5001 = vmatmul.mubr.bf16.gmra.mrb[0].mxu0 %v3367
  %v5002 = vpop.f32.mrb[0].mxu0
  %v5003 = vadd.f32 %v4771, %v5002
  %v5004 = vpop.f32.mrb[0].mxu0
  %v5005 = vpop.f32.mrb[0].mxu0
  %v5006 = vadd.f32 %v4774, %v5005
  %v5007 = vpop.f32.mrb[0].mxu0
  %5008 = vmatprep.mubr.bf16.mxu0 %v3381
  %5009 = vmatmul.mubr.bf16.gmra.mrb[0].mxu0 %v3380
  %v5010 = vpop.f32.mrb[0].mxu0
  %v5011 = vadd.f32 %v4779, %v5010
  %v5012 = vpop.f32.mrb[0].mxu0
  %v5013 = vpop.f32.mrb[0].mxu0
  %v5014 = vadd.f32 %v4782, %v5013
  %v5015 = vpop.f32.mrb[0].mxu0
  %5016 = vmatprep.mubr.bf16.mxu0 %v3394
  %5017 = vmatmul.mubr.bf16.gmra.mrb[0].mxu0 %v3393
  %v5018 = vpop.f32.mrb[0].mxu0
  %v5019 = vadd.f32 %v4787, %v5018
  %v5020 = vpop.f32.mrb[0].mxu0
  %v5021 = vpop.f32.mrb[0].mxu0
  %v5022 = vadd.f32 %v4790, %v5021
  %v5023 = vpop.f32.mrb[0].mxu0
  %5024 = vmatprep.mubr.bf16.mxu0 %v3407
  %5025 = vmatmul.mubr.bf16.gmra.mrb[0].mxu0 %v3406
  %v5026 = vpop.f32.mrb[0].mxu0
  %v5027 = vadd.f32 %v4795, %v5026
  %v5028 = vpop.f32.mrb[0].mxu0
  %v5029 = vpop.f32.mrb[0].mxu0
  %v5030 = vadd.f32 %v4798, %v5029
  %v5031 = vpop.f32.mrb[0].mxu0
  %5032 = vmatprep.mubr.bf16.mxu0 %v3420
  %5033 = vmatmul.mubr.bf16.gmra.mrb[0].mxu0 %v3419
  %v5034 = vpop.f32.mrb[0].mxu0
  %v5035 = vadd.f32 %v4803, %v5034
  %v5036 = vpop.f32.mrb[0].mxu0
  %v5037 = vpop.f32.mrb[0].mxu0
  %v5038 = vadd.f32 %v4806, %v5037
  %v5039 = vpop.f32.mrb[0].mxu0
  %5040 = vmatprep.mubr.bf16.mxu0 %v3433
  %5041 = vmatmul.mubr.bf16.gmra.mrb[0].mxu0 %v3432
  %v5042 = vpop.f32.mrb[0].mxu0
  %v5043 = vadd.f32 %v4811, %v5042
  %v5044 = vpop.f32.mrb[0].mxu0
  %v5045 = vpop.f32.mrb[0].mxu0
  %v5046 = vadd.f32 %v4814, %v5045
  %v5047 = vpop.f32.mrb[0].mxu0
  %5048 = vmatprep.mubr.bf16.mxu0 %v3446
  %5049 = vmatmul.mubr.bf16.gmra.mrb[0].mxu0 %v3445
  %v5050 = vpop.f32.mrb[0].mxu0
  %v5051 = vadd.f32 %v4819, %v5050
  %v5052 = vpop.f32.mrb[0].mxu0
  %v5053 = vpop.f32.mrb[0].mxu0
  %v5054 = vadd.f32 %v4822, %v5053
  %v5055 = vpop.f32.mrb[0].mxu0
  %5056 = vmatprep.mubr.bf16.mxu0 %v3459
  %5057 = vmatmul.mubr.bf16.gmra.mrb[0].mxu0 %v3458
  %v5058 = vpop.f32.mrb[0].mxu0
  %v5059 = vadd.f32 %v4827, %v5058
  %v5060 = vpop.f32.mrb[0].mxu0
  %v5061 = vpop.f32.mrb[0].mxu0
  %v5062 = vadd.f32 %v4830, %v5061
  %v5063 = vpop.f32.mrb[0].mxu0
  %5064 = vmatprep.mubr.bf16.mxu0 %v3472
  %5065 = vmatmul.mubr.bf16.gmra.mrb[0].mxu0 %v3471
  %v5066 = vpop.f32.mrb[0].mxu0
  %v5067 = vadd.f32 %v4835, %v5066
  %v5068 = vpop.f32.mrb[0].mxu0
  %v5069 = vpop.f32.mrb[0].mxu0
  %v5070 = vadd.f32 %v4838, %v5069
  %v5071 = vpop.f32.mrb[0].mxu0
  %5072 = vmatprep.mubr.bf16.mxu0 %v3485
  %5073 = vmatmul.mubr.bf16.gmra.mrb[0].mxu0 %v3484
  %v5074 = vpop.f32.mrb[0].mxu0
  %v5075 = vadd.f32 %v4843, %v5074
  %v5076 = vpop.f32.mrb[0].mxu0
  %v5077 = vpop.f32.mrb[0].mxu0
  %v5078 = vadd.f32 %v4846, %v5077
  %v5079 = vpop.f32.mrb[0].mxu0
  %5080 = vmatprep.mubr.bf16.mxu0 %v3498
  %5081 = vmatmul.mubr.bf16.gmra.mrb[0].mxu0 %v3497
  %v5082 = vpop.f32.mrb[0].mxu0
  %v5083 = vadd.f32 %v4851, %v5082
  %v5084 = vpop.f32.mrb[0].mxu0
  %v5085 = vpop.f32.mrb[0].mxu0
  %v5086 = vadd.f32 %v4854, %v5085
  %v5087 = vpop.f32.mrb[0].mxu0
  %5088 = vmatprep.mubr.bf16.mxu0 %v3511
  %5089 = vmatmul.mubr.bf16.gmra.mrb[0].mxu0 %v3510
  %v5090 = vpop.f32.mrb[0].mxu0
  %v5091 = vadd.f32 %v4859, %v5090
  %v5092 = vpop.f32.mrb[0].mxu0
  %v5093 = vpop.f32.mrb[0].mxu0
  %v5094 = vadd.f32 %v4862, %v5093
  %v5095 = vpop.f32.mrb[0].mxu0
  %5096 = vmatprep.mubr.bf16.mxu0 %v3524
  %5097 = vmatmul.mubr.bf16.gmra.mrb[0].mxu0 %v3523
  %v5098 = vpop.f32.mrb[0].mxu0
  %v5099 = vadd.f32 %v4867, %v5098
  %v5100 = vpop.f32.mrb[0].mxu0
  %v5101 = vpop.f32.mrb[0].mxu0
  %v5102 = vadd.f32 %v4870, %v5101
  %v5103 = vpop.f32.mrb[0].mxu0
  %5104 = vmatprep.mubr.bf16.mxu0 %v3537
  %5105 = vmatmul.mubr.bf16.gmra.mrb[0].mxu0 %v3536
  %v5106 = vpop.f32.mrb[0].mxu0
  %v5107 = vadd.f32 %v4875, %v5106
  %v5108 = vpop.f32.mrb[0].mxu0
  %v5109 = vpop.f32.mrb[0].mxu0
  %v5110 = vadd.f32 %v4878, %v5109
  %v5111 = vpop.f32.mrb[0].mxu0
  %5112 = vmatprep.mubr.bf16.mxu0 %v3550
  %5113 = vmatmul.mubr.bf16.gmra.mrb[0].mxu0 %v3549
  %v5114 = vpop.f32.mrb[0].mxu0
  %v5115 = vadd.f32 %v4883, %v5114
  %v5116 = vpop.f32.mrb[0].mxu0
  %v5117 = vpop.f32.mrb[0].mxu0
  %v5118 = vadd.f32 %v4886, %v5117
  %v5119 = vpop.f32.mrb[0].mxu0
  %5120 = vmatprep.mubr.bf16.mxu0 %v3563
  %5121 = vmatmul.mubr.bf16.gmra.mrb[0].mxu0 %v3562
  %v5122 = vpop.f32.mrb[0].mxu0
  %v5123 = vadd.f32 %v4891, %v5122
  %v5124 = vpop.f32.mrb[0].mxu0
  %v5125 = vpop.f32.mrb[0].mxu0
  %v5126 = vadd.f32 %v4894, %v5125
  %v5127 = vpop.f32.mrb[0].mxu0
  %5128 = vmatprep.mubr.bf16.mxu0 %v3576
  %5129 = vmatmul.mubr.bf16.gmra.mrb[0].mxu0 %v3575
  %v5130 = vpop.f32.mrb[0].mxu0
  %v5131 = vadd.f32 %v4899, %v5130
  %v5132 = vpop.f32.mrb[0].mxu0
  %v5133 = vpop.f32.mrb[0].mxu0
  %v5134 = vadd.f32 %v4902, %v5133
  %v5135 = vpop.f32.mrb[0].mxu0
  %5136 = vmatprep.mubr.bf16.mxu0 %v3589
  %5137 = vmatmul.mubr.bf16.gmra.mrb[0].mxu0 %v3588
  %v5138 = vpop.f32.mrb[0].mxu0
  %v5139 = vadd.f32 %v4907, %v5138
  %v5140 = vpop.f32.mrb[0].mxu0
  %v5141 = vpop.f32.mrb[0].mxu0
  %v5142 = vadd.f32 %v4910, %v5141
  %v5143 = vpop.f32.mrb[0].mxu0
  %5144 = vmatprep.mubr.bf16.mxu0 %v3602
  %5145 = vmatmul.mubr.bf16.gmra.mrb[0].mxu0 %v3601
  %v5146 = vpop.f32.mrb[0].mxu0
  %v5147 = vadd.f32 %v4915, %v5146
  %v5148 = vpop.f32.mrb[0].mxu0
  %v5149 = vpop.f32.mrb[0].mxu0
  %v5150 = vadd.f32 %v4918, %v5149
  %v5151 = vpop.f32.mrb[0].mxu0
  %5152 = vmatprep.mubr.bf16.mxu0 %v3615
  %5153 = vmatmul.mubr.bf16.gmra.mrb[0].mxu0 %v3614
  %v5154 = vpop.f32.mrb[0].mxu0
  %v5155 = vadd.f32 %v4923, %v5154
  %v5156 = vpop.f32.mrb[0].mxu0
  %v5157 = vpop.f32.mrb[0].mxu0
  %v5158 = vadd.f32 %v4926, %v5157
  %v5159 = vpop.f32.mrb[0].mxu0
  %5160 = vmatprep.mubr.bf16.mxu0 %v3628
  %5161 = vmatmul.mubr.bf16.gmra.mrb[0].mxu0 %v3627
  %v5162 = vpop.f32.mrb[0].mxu0
  %v5163 = vadd.f32 %v4931, %v5162
  %v5164 = vpop.f32.mrb[0].mxu0
  %v5165 = vpop.f32.mrb[0].mxu0
  %v5166 = vpop.f32.mrb[0].mxu0
  %5167 = vdwg.mxu0
  %5168 = vmatprep.subr.bf16.mxu0 0
  %5169 = vmatpush1.bf16.msra.mxu0 %v1966
  %5170 = vmatprep.subr.bf16.mxu0 0
  %5171 = vmatpush1.bf16.msra.mxu0 %v1967
  %5172 = vmatprep.subr.bf16.mxu0 0
  %5173 = vmatpush1.bf16.msra.mxu0 %v1968
  %5174 = vmatprep.subr.bf16.mxu0 0
  %5175 = vmatpush1.bf16.msra.mxu0 %v1969
  %5176 = vmatprep.subr.bf16.mxu0 0
  %5177 = vmatpush1.bf16.msra.mxu0 %v1970
  %5178 = vmatprep.subr.bf16.mxu0 0
  %5179 = vmatpush1.bf16.msra.mxu0 %v1971
  %5180 = vmatprep.subr.bf16.mxu0 0
  %5181 = vmatpush1.bf16.msra.mxu0 %v1972
  %5182 = vmatprep.subr.bf16.mxu0 0
  %5183 = vmatpush1.bf16.msra.mxu0 %v1973
  %5184 = vmatprep.subr.bf16.mxu0 0
  %5185 = vmatpush1.bf16.msra.mxu0 %v1974
  %5186 = vmatprep.subr.bf16.mxu0 0
  %5187 = vmatpush1.bf16.msra.mxu0 %v1975
  %5188 = vmatprep.subr.bf16.mxu0 0
  %5189 = vmatpush1.bf16.msra.mxu0 %v1976
  %5190 = vmatprep.subr.bf16.mxu0 0
  %5191 = vmatpush1.bf16.msra.mxu0 %v1977
  %5192 = vmatprep.subr.bf16.mxu0 0
  %5193 = vmatpush1.bf16.msra.mxu0 %v1978
  %5194 = vmatprep.subr.bf16.mxu0 0
  %5195 = vmatpush1.bf16.msra.mxu0 %v1979
  %5196 = vmatprep.subr.bf16.mxu0 0
  %5197 = vmatpush1.bf16.msra.mxu0 %v1980
  %5198 = vmatprep.subr.bf16.mxu0 0
  %5199 = vmatpush1.bf16.msra.mxu0 %v1981
  %5200 = vmatprep.mubr.bf16.mxu0 %v3318
  %5201 = vmatmul.mubr.bf16.gmra.mrb[0].mxu0 %v3317
  %v5202 = vpop.f32.mrb[0].mxu0
  %v5203 = vadd.f32 %v4971, %v5202
  %v5204 = vpop.f32.mrb[0].mxu0
  %v5205 = vpop.f32.mrb[0].mxu0
  %v5206 = vadd.f32 %v4974, %v5205
  %v5207 = vpop.f32.mrb[0].mxu0
  %5208 = vmatprep.mubr.bf16.mxu0 %v3331
  %5209 = vmatmul.mubr.bf16.gmra.mrb[0].mxu0 %v3330
  %v5210 = vpop.f32.mrb[0].mxu0
  %v5211 = vadd.f32 %v4979, %v5210
  %v5212 = vpop.f32.mrb[0].mxu0
  %v5213 = vpop.f32.mrb[0].mxu0
  %v5214 = vadd.f32 %v4982, %v5213
  %v5215 = vpop.f32.mrb[0].mxu0
  %5216 = vmatprep.mubr.bf16.mxu0 %v3344
  %5217 = vmatmul.mubr.bf16.gmra.mrb[0].mxu0 %v3343
  %v5218 = vpop.f32.mrb[0].mxu0
  %v5219 = vadd.f32 %v4987, %v5218
  %v5220 = vpop.f32.mrb[0].mxu0
  %v5221 = vpop.f32.mrb[0].mxu0
  %v5222 = vadd.f32 %v4990, %v5221
  %v5223 = vpop.f32.mrb[0].mxu0
  %5224 = vmatprep.mubr.bf16.mxu0 %v3357
  %5225 = vmatmul.mubr.bf16.gmra.mrb[0].mxu0 %v3356
  %v5226 = vpop.f32.mrb[0].mxu0
  %v5227 = vadd.f32 %v4995, %v5226
  %v5228 = vpop.f32.mrb[0].mxu0
  %v5229 = vpop.f32.mrb[0].mxu0
  %v5230 = vadd.f32 %v4998, %v5229
  %v5231 = vpop.f32.mrb[0].mxu0
  %5232 = vmatprep.mubr.bf16.mxu0 %v3370
  %5233 = vmatmul.mubr.bf16.gmra.mrb[0].mxu0 %v3369
  %v5234 = vpop.f32.mrb[0].mxu0
  %v5235 = vadd.f32 %v5003, %v5234
  %v5236 = vpop.f32.mrb[0].mxu0
  %v5237 = vpop.f32.mrb[0].mxu0
  %v5238 = vadd.f32 %v5006, %v5237
  %v5239 = vpop.f32.mrb[0].mxu0
  %5240 = vmatprep.mubr.bf16.mxu0 %v3383
  %5241 = vmatmul.mubr.bf16.gmra.mrb[0].mxu0 %v3382
  %v5242 = vpop.f32.mrb[0].mxu0
  %v5243 = vadd.f32 %v5011, %v5242
  %v5244 = vpop.f32.mrb[0].mxu0
  %v5245 = vpop.f32.mrb[0].mxu0
  %v5246 = vadd.f32 %v5014, %v5245
  %v5247 = vpop.f32.mrb[0].mxu0
  %5248 = vmatprep.mubr.bf16.mxu0 %v3396
  %5249 = vmatmul.mubr.bf16.gmra.mrb[0].mxu0 %v3395
  %v5250 = vpop.f32.mrb[0].mxu0
  %v5251 = vadd.f32 %v5019, %v5250
  %v5252 = vpop.f32.mrb[0].mxu0
  %v5253 = vpop.f32.mrb[0].mxu0
  %v5254 = vadd.f32 %v5022, %v5253
  %v5255 = vpop.f32.mrb[0].mxu0
  %5256 = vmatprep.mubr.bf16.mxu0 %v3409
  %5257 = vmatmul.mubr.bf16.gmra.mrb[0].mxu0 %v3408
  %v5258 = vpop.f32.mrb[0].mxu0
  %v5259 = vadd.f32 %v5027, %v5258
  %v5260 = vpop.f32.mrb[0].mxu0
  %v5261 = vpop.f32.mrb[0].mxu0
  %v5262 = vadd.f32 %v5030, %v5261
  %v5263 = vpop.f32.mrb[0].mxu0
  %5264 = vmatprep.mubr.bf16.mxu0 %v3422
  %5265 = vmatmul.mubr.bf16.gmra.mrb[0].mxu0 %v3421
  %v5266 = vpop.f32.mrb[0].mxu0
  %v5267 = vadd.f32 %v5035, %v5266
  %v5268 = vpop.f32.mrb[0].mxu0
  %v5269 = vpop.f32.mrb[0].mxu0
  %v5270 = vadd.f32 %v5038, %v5269
  %v5271 = vpop.f32.mrb[0].mxu0
  %5272 = vmatprep.mubr.bf16.mxu0 %v3435
  %5273 = vmatmul.mubr.bf16.gmra.mrb[0].mxu0 %v3434
  %v5274 = vpop.f32.mrb[0].mxu0
  %v5275 = vadd.f32 %v5043, %v5274
  %v5276 = vpop.f32.mrb[0].mxu0
  %v5277 = vpop.f32.mrb[0].mxu0
  %v5278 = vadd.f32 %v5046, %v5277
  %v5279 = vpop.f32.mrb[0].mxu0
  %5280 = vmatprep.mubr.bf16.mxu0 %v3448
  %5281 = vmatmul.mubr.bf16.gmra.mrb[0].mxu0 %v3447
  %v5282 = vpop.f32.mrb[0].mxu0
  %v5283 = vadd.f32 %v5051, %v5282
  %v5284 = vpop.f32.mrb[0].mxu0
  %v5285 = vpop.f32.mrb[0].mxu0
  %v5286 = vadd.f32 %v5054, %v5285
  %v5287 = vpop.f32.mrb[0].mxu0
  %5288 = vmatprep.mubr.bf16.mxu0 %v3461
  %5289 = vmatmul.mubr.bf16.gmra.mrb[0].mxu0 %v3460
  %v5290 = vpop.f32.mrb[0].mxu0
  %v5291 = vadd.f32 %v5059, %v5290
  %v5292 = vpop.f32.mrb[0].mxu0
  %v5293 = vpop.f32.mrb[0].mxu0
  %v5294 = vadd.f32 %v5062, %v5293
  %v5295 = vpop.f32.mrb[0].mxu0
  %5296 = vmatprep.mubr.bf16.mxu0 %v3474
  %5297 = vmatmul.mubr.bf16.gmra.mrb[0].mxu0 %v3473
  %v5298 = vpop.f32.mrb[0].mxu0
  %v5299 = vadd.f32 %v5067, %v5298
  %v5300 = vpop.f32.mrb[0].mxu0
  %v5301 = vpop.f32.mrb[0].mxu0
  %v5302 = vadd.f32 %v5070, %v5301
  %v5303 = vpop.f32.mrb[0].mxu0
  %5304 = vmatprep.mubr.bf16.mxu0 %v3487
  %5305 = vmatmul.mubr.bf16.gmra.mrb[0].mxu0 %v3486
  %v5306 = vpop.f32.mrb[0].mxu0
  %v5307 = vadd.f32 %v5075, %v5306
  %v5308 = vpop.f32.mrb[0].mxu0
  %v5309 = vpop.f32.mrb[0].mxu0
  %v5310 = vadd.f32 %v5078, %v5309
  %v5311 = vpop.f32.mrb[0].mxu0
  %5312 = vmatprep.mubr.bf16.mxu0 %v3500
  %5313 = vmatmul.mubr.bf16.gmra.mrb[0].mxu0 %v3499
  %v5314 = vpop.f32.mrb[0].mxu0
  %v5315 = vadd.f32 %v5083, %v5314
  %v5316 = vpop.f32.mrb[0].mxu0
  %v5317 = vpop.f32.mrb[0].mxu0
  %v5318 = vadd.f32 %v5086, %v5317
  %v5319 = vpop.f32.mrb[0].mxu0
  %5320 = vmatprep.mubr.bf16.mxu0 %v3513
  %5321 = vmatmul.mubr.bf16.gmra.mrb[0].mxu0 %v3512
  %v5322 = vpop.f32.mrb[0].mxu0
  %v5323 = vadd.f32 %v5091, %v5322
  %v5324 = vpop.f32.mrb[0].mxu0
  %v5325 = vpop.f32.mrb[0].mxu0
  %v5326 = vadd.f32 %v5094, %v5325
  %v5327 = vpop.f32.mrb[0].mxu0
  %5328 = vmatprep.mubr.bf16.mxu0 %v3526
  %5329 = vmatmul.mubr.bf16.gmra.mrb[0].mxu0 %v3525
  %v5330 = vpop.f32.mrb[0].mxu0
  %v5331 = vadd.f32 %v5099, %v5330
  %v5332 = vpop.f32.mrb[0].mxu0
  %v5333 = vpop.f32.mrb[0].mxu0
  %v5334 = vadd.f32 %v5102, %v5333
  %v5335 = vpop.f32.mrb[0].mxu0
  %5336 = vmatprep.mubr.bf16.mxu0 %v3539
  %5337 = vmatmul.mubr.bf16.gmra.mrb[0].mxu0 %v3538
  %v5338 = vpop.f32.mrb[0].mxu0
  %v5339 = vadd.f32 %v5107, %v5338
  %v5340 = vpop.f32.mrb[0].mxu0
  %v5341 = vpop.f32.mrb[0].mxu0
  %v5342 = vadd.f32 %v5110, %v5341
  %v5343 = vpop.f32.mrb[0].mxu0
  %5344 = vmatprep.mubr.bf16.mxu0 %v3552
  %5345 = vmatmul.mubr.bf16.gmra.mrb[0].mxu0 %v3551
  %v5346 = vpop.f32.mrb[0].mxu0
  %v5347 = vadd.f32 %v5115, %v5346
  %v5348 = vpop.f32.mrb[0].mxu0
  %v5349 = vpop.f32.mrb[0].mxu0
  %v5350 = vadd.f32 %v5118, %v5349
  %v5351 = vpop.f32.mrb[0].mxu0
  %5352 = vmatprep.mubr.bf16.mxu0 %v3565
  %5353 = vmatmul.mubr.bf16.gmra.mrb[0].mxu0 %v3564
  %v5354 = vpop.f32.mrb[0].mxu0
  %v5355 = vadd.f32 %v5123, %v5354
  %v5356 = vpop.f32.mrb[0].mxu0
  %v5357 = vpop.f32.mrb[0].mxu0
  %v5358 = vadd.f32 %v5126, %v5357
  %v5359 = vpop.f32.mrb[0].mxu0
  %5360 = vmatprep.mubr.bf16.mxu0 %v3578
  %5361 = vmatmul.mubr.bf16.gmra.mrb[0].mxu0 %v3577
  %v5362 = vpop.f32.mrb[0].mxu0
  %v5363 = vadd.f32 %v5131, %v5362
  %v5364 = vpop.f32.mrb[0].mxu0
  %v5365 = vpop.f32.mrb[0].mxu0
  %v5366 = vadd.f32 %v5134, %v5365
  %v5367 = vpop.f32.mrb[0].mxu0
  %5368 = vmatprep.mubr.bf16.mxu0 %v3591
  %5369 = vmatmul.mubr.bf16.gmra.mrb[0].mxu0 %v3590
  %v5370 = vpop.f32.mrb[0].mxu0
  %v5371 = vadd.f32 %v5139, %v5370
  %v5372 = vpop.f32.mrb[0].mxu0
  %v5373 = vpop.f32.mrb[0].mxu0
  %v5374 = vadd.f32 %v5142, %v5373
  %v5375 = vpop.f32.mrb[0].mxu0
  %5376 = vmatprep.mubr.bf16.mxu0 %v3604
  %5377 = vmatmul.mubr.bf16.gmra.mrb[0].mxu0 %v3603
  %v5378 = vpop.f32.mrb[0].mxu0
  %v5379 = vadd.f32 %v5147, %v5378
  %v5380 = vpop.f32.mrb[0].mxu0
  %v5381 = vpop.f32.mrb[0].mxu0
  %v5382 = vadd.f32 %v5150, %v5381
  %v5383 = vpop.f32.mrb[0].mxu0
  %5384 = vmatprep.mubr.bf16.mxu0 %v3617
  %5385 = vmatmul.mubr.bf16.gmra.mrb[0].mxu0 %v3616
  %v5386 = vpop.f32.mrb[0].mxu0
  %v5387 = vadd.f32 %v5155, %v5386
  %v5388 = vpop.f32.mrb[0].mxu0
  %v5389 = vpop.f32.mrb[0].mxu0
  %v5390 = vadd.f32 %v5158, %v5389
  %v5391 = vpop.f32.mrb[0].mxu0
  %5392 = vmatprep.mubr.bf16.mxu0 %v3630
  %5393 = vmatmul.mubr.bf16.gmra.mrb[0].mxu0 %v3629
  %v5394 = vpop.f32.mrb[0].mxu0
  %v5395 = vadd.f32 %v5163, %v5394
  %v5396 = vpop.f32.mrb[0].mxu0
  %v5397 = vpop.f32.mrb[0].mxu0
  %v5398 = vpop.f32.mrb[0].mxu0
  %5399 = vdwg.mxu0
  %5400 = vmatprep.subr.bf16.mxu0 0
  %5401 = vmatpush1.bf16.msra.mxu0 %v1982
  %5402 = vmatprep.subr.bf16.mxu0 0
  %5403 = vmatpush1.bf16.msra.mxu0 %v1983
  %5404 = vmatprep.subr.bf16.mxu0 0
  %5405 = vmatpush1.bf16.msra.mxu0 0
  %5406 = vmatprep.subr.bf16.mxu0 0
  %5407 = vmatpush1.bf16.msra.mxu0 0
  %5408 = vmatprep.subr.bf16.mxu0 0
  %5409 = vmatpush1.bf16.msra.mxu0 0
  %5410 = vmatprep.subr.bf16.mxu0 0
  %5411 = vmatpush1.bf16.msra.mxu0 0
  %5412 = vmatprep.subr.bf16.mxu0 0
  %5413 = vmatpush1.bf16.msra.mxu0 0
  %5414 = vmatprep.subr.bf16.mxu0 0
  %5415 = vmatpush1.bf16.msra.mxu0 0
  %5416 = vmatprep.subr.bf16.mxu0 0
  %5417 = vmatpush1.bf16.msra.mxu0 0
  %5418 = vmatprep.subr.bf16.mxu0 0
  %5419 = vmatpush1.bf16.msra.mxu0 0
  %5420 = vmatprep.subr.bf16.mxu0 0
  %5421 = vmatpush1.bf16.msra.mxu0 0
  %5422 = vmatprep.subr.bf16.mxu0 0
  %5423 = vmatpush1.bf16.msra.mxu0 0
  %5424 = vmatprep.subr.bf16.mxu0 0
  %5425 = vmatpush1.bf16.msra.mxu0 0
  %5426 = vmatprep.subr.bf16.mxu0 0
  %5427 = vmatpush1.bf16.msra.mxu0 0
  %5428 = vmatprep.subr.bf16.mxu0 0
  %5429 = vmatpush1.bf16.msra.mxu0 0
  %5430 = vmatprep.subr.bf16.mxu0 0
  %5431 = vmatpush1.bf16.msra.mxu0 0
  %5432 = vmatprep.mubr.bf16.mxu0 0
  %5433 = vmatmul.mubr.bf16.gmra.mrb[0].mxu0 %v3934
  %v5434 = vpop.f32.mrb[0].mxu0
  %v5435 = vadd.f32 %v5203, %v5434
  %v5436 = vpop.f32.mrb[0].mxu0
  %v5437 = vpop.f32.mrb[0].mxu0
  %v5438 = vadd.f32 %v5206, %v5437
  %v5439 = vpop.f32.mrb[0].mxu0
  %5440 = vmatprep.mubr.bf16.mxu0 0
  %5441 = vmatmul.mubr.bf16.gmra.mrb[0].mxu0 %v3937
  %v5442 = vpop.f32.mrb[0].mxu0
  %v5443 = vadd.f32 %v5211, %v5442
  %v5444 = vpop.f32.mrb[0].mxu0
  %v5445 = vpop.f32.mrb[0].mxu0
  %v5446 = vadd.f32 %v5214, %v5445
  %v5447 = vpop.f32.mrb[0].mxu0
  %5448 = vmatprep.mubr.bf16.mxu0 0
  %5449 = vmatmul.mubr.bf16.gmra.mrb[0].mxu0 %v3940
  %v5450 = vpop.f32.mrb[0].mxu0
  %v5451 = vadd.f32 %v5219, %v5450
  %v5452 = vpop.f32.mrb[0].mxu0
  %v5453 = vpop.f32.mrb[0].mxu0
  %v5454 = vadd.f32 %v5222, %v5453
  %v5455 = vpop.f32.mrb[0].mxu0
  %5456 = vmatprep.mubr.bf16.mxu0 0
  %5457 = vmatmul.mubr.bf16.gmra.mrb[0].mxu0 %v3943
  %v5458 = vpop.f32.mrb[0].mxu0
  %v5459 = vadd.f32 %v5227, %v5458
  %v5460 = vpop.f32.mrb[0].mxu0
  %v5461 = vpop.f32.mrb[0].mxu0
  %v5462 = vadd.f32 %v5230, %v5461
  %v5463 = vpop.f32.mrb[0].mxu0
  %5464 = vmatprep.mubr.bf16.mxu0 0
  %5465 = vmatmul.mubr.bf16.gmra.mrb[0].mxu0 %v3946
  %v5466 = vpop.f32.mrb[0].mxu0
  %v5467 = vadd.f32 %v5235, %v5466
  %v5468 = vpop.f32.mrb[0].mxu0
  %v5469 = vpop.f32.mrb[0].mxu0
  %v5470 = vadd.f32 %v5238, %v5469
  %v5471 = vpop.f32.mrb[0].mxu0
  %5472 = vmatprep.mubr.bf16.mxu0 0
  %5473 = vmatmul.mubr.bf16.gmra.mrb[0].mxu0 %v3949
  %v5474 = vpop.f32.mrb[0].mxu0
  %v5475 = vadd.f32 %v5243, %v5474
  %v5476 = vpop.f32.mrb[0].mxu0
  %v5477 = vpop.f32.mrb[0].mxu0
  %v5478 = vadd.f32 %v5246, %v5477
  %v5479 = vpop.f32.mrb[0].mxu0
  %5480 = vmatprep.mubr.bf16.mxu0 0
  %5481 = vmatmul.mubr.bf16.gmra.mrb[0].mxu0 %v3952
  %v5482 = vpop.f32.mrb[0].mxu0
  %v5483 = vadd.f32 %v5251, %v5482
  %v5484 = vpop.f32.mrb[0].mxu0
  %v5485 = vpop.f32.mrb[0].mxu0
  %v5486 = vadd.f32 %v5254, %v5485
  %v5487 = vpop.f32.mrb[0].mxu0
  %5488 = vmatprep.mubr.bf16.mxu0 0
  %5489 = vmatmul.mubr.bf16.gmra.mrb[0].mxu0 %v3955
  %v5490 = vpop.f32.mrb[0].mxu0
  %v5491 = vadd.f32 %v5259, %v5490
  %v5492 = vpop.f32.mrb[0].mxu0
  %v5493 = vpop.f32.mrb[0].mxu0
  %v5494 = vadd.f32 %v5262, %v5493
  %v5495 = vpop.f32.mrb[0].mxu0
  %5496 = vmatprep.mubr.bf16.mxu0 0
  %5497 = vmatmul.mubr.bf16.gmra.mrb[0].mxu0 %v3958
  %v5498 = vpop.f32.mrb[0].mxu0
  %v5499 = vadd.f32 %v5267, %v5498
  %v5500 = vpop.f32.mrb[0].mxu0
  %v5501 = vpop.f32.mrb[0].mxu0
  %v5502 = vadd.f32 %v5270, %v5501
  %v5503 = vpop.f32.mrb[0].mxu0
  %5504 = vmatprep.mubr.bf16.mxu0 0
  %5505 = vmatmul.mubr.bf16.gmra.mrb[0].mxu0 %v3961
  %v5506 = vpop.f32.mrb[0].mxu0
  %v5507 = vadd.f32 %v5275, %v5506
  %v5508 = vpop.f32.mrb[0].mxu0
  %v5509 = vpop.f32.mrb[0].mxu0
  %v5510 = vadd.f32 %v5278, %v5509
  %v5511 = vpop.f32.mrb[0].mxu0
  %5512 = vmatprep.mubr.bf16.mxu0 0
  %5513 = vmatmul.mubr.bf16.gmra.mrb[0].mxu0 %v3964
  %v5514 = vpop.f32.mrb[0].mxu0
  %v5515 = vadd.f32 %v5283, %v5514
  %v5516 = vpop.f32.mrb[0].mxu0
  %v5517 = vpop.f32.mrb[0].mxu0
  %v5518 = vadd.f32 %v5286, %v5517
  %v5519 = vpop.f32.mrb[0].mxu0
  %5520 = vmatprep.mubr.bf16.mxu0 0
  %5521 = vmatmul.mubr.bf16.gmra.mrb[0].mxu0 %v3967
  %v5522 = vpop.f32.mrb[0].mxu0
  %v5523 = vadd.f32 %v5291, %v5522
  %v5524 = vpop.f32.mrb[0].mxu0
  %v5525 = vpop.f32.mrb[0].mxu0
  %v5526 = vadd.f32 %v5294, %v5525
  %v5527 = vpop.f32.mrb[0].mxu0
  %5528 = vmatprep.mubr.bf16.mxu0 0
  %5529 = vmatmul.mubr.bf16.gmra.mrb[0].mxu0 %v3970
  %v5530 = vpop.f32.mrb[0].mxu0
  %v5531 = vadd.f32 %v5299, %v5530
  %v5532 = vpop.f32.mrb[0].mxu0
  %v5533 = vpop.f32.mrb[0].mxu0
  %v5534 = vadd.f32 %v5302, %v5533
  %v5535 = vpop.f32.mrb[0].mxu0
  %5536 = vmatprep.mubr.bf16.mxu0 0
  %5537 = vmatmul.mubr.bf16.gmra.mrb[0].mxu0 %v3973
  %v5538 = vpop.f32.mrb[0].mxu0
  %v5539 = vadd.f32 %v5307, %v5538
  %v5540 = vpop.f32.mrb[0].mxu0
  %v5541 = vpop.f32.mrb[0].mxu0
  %v5542 = vadd.f32 %v5310, %v5541
  %v5543 = vpop.f32.mrb[0].mxu0
  %5544 = vmatprep.mubr.bf16.mxu0 0
  %5545 = vmatmul.mubr.bf16.gmra.mrb[0].mxu0 %v3976
  %v5546 = vpop.f32.mrb[0].mxu0
  %v5547 = vadd.f32 %v5315, %v5546
  %v5548 = vpop.f32.mrb[0].mxu0
  %v5549 = vpop.f32.mrb[0].mxu0
  %v5550 = vadd.f32 %v5318, %v5549
  %v5551 = vpop.f32.mrb[0].mxu0
  %5552 = vmatprep.mubr.bf16.mxu0 0
  %5553 = vmatmul.mubr.bf16.gmra.mrb[0].mxu0 %v3979
  %v5554 = vpop.f32.mrb[0].mxu0
  %v5555 = vadd.f32 %v5323, %v5554
  %v5556 = vpop.f32.mrb[0].mxu0
  %v5557 = vpop.f32.mrb[0].mxu0
  %v5558 = vadd.f32 %v5326, %v5557
  %v5559 = vpop.f32.mrb[0].mxu0
  %5560 = vmatprep.mubr.bf16.mxu0 0
  %5561 = vmatmul.mubr.bf16.gmra.mrb[0].mxu0 %v3982
  %v5562 = vpop.f32.mrb[0].mxu0
  %v5563 = vadd.f32 %v5331, %v5562
  %v5564 = vpop.f32.mrb[0].mxu0
  %v5565 = vpop.f32.mrb[0].mxu0
  %v5566 = vadd.f32 %v5334, %v5565
  %v5567 = vpop.f32.mrb[0].mxu0
  %5568 = vmatprep.mubr.bf16.mxu0 0
  %5569 = vmatmul.mubr.bf16.gmra.mrb[0].mxu0 %v3985
  %v5570 = vpop.f32.mrb[0].mxu0
  %v5571 = vadd.f32 %v5339, %v5570
  %v5572 = vpop.f32.mrb[0].mxu0
  %v5573 = vpop.f32.mrb[0].mxu0
  %v5574 = vadd.f32 %v5342, %v5573
  %v5575 = vpop.f32.mrb[0].mxu0
  %5576 = vmatprep.mubr.bf16.mxu0 0
  %5577 = vmatmul.mubr.bf16.gmra.mrb[0].mxu0 %v3988
  %v5578 = vpop.f32.mrb[0].mxu0
  %v5579 = vadd.f32 %v5347, %v5578
  %v5580 = vpop.f32.mrb[0].mxu0
  %v5581 = vpop.f32.mrb[0].mxu0
  %v5582 = vadd.f32 %v5350, %v5581
  %v5583 = vpop.f32.mrb[0].mxu0
  %5584 = vmatprep.mubr.bf16.mxu0 0
  %5585 = vmatmul.mubr.bf16.gmra.mrb[0].mxu0 %v3991
  %v5586 = vpop.f32.mrb[0].mxu0
  %v5587 = vadd.f32 %v5355, %v5586
  %v5588 = vpop.f32.mrb[0].mxu0
  %v5589 = vpop.f32.mrb[0].mxu0
  %v5590 = vadd.f32 %v5358, %v5589
  %v5591 = vpop.f32.mrb[0].mxu0
  %5592 = vmatprep.mubr.bf16.mxu0 0
  %5593 = vmatmul.mubr.bf16.gmra.mrb[0].mxu0 %v3994
  %v5594 = vpop.f32.mrb[0].mxu0
  %v5595 = vadd.f32 %v5363, %v5594
  %v5596 = vpop.f32.mrb[0].mxu0
  %v5597 = vpop.f32.mrb[0].mxu0
  %v5598 = vadd.f32 %v5366, %v5597
  %v5599 = vpop.f32.mrb[0].mxu0
  %5600 = vmatprep.mubr.bf16.mxu0 0
  %5601 = vmatmul.mubr.bf16.gmra.mrb[0].mxu0 %v3997
  %v5602 = vpop.f32.mrb[0].mxu0
  %v5603 = vadd.f32 %v5371, %v5602
  %v5604 = vpop.f32.mrb[0].mxu0
  %v5605 = vpop.f32.mrb[0].mxu0
  %v5606 = vadd.f32 %v5374, %v5605
  %v5607 = vpop.f32.mrb[0].mxu0
  %5608 = vmatprep.mubr.bf16.mxu0 0
  %5609 = vmatmul.mubr.bf16.gmra.mrb[0].mxu0 %v4000
  %v5610 = vpop.f32.mrb[0].mxu0
  %v5611 = vadd.f32 %v5379, %v5610
  %v5612 = vpop.f32.mrb[0].mxu0
  %v5613 = vpop.f32.mrb[0].mxu0
  %v5614 = vadd.f32 %v5382, %v5613
  %v5615 = vpop.f32.mrb[0].mxu0
  %5616 = vmatprep.mubr.bf16.mxu0 0
  %5617 = vmatmul.mubr.bf16.gmra.mrb[0].mxu0 %v4003
  %v5618 = vpop.f32.mrb[0].mxu0
  %v5619 = vadd.f32 %v5387, %v5618
  %v5620 = vpop.f32.mrb[0].mxu0
  %v5621 = vpop.f32.mrb[0].mxu0
  %v5622 = vadd.f32 %v5390, %v5621
  %v5623 = vpop.f32.mrb[0].mxu0
  %5624 = vmatprep.mubr.bf16.mxu0 0
  %5625 = vmatmul.mubr.bf16.gmra.mrb[0].mxu0 %v4006
  %v5626 = vpop.f32.mrb[0].mxu0
  %v5627 = vadd.f32 %v5395, %v5626
  %v5628 = vpop.f32.mrb[0].mxu0
  %v5629 = vpop.f32.mrb[0].mxu0
  %v5630 = vpop.f32.mrb[0].mxu0
  %5631 = vdwg.mxu0
  %v5632 = vpack.c.bf16 %v5438, %v5435
  %v5633 = vpack.c.bf16 %v5446, %v5443
  %v5634 = vpack.c.bf16 %v5454, %v5451
  %v5635 = vpack.c.bf16 %v5462, %v5459
  %v5636 = vpack.c.bf16 %v5470, %v5467
  %v5637 = vpack.c.bf16 %v5478, %v5475
  %v5638 = vpack.c.bf16 %v5486, %v5483
  %v5639 = vpack.c.bf16 %v5494, %v5491
  %v5640 = vpack.c.bf16 %v5502, %v5499
  %v5641 = vpack.c.bf16 %v5510, %v5507
  %v5642 = vpack.c.bf16 %v5518, %v5515
  %v5643 = vpack.c.bf16 %v5526, %v5523
  %v5644 = vpack.c.bf16 %v5534, %v5531
  %v5645 = vpack.c.bf16 %v5542, %v5539
  %v5646 = vpack.c.bf16 %v5550, %v5547
  %v5647 = vpack.c.bf16 %v5558, %v5555
  %v5648 = vpack.c.bf16 %v5566, %v5563
  %v5649 = vpack.c.bf16 %v5574, %v5571
  %v5650 = vpack.c.bf16 %v5582, %v5579
  %v5651 = vpack.c.bf16 %v5590, %v5587
  %v5652 = vpack.c.bf16 %v5598, %v5595
  %v5653 = vpack.c.bf16 %v5606, %v5603
  %v5654 = vpack.c.bf16 %v5614, %v5611
  %v5655 = vpack.c.bf16 %v5622, %v5619
  %v5656 = vpack.c.bf16 %v5627, %v5627
  %v5682 = vunpack.c.l.b16 %v5632
  %v5683 = vunpack.c.h.b16 %v5632
  %v5684 = vunpack.c.l.b16 %v5633
  %v5685 = vunpack.c.h.b16 %v5633
  %v5686 = vunpack.c.l.b16 %v5634
  %v5687 = vunpack.c.h.b16 %v5634
  %v5688 = vunpack.c.l.b16 %v5635
  %v5689 = vunpack.c.h.b16 %v5635
  %v5690 = vunpack.c.l.b16 %v5636
  %v5691 = vunpack.c.h.b16 %v5636
  %v5692 = vunpack.c.l.b16 %v5637
  %v5693 = vunpack.c.h.b16 %v5637
  %v5694 = vunpack.c.l.b16 %v5638
  %v5695 = vunpack.c.h.b16 %v5638
  %v5696 = vunpack.c.l.b16 %v5639
  %v5697 = vunpack.c.h.b16 %v5639
  %v5698 = vunpack.c.l.b16 %v5640
  %v5699 = vunpack.c.h.b16 %v5640
  %v5700 = vunpack.c.l.b16 %v5641
  %v5701 = vunpack.c.h.b16 %v5641
  %v5702 = vunpack.c.l.b16 %v5642
  %v5703 = vunpack.c.h.b16 %v5642
  %v5704 = vunpack.c.l.b16 %v5643
  %v5705 = vunpack.c.h.b16 %v5643
  %v5706 = vunpack.c.l.b16 %v5644
  %v5707 = vunpack.c.h.b16 %v5644
  %v5708 = vunpack.c.l.b16 %v5645
  %v5709 = vunpack.c.h.b16 %v5645
  %v5710 = vunpack.c.l.b16 %v5646
  %v5711 = vunpack.c.h.b16 %v5646
  %v5712 = vunpack.c.l.b16 %v5647
  %v5713 = vunpack.c.h.b16 %v5647
  %v5714 = vunpack.c.l.b16 %v5648
  %v5715 = vunpack.c.h.b16 %v5648
  %v5716 = vunpack.c.l.b16 %v5649
  %v5717 = vunpack.c.h.b16 %v5649
  %v5718 = vunpack.c.l.b16 %v5650
  %v5719 = vunpack.c.h.b16 %v5650
  %v5720 = vunpack.c.l.b16 %v5651
  %v5721 = vunpack.c.h.b16 %v5651
  %v5722 = vunpack.c.l.b16 %v5652
  %v5723 = vunpack.c.h.b16 %v5652
  %v5724 = vunpack.c.l.b16 %v5653
  %v5725 = vunpack.c.h.b16 %v5653
  %v5726 = vunpack.c.l.b16 %v5654
  %v5727 = vunpack.c.h.b16 %v5654
  %v5728 = vunpack.c.l.b16 %v5655
  %v5729 = vunpack.c.h.b16 %v5655
  %v5730 = vunpack.c.l.b16 %v5656
  %v5731 = vpack.c.b16 %v5682, %v5682
  %v5732 = vpack.c.b16 %v5683, %v5683
  %v5733 = vpack.c.b16 %v5684, %v5684
  %v5734 = vpack.c.b16 %v5685, %v5685
  %v5735 = vpack.c.b16 %v5686, %v5686
  %v5736 = vpack.c.b16 %v5687, %v5687
  %v5737 = vpack.c.b16 %v5688, %v5688
  %v5738 = vpack.c.b16 %v5689, %v5689
  %v5739 = vpack.c.b16 %v5690, %v5690
  %v5740 = vpack.c.b16 %v5691, %v5691
  %v5741 = vpack.c.b16 %v5692, %v5692
  %v5742 = vpack.c.b16 %v5693, %v5693
  %v5743 = vpack.c.b16 %v5694, %v5694
  %v5744 = vpack.c.b16 %v5695, %v5695
  %v5745 = vpack.c.b16 %v5696, %v5696
  %v5746 = vpack.c.b16 %v5697, %v5697
  %v5747 = vpack.c.b16 %v5698, %v5698
  %v5748 = vpack.c.b16 %v5699, %v5699
  %v5749 = vpack.c.b16 %v5700, %v5700
  %v5750 = vpack.c.b16 %v5701, %v5701
  %v5751 = vpack.c.b16 %v5702, %v5702
  %v5752 = vpack.c.b16 %v5703, %v5703
  %v5753 = vpack.c.b16 %v5704, %v5704
  %v5754 = vpack.c.b16 %v5705, %v5705
  %v5755 = vpack.c.b16 %v5706, %v5706
  %v5756 = vpack.c.b16 %v5707, %v5707
  %v5757 = vpack.c.b16 %v5708, %v5708
  %v5758 = vpack.c.b16 %v5709, %v5709
  %v5759 = vpack.c.b16 %v5710, %v5710
  %v5760 = vpack.c.b16 %v5711, %v5711
  %v5761 = vpack.c.b16 %v5712, %v5712
  %v5762 = vpack.c.b16 %v5713, %v5713
  %v5763 = vpack.c.b16 %v5714, %v5714
  %v5764 = vpack.c.b16 %v5715, %v5715
  %v5765 = vpack.c.b16 %v5716, %v5716
  %v5766 = vpack.c.b16 %v5717, %v5717
  %v5767 = vpack.c.b16 %v5718, %v5718
  %v5768 = vpack.c.b16 %v5719, %v5719
  %v5769 = vpack.c.b16 %v5720, %v5720
  %v5770 = vpack.c.b16 %v5721, %v5721
  %v5771 = vpack.c.b16 %v5722, %v5722
  %v5772 = vpack.c.b16 %v5723, %v5723
  %v5773 = vpack.c.b16 %v5724, %v5724
  %v5774 = vpack.c.b16 %v5725, %v5725
  %v5775 = vpack.c.b16 %v5726, %v5726
  %v5776 = vpack.c.b16 %v5727, %v5727
  %v5777 = vpack.c.b16 %v5728, %v5728
  %v5778 = vpack.c.b16 %v5729, %v5729
  %v5779 = vpack.c.b16 %v5730, %v5730
  %5829 = vst [vmem:[%s4] sm:$0xf] %v5731
  %5830 = vst [vmem:[%s4 + $0x4] sm:$0xf] %v5732
  %5831 = vst [vmem:[%s4 + $0x8] sm:$0xf] %v5733
  %5832 = vst [vmem:[%s4 + $0xc] sm:$0xf] %v5734
  %5833 = vst [vmem:[%s4 + $0x10] sm:$0xf] %v5735
  %5834 = vst [vmem:[%s4 + $0x14] sm:$0xf] %v5736
  %5835 = vst [vmem:[%s4 + $0x18] sm:$0xf] %v5737
  %5836 = vst [vmem:[%s4 + $0x1c] sm:$0xf] %v5738
  %5837 = vst [vmem:[%s4 + $0x20] sm:$0xf] %v5739
  %5838 = vst [vmem:[%s4 + $0x24] sm:$0xf] %v5740
  %5839 = vst [vmem:[%s4 + $0x28] sm:$0xf] %v5741
  %5840 = vst [vmem:[%s4 + $0x2c] sm:$0xf] %v5742
  %5841 = vst [vmem:[%s4 + $0x30] sm:$0xf] %v5743
  %5842 = vst [vmem:[%s4 + $0x34] sm:$0xf] %v5744
  %5843 = vst [vmem:[%s4 + $0x38] sm:$0xf] %v5745
  %5844 = vst [vmem:[%s4 + $0x3c] sm:$0xf] %v5746
  %5845 = vst [vmem:[%s4 + $0x40] sm:$0xf] %v5747
  %5846 = vst [vmem:[%s4 + $0x44] sm:$0xf] %v5748
  %5847 = vst [vmem:[%s4 + $0x48] sm:$0xf] %v5749
  %5848 = vst [vmem:[%s4 + $0x4c] sm:$0xf] %v5750
  %5849 = vst [vmem:[%s4 + $0x50] sm:$0xf] %v5751
  %5850 = vst [vmem:[%s4 + $0x54] sm:$0xf] %v5752
  %5851 = vst [vmem:[%s4 + $0x58] sm:$0xf] %v5753
  %5852 = vst [vmem:[%s4 + $0x5c] sm:$0xf] %v5754
  %5853 = vst [vmem:[%s4 + $0x60] sm:$0xf] %v5755
  %5854 = vst [vmem:[%s4 + $0x64] sm:$0xf] %v5756
  %5855 = vst [vmem:[%s4 + $0x68] sm:$0xf] %v5757
  %5856 = vst [vmem:[%s4 + $0x6c] sm:$0xf] %v5758
  %5857 = vst [vmem:[%s4 + $0x70] sm:$0xf] %v5759
  %5858 = vst [vmem:[%s4 + $0x74] sm:$0xf] %v5760
  %5859 = vst [vmem:[%s4 + $0x78] sm:$0xf] %v5761
  %5860 = vst [vmem:[%s4 + $0x7c] sm:$0xf] %v5762
  %5861 = vst [vmem:[%s4 + $0x80] sm:$0xf] %v5763
  %5862 = vst [vmem:[%s4 + $0x84] sm:$0xf] %v5764
  %5863 = vst [vmem:[%s4 + $0x88] sm:$0xf] %v5765
  %5864 = vst [vmem:[%s4 + $0x8c] sm:$0xf] %v5766
  %5865 = vst [vmem:[%s4 + $0x90] sm:$0xf] %v5767
  %5866 = vst [vmem:[%s4 + $0x94] sm:$0xf] %v5768
  %5867 = vst [vmem:[%s4 + $0x98] sm:$0xf] %v5769
  %5868 = vst [vmem:[%s4 + $0x9c] sm:$0xf] %v5770
  %5869 = vst [vmem:[%s4 + $0xa0] sm:$0xf] %v5771
  %5870 = vst [vmem:[%s4 + $0xa4] sm:$0xf] %v5772
  %5871 = vst [vmem:[%s4 + $0xa8] sm:$0xf] %v5773
  %5872 = vst [vmem:[%s4 + $0xac] sm:$0xf] %v5774
  %5873 = vst [vmem:[%s4 + $0xb0] sm:$0xf] %v5775
  %5874 = vst [vmem:[%s4 + $0xb4] sm:$0xf] %v5776
  %5875 = vst [vmem:[%s4 + $0xb8] sm:$0xf] %v5777
  %5876 = vst [vmem:[%s4 + $0xbc] sm:$0xf] %v5778
  %5877 = vst [vmem:[%s4 + $0xc0] sm:$0xf] %v5779
  // Predicated region
  $region18: #{lenet_forward.3} parent=0 // pred_check
    _
  $region19: #{lenet_forward.3} parent=0 // pred_check_branch
    %5879 = sbr.rel (0) target = $region21
  $region20: #{lenet_forward.3} parent=0 // pred_region
    _
  $region21: #{lenet_forward.3} parent=0 // pred_fallthru
    _
  // Predicated region
  $region22: #{lenet_forward.3} parent=0 // pred_check
    _
  $region23: #{lenet_forward.3} parent=0 // pred_check_branch
    %5881 = sbr.rel (0) target = $region25
  $region24: #{lenet_forward.3} parent=0 // pred_region
    _
  $region25: #{lenet_forward.3} parent=0 // pred_fallthru
    _

// kernel: lenet_forward.5
$region0: #{lenet_forward.5}
  #allocation0 [shape = 'u32[]', space=smem, size = 0x4, offset = 0x4, fixed_abs, tag = 'smem constant byte address 0x4 - core index']
  #allocation1 [shape = 'u32[144,128]{1,0:T(1,128)}', space=vmem, size = 0x12000, scoped, tag = 'internal scratch']
  %s0 = inlined_call_operand.vmem [shape: bf16[2,400], index: 0, kind: input, shape index: {}]
  %s1 = inlined_call_operand.vmem [shape: bf16[400,128], index: 1, kind: input, shape index: {}]
  %s2 = inlined_call_operand.vmem [shape: f32[1,128], index: 2, kind: input, shape index: {}]
  %s3 = inlined_call_operand.vmem [shape: bf16[128,128], index: 3, kind: input, shape index: {}]
  %s4 = inlined_call_operand.vmem [shape: f32[1,128], index: 4, kind: input, shape index: {}]
  %s5 = inlined_call_operand.vmem [shape: bf16[128,128], index: 5, kind: input, shape index: {}]
  %s6 = inlined_call_operand.vmem [shape: f32[1,128], index: 6, kind: input, shape index: {}]
  %s7 = inlined_call_operand.vmem [shape: f32[2,128], index: 7, kind: output, shape index: {}]
  %s8 = sld [smem:[#allocation0]]
  $region38: #{lenet_forward.5} parent=0
    _
  %s10 = ssub.s32 1, %s8
  %s11 = scalar_select 0, %s10, %s8
  // Predicated region
  $region2: #{lenet_forward.5} parent=0 // pred_check
    _
  $region3: #{lenet_forward.5} parent=0 // pred_check_branch
    %13 = sbr.rel (0) target = $region5
  $region4: #{lenet_forward.5} parent=0 // pred_region
    _
  $region5: #{lenet_forward.5} parent=0 // pred_fallthru
    _
  // Predicated region
  $region6: #{lenet_forward.5} parent=0 // pred_check
    _
  $region7: #{lenet_forward.5} parent=0 // pred_check_branch
    %15 = sbr.rel (0) target = $region9
  $region8: #{lenet_forward.5} parent=0 // pred_region
    _
  $region9: #{lenet_forward.5} parent=0 // pred_fallthru
    _
  // Predicated region
  $region10: #{lenet_forward.5} parent=0 // pred_check
    _
  $region11: #{lenet_forward.5} parent=0 // pred_check_branch
    %17 = sbr.rel (0) target = $region13
  $region12: #{lenet_forward.5} parent=0 // pred_region
    _
  $region13: #{lenet_forward.5} parent=0 // pred_fallthru
    _
  // Predicated region
  $region14: #{lenet_forward.5} parent=0 // pred_check
    _
  $region15: #{lenet_forward.5} parent=0 // pred_check_branch
    %19 = sbr.rel (0) target = $region17
  $region16: #{lenet_forward.5} parent=0 // pred_region
    _
  $region17: #{lenet_forward.5} parent=0 // pred_fallthru
    _
  // Predicated region
  $region18: #{lenet_forward.5} parent=0 // pred_check
    _
  $region19: #{lenet_forward.5} parent=0 // pred_check_branch
    %21 = sbr.rel (0) target = $region21
  $region20: #{lenet_forward.5} parent=0 // pred_region
    _
  $region21: #{lenet_forward.5} parent=0 // pred_fallthru
    _
  // Predicated region
  $region22: #{lenet_forward.5} parent=0 // pred_check
    _
  $region23: #{lenet_forward.5} parent=0 // pred_check_branch
    %23 = sbr.rel (0) target = $region25
  $region24: #{lenet_forward.5} parent=0 // pred_region
    _
  $region25: #{lenet_forward.5} parent=0 // pred_fallthru
    _
  // Predicated region
  $region26: #{lenet_forward.5} parent=0 // pred_check
    _
  $region27: #{lenet_forward.5} parent=0 // pred_check_branch
    %25 = sbr.rel (0) target = $region29
  $region28: #{lenet_forward.5} parent=0 // pred_region
    _
  $region29: #{lenet_forward.5} parent=0 // pred_fallthru
    _
  %v27 = vld [vmem:[%s0] sm:$0xf]
  %v28 = vld [vmem:[%s1] sm:$0xf]
  %v29 = vld [vmem:[%s1 + $0x4] sm:$0xf]
  %v30 = vld [vmem:[%s1 + $0x8] sm:$0xf]
  %v31 = vld [vmem:[%s1 + $0xc] sm:$0xf]
  %v32 = vld [vmem:[%s1 + $0x10] sm:$0xf]
  %v33 = vld [vmem:[%s1 + $0x14] sm:$0xf]
  %v34 = vld [vmem:[%s1 + $0x18] sm:$0xf]
  %v35 = vld [vmem:[%s1 + $0x1c] sm:$0xf]
  %v36 = vld [vmem:[%s1 + $0x20] sm:$0xf]
  %v37 = vld [vmem:[%s1 + $0x24] sm:$0xf]
  %v38 = vld [vmem:[%s1 + $0x28] sm:$0xf]
  %v39 = vld [vmem:[%s1 + $0x2c] sm:$0xf]
  %v40 = vld [vmem:[%s1 + $0x30] sm:$0xf]
  %v41 = vld [vmem:[%s1 + $0x34] sm:$0xf]
  %v42 = vld [vmem:[%s1 + $0x38] sm:$0xf]
  %v43 = vld [vmem:[%s1 + $0x3c] sm:$0xf]
  %v44 = vld [vmem:[%s1 + $0x40] sm:$0xf]
  %v45 = vld [vmem:[%s1 + $0x44] sm:$0xf]
  %v46 = vld [vmem:[%s1 + $0x48] sm:$0xf]
  %v47 = vld [vmem:[%s1 + $0x4c] sm:$0xf]
  %v48 = vld [vmem:[%s1 + $0x50] sm:$0xf]
  %v49 = vld [vmem:[%s1 + $0x54] sm:$0xf]
  %v50 = vld [vmem:[%s1 + $0x58] sm:$0xf]
  %v51 = vld [vmem:[%s1 + $0x5c] sm:$0xf]
  %v52 = vld [vmem:[%s1 + $0x60] sm:$0xf]
  %v53 = vld [vmem:[%s1 + $0x64] sm:$0xf]
  %v54 = vld [vmem:[%s1 + $0x68] sm:$0xf]
  %v55 = vld [vmem:[%s1 + $0x6c] sm:$0xf]
  %v56 = vld [vmem:[%s1 + $0x70] sm:$0xf]
  %v57 = vld [vmem:[%s1 + $0x74] sm:$0xf]
  %v58 = vld [vmem:[%s1 + $0x78] sm:$0xf]
  %v59 = vld [vmem:[%s1 + $0x7c] sm:$0xf]
  %v60 = vld [vmem:[%s1 + $0x80] sm:$0xf]
  %v61 = vld [vmem:[%s1 + $0x84] sm:$0xf]
  %v62 = vld [vmem:[%s1 + $0x88] sm:$0xf]
  %v63 = vld [vmem:[%s1 + $0x8c] sm:$0xf]
  %v64 = vld [vmem:[%s1 + $0x90] sm:$0xf]
  %v65 = vld [vmem:[%s1 + $0x94] sm:$0xf]
  %v66 = vld [vmem:[%s1 + $0x98] sm:$0xf]
  %v67 = vld [vmem:[%s1 + $0x9c] sm:$0xf]
  %v68 = vld [vmem:[%s1 + $0xa0] sm:$0xf]
  %v69 = vld [vmem:[%s1 + $0xa4] sm:$0xf]
  %v70 = vld [vmem:[%s1 + $0xa8] sm:$0xf]
  %v71 = vld [vmem:[%s1 + $0xac] sm:$0xf]
  %v72 = vld [vmem:[%s1 + $0xb0] sm:$0xf]
  %v73 = vld [vmem:[%s1 + $0xb4] sm:$0xf]
  %v74 = vld [vmem:[%s1 + $0xb8] sm:$0xf]
  %v75 = vld [vmem:[%s1 + $0xbc] sm:$0xf]
  %v76 = vld [vmem:[%s1 + $0xc0] sm:$0xf]
  %v77 = vld [vmem:[%s1 + $0xc4] sm:$0xf]
  %v78 = vld [vmem:[%s2] sm:$0x1]
  %v80 = vlaneseq
  %v81 = vshrl.u32 %v80, 7
  %v82 = vsub.s32 0, %v81
  %v83 = vrot.slane %v78, %v82
  %v87 = vunpack.c.l.s4 1966171168
  %v88 = vunpack.c.0.s8 %v87
  %v89 = vlaneseq
  %v90 = vshrl.u32 %v89, 7
  %v91 = vsub.s32 %v88, %v90
  %v92 = vrot.slane %v27, %v91
  %v93 = vcombine.high %v92, %v92
  %v95 = vunpack.c.l.s4 1966171168
  %v96 = vunpack.c.0.s8 %v95
  %v97 = vlaneseq
  %v98 = vshrl.u32 %v97, 7
  %v99 = vsub.s32 %v96, %v98
  %v100 = vrot.slane %v92, %v99
  %v102 = vunpack.c.l.s4 1966171168
  %v103 = vunpack.c.0.s8 %v102
  %v104 = vlaneseq
  %v105 = vshrl.u32 %v104, 7
  %v106 = vsub.s32 %v103, %v105
  %v107 = vrot.slane %v93, %v106
  %v108 = vcombine.high %v100, %v100
  %v109 = vcombine.high %v107, %v107
  %v163 = vunpack.c.l.b16 %v28
  %v164 = vunpack.c.l.b16 %v29
  %v165 = vunpack.c.l.b16 %v30
  %v166 = vunpack.c.l.b16 %v31
  %v167 = vunpack.c.l.b16 %v32
  %v168 = vunpack.c.l.b16 %v33
  %v169 = vunpack.c.l.b16 %v34
  %v170 = vunpack.c.l.b16 %v35
  %v171 = vunpack.c.l.b16 %v36
  %v172 = vunpack.c.l.b16 %v37
  %v173 = vunpack.c.l.b16 %v38
  %v174 = vunpack.c.l.b16 %v39
  %v175 = vunpack.c.l.b16 %v40
  %v176 = vunpack.c.l.b16 %v41
  %v177 = vunpack.c.l.b16 %v42
  %v178 = vunpack.c.l.b16 %v43
  %v179 = vunpack.c.l.b16 %v44
  %v180 = vunpack.c.l.b16 %v45
  %v181 = vunpack.c.l.b16 %v46
  %v182 = vunpack.c.l.b16 %v47
  %v183 = vunpack.c.l.b16 %v48
  %v184 = vunpack.c.l.b16 %v49
  %v185 = vunpack.c.l.b16 %v50
  %v186 = vunpack.c.l.b16 %v51
  %v187 = vunpack.c.l.b16 %v52
  %v188 = vunpack.c.l.b16 %v53
  %v189 = vunpack.c.l.b16 %v54
  %v190 = vunpack.c.l.b16 %v55
  %v191 = vunpack.c.l.b16 %v56
  %v192 = vunpack.c.l.b16 %v57
  %v193 = vunpack.c.l.b16 %v58
  %v194 = vunpack.c.l.b16 %v59
  %v195 = vunpack.c.l.b16 %v60
  %v196 = vunpack.c.l.b16 %v61
  %v197 = vunpack.c.l.b16 %v62
  %v198 = vunpack.c.l.b16 %v63
  %v199 = vunpack.c.l.b16 %v64
  %v200 = vunpack.c.l.b16 %v65
  %v201 = vunpack.c.l.b16 %v66
  %v202 = vunpack.c.l.b16 %v67
  %v203 = vunpack.c.l.b16 %v68
  %v204 = vunpack.c.l.b16 %v69
  %v205 = vunpack.c.l.b16 %v70
  %v206 = vunpack.c.l.b16 %v71
  %v207 = vunpack.c.l.b16 %v72
  %v208 = vunpack.c.l.b16 %v73
  %v209 = vunpack.c.l.b16 %v74
  %v210 = vunpack.c.l.b16 %v75
  %v211 = vunpack.c.l.b16 %v76
  %v212 = vunpack.c.l.b16 %v77
  %v213 = vpack.c.b16 %v164, %v163
  %v214 = vpack.c.b16 %v166, %v165
  %v215 = vpack.c.b16 %v168, %v167
  %v216 = vpack.c.b16 %v170, %v169
  %v217 = vpack.c.b16 %v172, %v171
  %v218 = vpack.c.b16 %v174, %v173
  %v219 = vpack.c.b16 %v176, %v175
  %v220 = vpack.c.b16 %v178, %v177
  %v221 = vpack.c.b16 %v180, %v179
  %v222 = vpack.c.b16 %v182, %v181
  %v223 = vpack.c.b16 %v184, %v183
  %v224 = vpack.c.b16 %v186, %v185
  %v225 = vpack.c.b16 %v188, %v187
  %v226 = vpack.c.b16 %v190, %v189
  %v227 = vpack.c.b16 %v192, %v191
  %v228 = vpack.c.b16 %v194, %v193
  %v229 = vpack.c.b16 %v196, %v195
  %v230 = vpack.c.b16 %v198, %v197
  %v231 = vpack.c.b16 %v200, %v199
  %v232 = vpack.c.b16 %v202, %v201
  %v233 = vpack.c.b16 %v204, %v203
  %v234 = vpack.c.b16 %v206, %v205
  %v235 = vpack.c.b16 %v208, %v207
  %v236 = vpack.c.b16 %v210, %v209
  %v237 = vpack.c.b16 %v212, %v211
  %vm263 = vcmask 130048
  %v265 = vsel %vm263, %v109, 0
  %267 = vmatprep.subr.bf16.mxu0 0
  %268 = vmatpush1.bf16.msra.mxu0 %v213
  %269 = vmatprep.subr.bf16.mxu0 0
  %270 = vmatpush1.bf16.msra.mxu0 %v214
  %271 = vmatprep.subr.bf16.mxu0 0
  %272 = vmatpush1.bf16.msra.mxu0 %v215
  %273 = vmatprep.subr.bf16.mxu0 0
  %274 = vmatpush1.bf16.msra.mxu0 %v216
  %275 = vmatprep.subr.bf16.mxu0 0
  %276 = vmatpush1.bf16.msra.mxu0 %v217
  %277 = vmatprep.subr.bf16.mxu0 0
  %278 = vmatpush1.bf16.msra.mxu0 %v218
  %279 = vmatprep.subr.bf16.mxu0 0
  %280 = vmatpush1.bf16.msra.mxu0 %v219
  %281 = vmatprep.subr.bf16.mxu0 0
  %282 = vmatpush1.bf16.msra.mxu0 %v220
  %283 = vmatprep.subr.bf16.mxu0 0
  %284 = vmatpush1.bf16.msra.mxu0 %v221
  %285 = vmatprep.subr.bf16.mxu0 0
  %286 = vmatpush1.bf16.msra.mxu0 %v222
  %287 = vmatprep.subr.bf16.mxu0 0
  %288 = vmatpush1.bf16.msra.mxu0 %v223
  %289 = vmatprep.subr.bf16.mxu0 0
  %290 = vmatpush1.bf16.msra.mxu0 %v224
  %291 = vmatprep.subr.bf16.mxu0 0
  %292 = vmatpush1.bf16.msra.mxu0 %v225
  %293 = vmatprep.subr.bf16.mxu0 0
  %294 = vmatpush1.bf16.msra.mxu0 %v226
  %295 = vmatprep.subr.bf16.mxu0 0
  %296 = vmatpush1.bf16.msra.mxu0 %v227
  %297 = vmatprep.subr.bf16.mxu0 0
  %298 = vmatpush1.bf16.msra.mxu0 %v228
  %299 = vmatprep.mubr.bf16.mxu0 %v107
  %300 = vmatmul.mubr.bf16.gmra.mrb[0].mxu0 %v100
  %v301 = vpop.f32.mrb[0].mxu0
  %v302 = vadd.f32 %v83, %v301
  %v303 = vpop.f32.mrb[0].mxu0
  %v304 = vpop.f32.mrb[0].mxu0
  %v305 = vpop.f32.mrb[0].mxu0
  %306 = vdwg.mxu0
  %307 = vmatprep.subr.bf16.mxu0 0
  %308 = vmatpush1.bf16.msra.mxu0 %v229
  %309 = vmatprep.subr.bf16.mxu0 0
  %310 = vmatpush1.bf16.msra.mxu0 %v230
  %311 = vmatprep.subr.bf16.mxu0 0
  %312 = vmatpush1.bf16.msra.mxu0 %v231
  %313 = vmatprep.subr.bf16.mxu0 0
  %314 = vmatpush1.bf16.msra.mxu0 %v232
  %315 = vmatprep.subr.bf16.mxu0 0
  %316 = vmatpush1.bf16.msra.mxu0 %v233
  %317 = vmatprep.subr.bf16.mxu0 0
  %318 = vmatpush1.bf16.msra.mxu0 %v234
  %319 = vmatprep.subr.bf16.mxu0 0
  %320 = vmatpush1.bf16.msra.mxu0 %v235
  %321 = vmatprep.subr.bf16.mxu0 0
  %322 = vmatpush1.bf16.msra.mxu0 %v236
  %323 = vmatprep.subr.bf16.mxu0 0
  %324 = vmatpush1.bf16.msra.mxu0 %v237
  %325 = vmatprep.subr.bf16.mxu0 0
  %326 = vmatpush1.bf16.msra.mxu0 0
  %327 = vmatprep.subr.bf16.mxu0 0
  %328 = vmatpush1.bf16.msra.mxu0 0
  %329 = vmatprep.subr.bf16.mxu0 0
  %330 = vmatpush1.bf16.msra.mxu0 0
  %331 = vmatprep.subr.bf16.mxu0 0
  %332 = vmatpush1.bf16.msra.mxu0 0
  %333 = vmatprep.subr.bf16.mxu0 0
  %334 = vmatpush1.bf16.msra.mxu0 0
  %335 = vmatprep.subr.bf16.mxu0 0
  %336 = vmatpush1.bf16.msra.mxu0 0
  %337 = vmatprep.subr.bf16.mxu0 0
  %338 = vmatpush1.bf16.msra.mxu0 0
  %339 = vmatprep.mubr.bf16.mxu0 %v265
  %340 = vmatmul.mubr.bf16.gmra.mrb[0].mxu0 %v108
  %v341 = vpop.f32.mrb[0].mxu0
  %v342 = vadd.f32 %v302, %v341
  %v343 = vpop.f32.mrb[0].mxu0
  %v344 = vpop.f32.mrb[0].mxu0
  %v345 = vpop.f32.mrb[0].mxu0
  %346 = vdwg.mxu0
  %v347 = vmax.f32 %v342, 0.0
  %v348 = vpack.c.bf16 %v347, %v347
  %v349 = vld [vmem:[%s3] sm:$0xf]
  %v350 = vld [vmem:[%s3 + $0x4] sm:$0xf]
  %v351 = vld [vmem:[%s3 + $0x8] sm:$0xf]
  %v352 = vld [vmem:[%s3 + $0xc] sm:$0xf]
  %v353 = vld [vmem:[%s3 + $0x10] sm:$0xf]
  %v354 = vld [vmem:[%s3 + $0x14] sm:$0xf]
  %v355 = vld [vmem:[%s3 + $0x18] sm:$0xf]
  %v356 = vld [vmem:[%s3 + $0x1c] sm:$0xf]
  %v357 = vld [vmem:[%s3 + $0x20] sm:$0xf]
  %v358 = vld [vmem:[%s3 + $0x24] sm:$0xf]
  %v359 = vld [vmem:[%s3 + $0x28] sm:$0xf]
  %v360 = vld [vmem:[%s3 + $0x2c] sm:$0xf]
  %v361 = vld [vmem:[%s3 + $0x30] sm:$0xf]
  %v362 = vld [vmem:[%s3 + $0x34] sm:$0xf]
  %v363 = vld [vmem:[%s3 + $0x38] sm:$0xf]
  %v364 = vld [vmem:[%s3 + $0x3c] sm:$0xf]
  %v365 = vld [vmem:[%s4] sm:$0x1]
  %v367 = vlaneseq
  %v368 = vshrl.u32 %v367, 7
  %v369 = vsub.s32 0, %v368
  %v370 = vrot.slane %v365, %v369
  %v388 = vunpack.c.l.b16 %v349
  %v389 = vunpack.c.l.b16 %v350
  %v390 = vunpack.c.l.b16 %v351
  %v391 = vunpack.c.l.b16 %v352
  %v392 = vunpack.c.l.b16 %v353
  %v393 = vunpack.c.l.b16 %v354
  %v394 = vunpack.c.l.b16 %v355
  %v395 = vunpack.c.l.b16 %v356
  %v396 = vunpack.c.l.b16 %v357
  %v397 = vunpack.c.l.b16 %v358
  %v398 = vunpack.c.l.b16 %v359
  %v399 = vunpack.c.l.b16 %v360
  %v400 = vunpack.c.l.b16 %v361
  %v401 = vunpack.c.l.b16 %v362
  %v402 = vunpack.c.l.b16 %v363
  %v403 = vunpack.c.l.b16 %v364
  %v404 = vpack.c.b16 %v389, %v388
  %v405 = vpack.c.b16 %v391, %v390
  %v406 = vpack.c.b16 %v393, %v392
  %v407 = vpack.c.b16 %v395, %v394
  %v408 = vpack.c.b16 %v397, %v396
  %v409 = vpack.c.b16 %v399, %v398
  %v410 = vpack.c.b16 %v401, %v400
  %v411 = vpack.c.b16 %v403, %v402
  %420 = vmatprep.subr.bf16.mxu0 0
  %421 = vmatpush1.bf16.msra.mxu0 %v404
  %422 = vmatprep.subr.bf16.mxu0 0
  %423 = vmatpush1.bf16.msra.mxu0 %v405
  %424 = vmatprep.subr.bf16.mxu0 0
  %425 = vmatpush1.bf16.msra.mxu0 %v406
  %426 = vmatprep.subr.bf16.mxu0 0
  %427 = vmatpush1.bf16.msra.mxu0 %v407
  %428 = vmatprep.subr.bf16.mxu0 0
  %429 = vmatpush1.bf16.msra.mxu0 %v408
  %430 = vmatprep.subr.bf16.mxu0 0
  %431 = vmatpush1.bf16.msra.mxu0 %v409
  %432 = vmatprep.subr.bf16.mxu0 0
  %433 = vmatpush1.bf16.msra.mxu0 %v410
  %434 = vmatprep.subr.bf16.mxu0 0
  %435 = vmatpush1.bf16.msra.mxu0 %v411
  %436 = vmatprep.subr.bf16.mxu0 0
  %437 = vmatpush1.bf16.msra.mxu0 0
  %438 = vmatprep.subr.bf16.mxu0 0
  %439 = vmatpush1.bf16.msra.mxu0 0
  %440 = vmatprep.subr.bf16.mxu0 0
  %441 = vmatpush1.bf16.msra.mxu0 0
  %442 = vmatprep.subr.bf16.mxu0 0
  %443 = vmatpush1.bf16.msra.mxu0 0
  %444 = vmatprep.subr.bf16.mxu0 0
  %445 = vmatpush1.bf16.msra.mxu0 0
  %446 = vmatprep.subr.bf16.mxu0 0
  %447 = vmatpush1.bf16.msra.mxu0 0
  %448 = vmatprep.subr.bf16.mxu0 0
  %449 = vmatpush1.bf16.msra.mxu0 0
  %450 = vmatprep.subr.bf16.mxu0 0
  %451 = vmatpush1.bf16.msra.mxu0 0
  %452 = vmatprep.mubr.bf16.mxu0 0
  %453 = vmatmul.mubr.bf16.gmra.mrb[0].mxu0 %v348
  %v454 = vpop.f32.mrb[0].mxu0
  %v455 = vadd.f32 %v370, %v454
  %v456 = vpop.f32.mrb[0].mxu0
  %v457 = vpop.f32.mrb[0].mxu0
  %v458 = vpop.f32.mrb[0].mxu0
  %459 = vdwg.mxu0
  %v460 = vmax.f32 %v455, 0.0
  %v461 = vpack.c.bf16 %v460, %v460
  %v462 = vld [vmem:[%s5] sm:$0xf]
  %v463 = vld [vmem:[%s5 + $0x4] sm:$0xf]
  %v464 = vld [vmem:[%s5 + $0x8] sm:$0xf]
  %v465 = vld [vmem:[%s5 + $0xc] sm:$0xf]
  %v466 = vld [vmem:[%s5 + $0x10] sm:$0xf]
  %v467 = vld [vmem:[%s5 + $0x14] sm:$0xf]
  %v468 = vld [vmem:[%s5 + $0x18] sm:$0xf]
  %v469 = vld [vmem:[%s5 + $0x1c] sm:$0xf]
  %v470 = vld [vmem:[%s5 + $0x20] sm:$0xf]
  %v471 = vld [vmem:[%s5 + $0x24] sm:$0xf]
  %v472 = vld [vmem:[%s5 + $0x28] sm:$0xf]
  %v473 = vld [vmem:[%s5 + $0x2c] sm:$0xf]
  %v474 = vld [vmem:[%s5 + $0x30] sm:$0xf]
  %v475 = vld [vmem:[%s5 + $0x34] sm:$0xf]
  %v476 = vld [vmem:[%s5 + $0x38] sm:$0xf]
  %v477 = vld [vmem:[%s5 + $0x3c] sm:$0xf]
  %v478 = vld [vmem:[%s6] sm:$0x1]
  %v480 = vlaneseq
  %v481 = vshrl.u32 %v480, 7
  %v482 = vsub.s32 0, %v481
  %v483 = vrot.slane %v478, %v482
  %v501 = vunpack.c.l.b16 %v462
  %v502 = vunpack.c.l.b16 %v463
  %v503 = vunpack.c.l.b16 %v464
  %v504 = vunpack.c.l.b16 %v465
  %v505 = vunpack.c.l.b16 %v466
  %v506 = vunpack.c.l.b16 %v467
  %v507 = vunpack.c.l.b16 %v468
  %v508 = vunpack.c.l.b16 %v469
  %v509 = vunpack.c.l.b16 %v470
  %v510 = vunpack.c.l.b16 %v471
  %v511 = vunpack.c.l.b16 %v472
  %v512 = vunpack.c.l.b16 %v473
  %v513 = vunpack.c.l.b16 %v474
  %v514 = vunpack.c.l.b16 %v475
  %v515 = vunpack.c.l.b16 %v476
  %v516 = vunpack.c.l.b16 %v477
  %v517 = vpack.c.b16 %v502, %v501
  %v518 = vpack.c.b16 %v504, %v503
  %v519 = vpack.c.b16 %v506, %v505
  %v520 = vpack.c.b16 %v508, %v507
  %v521 = vpack.c.b16 %v510, %v509
  %v522 = vpack.c.b16 %v512, %v511
  %v523 = vpack.c.b16 %v514, %v513
  %v524 = vpack.c.b16 %v516, %v515
  %533 = vmatprep.subr.bf16.mxu0 0
  %534 = vmatpush1.bf16.msra.mxu0 %v517
  %535 = vmatprep.subr.bf16.mxu0 0
  %536 = vmatpush1.bf16.msra.mxu0 %v518
  %537 = vmatprep.subr.bf16.mxu0 0
  %538 = vmatpush1.bf16.msra.mxu0 %v519
  %539 = vmatprep.subr.bf16.mxu0 0
  %540 = vmatpush1.bf16.msra.mxu0 %v520
  %541 = vmatprep.subr.bf16.mxu0 0
  %542 = vmatpush1.bf16.msra.mxu0 %v521
  %543 = vmatprep.subr.bf16.mxu0 0
  %544 = vmatpush1.bf16.msra.mxu0 %v522
  %545 = vmatprep.subr.bf16.mxu0 0
  %546 = vmatpush1.bf16.msra.mxu0 %v523
  %547 = vmatprep.subr.bf16.mxu0 0
  %548 = vmatpush1.bf16.msra.mxu0 %v524
  %549 = vmatprep.subr.bf16.mxu0 0
  %550 = vmatpush1.bf16.msra.mxu0 0
  %551 = vmatprep.subr.bf16.mxu0 0
  %552 = vmatpush1.bf16.msra.mxu0 0
  %553 = vmatprep.subr.bf16.mxu0 0
  %554 = vmatpush1.bf16.msra.mxu0 0
  %555 = vmatprep.subr.bf16.mxu0 0
  %556 = vmatpush1.bf16.msra.mxu0 0
  %557 = vmatprep.subr.bf16.mxu0 0
  %558 = vmatpush1.bf16.msra.mxu0 0
  %559 = vmatprep.subr.bf16.mxu0 0
  %560 = vmatpush1.bf16.msra.mxu0 0
  %561 = vmatprep.subr.bf16.mxu0 0
  %562 = vmatpush1.bf16.msra.mxu0 0
  %563 = vmatprep.subr.bf16.mxu0 0
  %564 = vmatpush1.bf16.msra.mxu0 0
  %565 = vmatprep.mubr.bf16.mxu0 0
  %566 = vmatmul.mubr.bf16.gmra.mrb[0].mxu0 %v461
  %v567 = vpop.f32.mrb[0].mxu0
  %v568 = vadd.f32 %v483, %v567
  %v569 = vpop.f32.mrb[0].mxu0
  %v570 = vpop.f32.mrb[0].mxu0
  %v571 = vpop.f32.mrb[0].mxu0
  %572 = vdwg.mxu0
  %573 = vst [vmem:[%s7] sm:$0x3] %v568
  // Predicated region
  $region30: #{lenet_forward.5} parent=0 // pred_check
    _
  $region31: #{lenet_forward.5} parent=0 // pred_check_branch
    %575 = sbr.rel (0) target = $region33
  $region32: #{lenet_forward.5} parent=0 // pred_region
    _
  $region33: #{lenet_forward.5} parent=0 // pred_fallthru
    _
  // Predicated region
  $region34: #{lenet_forward.5} parent=0 // pred_check
    _
  $region35: #{lenet_forward.5} parent=0 // pred_check_branch
    %577 = sbr.rel (0) target = $region37
  $region36: #{lenet_forward.5} parent=0 // pred_region
    _
  $region37: #{lenet_forward.5} parent=0 // pred_fallthru
    _

</llo_original>
